<compile_context>
chip_gen: v7x
topology: tpu7x:2x2x1
jax: 0.10.0
libtpu: 0.0.40
codegen_flags: <defaults>
</compile_context>

<pallas_src>
import functools

import jax
import jax.numpy as jnp
from jax.experimental import pallas as pl
from jax.experimental.pallas import tpu as pltpu


def _make_tap_masks(H, W, dtype=jnp.float32):
    """(9, H*W) masks: tap (ky,kx) valid where the shifted source pixel is in-bounds."""
    y = jnp.arange(H)[:, None]
    x = jnp.arange(W)[None, :]
    rows = []
    for ky in range(3):
        for kx in range(3):
            dy, dx = ky - 1, kx - 1
            m = ((y + dy >= 0) & (y + dy < H) & (x + dx >= 0) & (x + dx < W))
            rows.append(m.astype(dtype).reshape(H * W))
    return jnp.stack(rows, axis=0)


def _dense_block_kernel(masks_ref, x_ref, *rest, layer_meta, G, Cin, H, W):
    """Fused DenseBlock for one batch element.

    masks_ref: (9, S)     per-tap boundary masks, S = H*W
    x_ref:     (Cin, S)   input, channels-first, flattened spatial on lanes
    rest:      (w_0, b_0, ..., w_{L-1}, b_{L-1}, o_ref)
      w_l:   (9, G, Cin_l)  taps ordered ky*3+kx
      b_l:   (G, 1)
      o_ref: (C_total, S) with C_total = Cin + L*G; channel layout
             [x | y_0 | ... | y_{L-1}]  (== torch.cat order of the module)
    """
    o_ref = rest[-1]
    wb_refs = rest[:-1]
    S = H * W

    # Final cat([x, block(x)]): first Cin output channels are the input itself.
    o_ref[pl.ds(0, Cin), :] = x_ref[...]

    for l, (in_start, in_len, out_start) in enumerate(layer_meta):
        w_ref = wb_refs[2 * l]
        b_ref = wb_refs[2 * l + 1]
        if l == 0:
            a = x_ref[...].astype(jnp.float32)
        else:
            a = o_ref[pl.ds(in_start, in_len), :].astype(jnp.float32)

        acc = jnp.zeros((G, S), jnp.float32)
        for t in range(9):
            dy, dx = t // 3 - 1, t % 3 - 1
            d = dy * W + dx                 # lane offset of this tap
            shift = (-d) % S                # so that a_t[:, p] == a[:, p + d]
            a_t = a if shift == 0 else pltpu.roll(a, shift=shift, axis=1)
            a_t = a_t * masks_ref[pl.ds(t, 1), :]   # zero out-of-bounds taps
            acc = acc + jnp.dot(w_ref[t], a_t,
                                preferred_element_type=jnp.float32)

        acc = acc + b_ref[...]              # (G,1) broadcast across lanes
        acc = jnp.maximum(acc, 0.2 * acc)   # LeakyReLU(0.2)
        o_ref[pl.ds(out_start, G), :] = acc.astype(o_ref.dtype)


def dense_block_forward(x_nchw, params):
    """DenseBlock forward. x: (N, Cin, H, W) -> (N, Cin + G*num_layers, H, W)."""
    N, Cin, H, W = x_nchw.shape
    G = params[0][0].shape[0]
    L = len(params)
    C_total = Cin + L * G
    S = H * W

    x_flat = x_nchw.reshape(N, Cin, S)
    masks = _make_tap_masks(H, W, x_nchw.dtype)

    layer_meta = []
    flat_args = []
    in_specs = [
        pl.BlockSpec((9, S), lambda n: (0, 0)),             # tap masks (shared)
        pl.BlockSpec((None, Cin, S), lambda n: (n, 0, 0)),  # input block (batch squeezed)
    ]
    for l, (w, b) in enumerate(params):
        cout, cin_l = w.shape[0], w.shape[1]
        assert cout == G
        in_start, in_len = (0, Cin) if l == 0 else (Cin, l * G)
        assert cin_l == in_len, (cin_l, in_len)
        layer_meta.append((in_start, in_len, Cin + l * G))
        # (Cout, Cin, 3, 3) -> (9, Cout, Cin), taps ordered ky*3+kx.
        wk = jnp.transpose(w, (2, 3, 0, 1)).reshape(9, cout, cin_l)
        flat_args += [wk, b.reshape(G, 1)]
        in_specs += [
            pl.BlockSpec((9, G, cin_l), lambda n: (0, 0, 0)),
            pl.BlockSpec((G, 1), lambda n: (0, 0)),
        ]

    kernel = functools.partial(
        _dense_block_kernel, layer_meta=tuple(layer_meta),
        G=G, Cin=Cin, H=H, W=W)

    out_flat = pl.pallas_call(
        kernel,
        out_shape=jax.ShapeDtypeStruct((N, C_total, S), x_nchw.dtype),
        grid=(N,),
        in_specs=in_specs,
        out_specs=pl.BlockSpec((None, C_total, S), lambda n: (n, 0, 0)),
        compiler_params=pltpu.CompilerParams(
            dimension_semantics=("parallel",)),
    )(masks, x_flat, *flat_args)

    return out_flat.reshape(N, C_total, H, W)


def init_dense_block_params(key, in_channels, growth_rate, num_layers):
    """Deterministic parameter init (shapes match nn.Conv2d in the module)."""
    params = []
    cins = [in_channels] + [growth_rate * (i + 1) for i in range(num_layers - 1)]
    for cin in cins:
        key, kw_key, kb_key = jax.random.split(key, 3)
        fan_in = cin * 9
        bound = 1.0 / jnp.sqrt(fan_in)
        w = jax.random.uniform(kw_key, (growth_rate, cin, 3, 3),
                               jnp.float32, -bound, bound)
        b = jax.random.uniform(kb_key, (growth_rate,), jnp.float32, -bound, bound)
        params.append((w, b))
    return params


def _reference_forward(x_nchw, params):
    """Plain-JAX reference (lax.conv) for numerical validation."""
    def conv_lrelu(x, w, b):
        y = jax.lax.conv_general_dilated(
            x, w, window_strides=(1, 1), padding="SAME",
            dimension_numbers=("NCHW", "OIHW", "NCHW"))
        y = y + b[None, :, None, None]
        return jnp.maximum(y, 0.2 * y)

    w0, b0 = params[0]
    cur = conv_lrelu(x_nchw, w0, b0)
    for (w, b) in params[1:]:
        cur = jnp.concatenate([cur, conv_lrelu(cur, w, b)], axis=1)
    return jnp.concatenate([x_nchw, cur], axis=1)


if __name__ == "__main__":
    key = jax.random.PRNGKey(0)
    in_channels, growth_rate, num_layers = 4, 4, 3
    N, H, W = 2, 16, 16

    kx, kp = jax.random.split(key)
    x = jax.random.normal(kx, (N, in_channels, H, W), jnp.float32)
    params = init_dense_block_params(kp, in_channels, growth_rate, num_layers)

    out = dense_block_forward(x, params)
    out = jax.block_until_ready(out)

    expected_c = in_channels + growth_rate * num_layers
    assert out.shape == (N, expected_c, H, W), out.shape

    ref = _reference_forward(x, params)
    assert jnp.allclose(out, ref, atol=1e-4, rtol=1e-4), \
        float(jnp.max(jnp.abs(out - ref)))

    print("KERNEL_OK")
</pallas_src>

<mosaic_0001>
module attributes {stable_mosaic.version = 11 : i64} {
  func.func @_dense_block_kernel(%arg0: i32, %arg1: memref<9x256xf32, #tpu.memory_space<vmem>>, %arg2: memref<1x4x256xf32, #tpu.memory_space<vmem>>, %arg3: memref<9x4x4xf32, #tpu.memory_space<vmem>>, %arg4: memref<4x1xf32, #tpu.memory_space<vmem>>, %arg5: memref<9x4x4xf32, #tpu.memory_space<vmem>>, %arg6: memref<4x1xf32, #tpu.memory_space<vmem>>, %arg7: memref<9x4x8xf32, #tpu.memory_space<vmem>>, %arg8: memref<4x1xf32, #tpu.memory_space<vmem>>, %arg9: memref<1x16x256xf32, #tpu.memory_space<vmem>>) attributes {dimension_semantics = [#tpu.dimension_semantics<parallel>], iteration_bounds = array<i64: 2>, scalar_prefetch = 0 : i64, scratch_operands = 0 : i64, tpu.core_type = #tpu.core_type<tc>, window_params = [{pipeline_mode = #tpu.pipeline_mode<synchronous>, transform_indices = @transform_0, window_bounds = array<i64: 9, 256>}, {transform_indices = @transform_1, window_bounds = array<i64: 1, 4, 256>}, {pipeline_mode = #tpu.pipeline_mode<synchronous>, transform_indices = @transform_2, window_bounds = array<i64: 9, 4, 4>}, {pipeline_mode = #tpu.pipeline_mode<synchronous>, transform_indices = @transform_3, window_bounds = array<i64: 4, 1>}, {pipeline_mode = #tpu.pipeline_mode<synchronous>, transform_indices = @transform_4, window_bounds = array<i64: 9, 4, 4>}, {pipeline_mode = #tpu.pipeline_mode<synchronous>, transform_indices = @transform_5, window_bounds = array<i64: 4, 1>}, {pipeline_mode = #tpu.pipeline_mode<synchronous>, transform_indices = @transform_6, window_bounds = array<i64: 9, 4, 8>}, {pipeline_mode = #tpu.pipeline_mode<synchronous>, transform_indices = @transform_7, window_bounds = array<i64: 4, 1>}, {transform_indices = @transform_8, window_bounds = array<i64: 1, 16, 256>}]} {
    %c0 = arith.constant 0 : index
    %c0_0 = arith.constant 0 : index
    %c0_1 = arith.constant 0 : index
    %0 = vector.load %arg2[%c0, %c0_0, %c0_1] : memref<1x4x256xf32, #tpu.memory_space<vmem>>, vector<1x4x256xf32>
    %1 = vector.shape_cast %0 : vector<1x4x256xf32> to vector<4x256xf32>
    %c0_2 = arith.constant 0 : index
    %c0_3 = arith.constant 0 : index
    %c0_4 = arith.constant 0 : index
    %2 = vector.load %arg9[%c0_2, %c0_3, %c0_4] : memref<1x16x256xf32, #tpu.memory_space<vmem>>, vector<1x4x256xf32>
    %3 = vector.shape_cast %2 : vector<1x4x256xf32> to vector<4x256xf32>
    %4 = vector.shape_cast %1 : vector<4x256xf32> to vector<1x4x256xf32>
    tpu.vector_store %arg9[%c0_2, %c0_3, %c0_4], %4 {strides = array<i32>} : memref<1x16x256xf32, #tpu.memory_space<vmem>>, vector<1x4x256xf32>,
    %c0_5 = arith.constant 0 : index
    %c0_6 = arith.constant 0 : index
    %c0_7 = arith.constant 0 : index
    %5 = vector.load %arg2[%c0_5, %c0_6, %c0_7] : memref<1x4x256xf32, #tpu.memory_space<vmem>>, vector<1x4x256xf32>
    %6 = vector.shape_cast %5 : vector<1x4x256xf32> to vector<4x256xf32>
    %cst = arith.constant 0.000000e+00 : f32
    %7 = vector.broadcast %cst : f32 to vector<4x256xf32>
    %c17_i32 = arith.constant 17 : i32
    %8 = tpu.dynamic_rotate %6 by %c17_i32 dim 1 : vector<4x256xf32>, i32 -> vector<4x256xf32>
    %c0_8 = arith.constant 0 : index
    %c0_9 = arith.constant 0 : index
    %9 = vector.load %arg1[%c0_8, %c0_9] : memref<9x256xf32, #tpu.memory_space<vmem>>, vector<1x256xf32>
    %10 = vector.broadcast %9 : vector<1x256xf32> to vector<4x256xf32>
    %11 = arith.mulf %8, %10 : vector<4x256xf32>
    %c0_10 = arith.constant 0 : index
    %c0_11 = arith.constant 0 : index
    %c0_12 = arith.constant 0 : index
    %12 = vector.load %arg3[%c0_10, %c0_11, %c0_12] : memref<9x4x4xf32, #tpu.memory_space<vmem>>, vector<1x4x4xf32>
    %13 = vector.shape_cast %12 : vector<1x4x4xf32> to vector<4x4xf32>
    %cst_13 = arith.constant dense<0.000000e+00> : vector<4x256xf32>
    %14 = tpu.matmul %13, %11, %cst_13 {dimension_numbers = #tpu.dot_dimension_numbers<[1], [0], [0], [1], [0, 0, 1, 1], [], []>} : vector<4x4xf32>, vector<4x256xf32>, vector<4x256xf32> -> vector<4x256xf32>
    %15 = arith.addf %7, %14 : vector<4x256xf32>
    %c16_i32 = arith.constant 16 : i32
    %16 = tpu.dynamic_rotate %6 by %c16_i32 dim 1 : vector<4x256xf32>, i32 -> vector<4x256xf32>
    %c1 = arith.constant 1 : index
    %c0_14 = arith.constant 0 : index
    %17 = vector.load %arg1[%c1, %c0_14] : memref<9x256xf32, #tpu.memory_space<vmem>>, vector<1x256xf32>
    %18 = vector.broadcast %17 : vector<1x256xf32> to vector<4x256xf32>
    %19 = arith.mulf %16, %18 : vector<4x256xf32>
    %c1_15 = arith.constant 1 : index
    %c0_16 = arith.constant 0 : index
    %c0_17 = arith.constant 0 : index
    %20 = vector.load %arg3[%c1_15, %c0_16, %c0_17] : memref<9x4x4xf32, #tpu.memory_space<vmem>>, vector<1x4x4xf32>
    %21 = vector.shape_cast %20 : vector<1x4x4xf32> to vector<4x4xf32>
    %cst_18 = arith.constant dense<0.000000e+00> : vector<4x256xf32>
    %22 = tpu.matmul %21, %19, %cst_18 {dimension_numbers = #tpu.dot_dimension_numbers<[1], [0], [0], [1], [0, 0, 1, 1], [], []>} : vector<4x4xf32>, vector<4x256xf32>, vector<4x256xf32> -> vector<4x256xf32>
    %23 = arith.addf %15, %22 : vector<4x256xf32>
    %c15_i32 = arith.constant 15 : i32
    %24 = tpu.dynamic_rotate %6 by %c15_i32 dim 1 : vector<4x256xf32>, i32 -> vector<4x256xf32>
    %c2 = arith.constant 2 : index
    %c0_19 = arith.constant 0 : index
    %25 = vector.load %arg1[%c2, %c0_19] : memref<9x256xf32, #tpu.memory_space<vmem>>, vector<1x256xf32>
    %26 = vector.broadcast %25 : vector<1x256xf32> to vector<4x256xf32>
    %27 = arith.mulf %24, %26 : vector<4x256xf32>
    %c2_20 = arith.constant 2 : index
    %c0_21 = arith.constant 0 : index
    %c0_22 = arith.constant 0 : index
    %28 = vector.load %arg3[%c2_20, %c0_21, %c0_22] : memref<9x4x4xf32, #tpu.memory_space<vmem>>, vector<1x4x4xf32>
    %29 = vector.shape_cast %28 : vector<1x4x4xf32> to vector<4x4xf32>
    %cst_23 = arith.constant dense<0.000000e+00> : vector<4x256xf32>
    %30 = tpu.matmul %29, %27, %cst_23 {dimension_numbers = #tpu.dot_dimension_numbers<[1], [0], [0], [1], [0, 0, 1, 1], [], []>} : vector<4x4xf32>, vector<4x256xf32>, vector<4x256xf32> -> vector<4x256xf32>
    %31 = arith.addf %23, %30 : vector<4x256xf32>
    %c1_i32 = arith.constant 1 : i32
    %32 = tpu.dynamic_rotate %6 by %c1_i32 dim 1 : vector<4x256xf32>, i32 -> vector<4x256xf32>
    %c3 = arith.constant 3 : index
    %c0_24 = arith.constant 0 : index
    %33 = vector.load %arg1[%c3, %c0_24] : memref<9x256xf32, #tpu.memory_space<vmem>>, vector<1x256xf32>
    %34 = vector.broadcast %33 : vector<1x256xf32> to vector<4x256xf32>
    %35 = arith.mulf %32, %34 : vector<4x256xf32>
    %c3_25 = arith.constant 3 : index
    %c0_26 = arith.constant 0 : index
    %c0_27 = arith.constant 0 : index
    %36 = vector.load %arg3[%c3_25, %c0_26, %c0_27] : memref<9x4x4xf32, #tpu.memory_space<vmem>>, vector<1x4x4xf32>
    %37 = vector.shape_cast %36 : vector<1x4x4xf32> to vector<4x4xf32>
    %cst_28 = arith.constant dense<0.000000e+00> : vector<4x256xf32>
    %38 = tpu.matmul %37, %35, %cst_28 {dimension_numbers = #tpu.dot_dimension_numbers<[1], [0], [0], [1], [0, 0, 1, 1], [], []>} : vector<4x4xf32>, vector<4x256xf32>, vector<4x256xf32> -> vector<4x256xf32>
    %39 = arith.addf %31, %38 : vector<4x256xf32>
    %c4 = arith.constant 4 : index
    %c0_29 = arith.constant 0 : index
    %40 = vector.load %arg1[%c4, %c0_29] : memref<9x256xf32, #tpu.memory_space<vmem>>, vector<1x256xf32>
    %41 = vector.broadcast %40 : vector<1x256xf32> to vector<4x256xf32>
    %42 = arith.mulf %6, %41 : vector<4x256xf32>
    %c4_30 = arith.constant 4 : index
    %c0_31 = arith.constant 0 : index
    %c0_32 = arith.constant 0 : index
    %43 = vector.load %arg3[%c4_30, %c0_31, %c0_32] : memref<9x4x4xf32, #tpu.memory_space<vmem>>, vector<1x4x4xf32>
    %44 = vector.shape_cast %43 : vector<1x4x4xf32> to vector<4x4xf32>
    %cst_33 = arith.constant dense<0.000000e+00> : vector<4x256xf32>
    %45 = tpu.matmul %44, %42, %cst_33 {dimension_numbers = #tpu.dot_dimension_numbers<[1], [0], [0], [1], [0, 0, 1, 1], [], []>} : vector<4x4xf32>, vector<4x256xf32>, vector<4x256xf32> -> vector<4x256xf32>
    %46 = arith.addf %39, %45 : vector<4x256xf32>
    %c255_i32 = arith.constant 255 : i32
    %47 = tpu.dynamic_rotate %6 by %c255_i32 dim 1 : vector<4x256xf32>, i32 -> vector<4x256xf32>
    %c5 = arith.constant 5 : index
    %c0_34 = arith.constant 0 : index
    %48 = vector.load %arg1[%c5, %c0_34] : memref<9x256xf32, #tpu.memory_space<vmem>>, vector<1x256xf32>
    %49 = vector.broadcast %48 : vector<1x256xf32> to vector<4x256xf32>
    %50 = arith.mulf %47, %49 : vector<4x256xf32>
    %c5_35 = arith.constant 5 : index
    %c0_36 = arith.constant 0 : index
    %c0_37 = arith.constant 0 : index
    %51 = vector.load %arg3[%c5_35, %c0_36, %c0_37] : memref<9x4x4xf32, #tpu.memory_space<vmem>>, vector<1x4x4xf32>
    %52 = vector.shape_cast %51 : vector<1x4x4xf32> to vector<4x4xf32>
    %cst_38 = arith.constant dense<0.000000e+00> : vector<4x256xf32>
    %53 = tpu.matmul %52, %50, %cst_38 {dimension_numbers = #tpu.dot_dimension_numbers<[1], [0], [0], [1], [0, 0, 1, 1], [], []>} : vector<4x4xf32>, vector<4x256xf32>, vector<4x256xf32> -> vector<4x256xf32>
    %54 = arith.addf %46, %53 : vector<4x256xf32>
    %c241_i32 = arith.constant 241 : i32
    %55 = tpu.dynamic_rotate %6 by %c241_i32 dim 1 : vector<4x256xf32>, i32 -> vector<4x256xf32>
    %c6 = arith.constant 6 : index
    %c0_39 = arith.constant 0 : index
    %56 = vector.load %arg1[%c6, %c0_39] : memref<9x256xf32, #tpu.memory_space<vmem>>, vector<1x256xf32>
    %57 = vector.broadcast %56 : vector<1x256xf32> to vector<4x256xf32>
    %58 = arith.mulf %55, %57 : vector<4x256xf32>
    %c6_40 = arith.constant 6 : index
    %c0_41 = arith.constant 0 : index
    %c0_42 = arith.constant 0 : index
    %59 = vector.load %arg3[%c6_40, %c0_41, %c0_42] : memref<9x4x4xf32, #tpu.memory_space<vmem>>, vector<1x4x4xf32>
    %60 = vector.shape_cast %59 : vector<1x4x4xf32> to vector<4x4xf32>
    %cst_43 = arith.constant dense<0.000000e+00> : vector<4x256xf32>
    %61 = tpu.matmul %60, %58, %cst_43 {dimension_numbers = #tpu.dot_dimension_numbers<[1], [0], [0], [1], [0, 0, 1, 1], [], []>} : vector<4x4xf32>, vector<4x256xf32>, vector<4x256xf32> -> vector<4x256xf32>
    %62 = arith.addf %54, %61 : vector<4x256xf32>
    %c240_i32 = arith.constant 240 : i32
    %63 = tpu.dynamic_rotate %6 by %c240_i32 dim 1 : vector<4x256xf32>, i32 -> vector<4x256xf32>
    %c7 = arith.constant 7 : index
    %c0_44 = arith.constant 0 : index
    %64 = vector.load %arg1[%c7, %c0_44] : memref<9x256xf32, #tpu.memory_space<vmem>>, vector<1x256xf32>
    %65 = vector.broadcast %64 : vector<1x256xf32> to vector<4x256xf32>
    %66 = arith.mulf %63, %65 : vector<4x256xf32>
    %c7_45 = arith.constant 7 : index
    %c0_46 = arith.constant 0 : index
    %c0_47 = arith.constant 0 : index
    %67 = vector.load %arg3[%c7_45, %c0_46, %c0_47] : memref<9x4x4xf32, #tpu.memory_space<vmem>>, vector<1x4x4xf32>
    %68 = vector.shape_cast %67 : vector<1x4x4xf32> to vector<4x4xf32>
    %cst_48 = arith.constant dense<0.000000e+00> : vector<4x256xf32>
    %69 = tpu.matmul %68, %66, %cst_48 {dimension_numbers = #tpu.dot_dimension_numbers<[1], [0], [0], [1], [0, 0, 1, 1], [], []>} : vector<4x4xf32>, vector<4x256xf32>, vector<4x256xf32> -> vector<4x256xf32>
    %70 = arith.addf %62, %69 : vector<4x256xf32>
    %c239_i32 = arith.constant 239 : i32
    %71 = tpu.dynamic_rotate %6 by %c239_i32 dim 1 : vector<4x256xf32>, i32 -> vector<4x256xf32>
    %c8 = arith.constant 8 : index
    %c0_49 = arith.constant 0 : index
    %72 = vector.load %arg1[%c8, %c0_49] : memref<9x256xf32, #tpu.memory_space<vmem>>, vector<1x256xf32>
    %73 = vector.broadcast %72 : vector<1x256xf32> to vector<4x256xf32>
    %74 = arith.mulf %71, %73 : vector<4x256xf32>
    %c8_50 = arith.constant 8 : index
    %c0_51 = arith.constant 0 : index
    %c0_52 = arith.constant 0 : index
    %75 = vector.load %arg3[%c8_50, %c0_51, %c0_52] : memref<9x4x4xf32, #tpu.memory_space<vmem>>, vector<1x4x4xf32>
    %76 = vector.shape_cast %75 : vector<1x4x4xf32> to vector<4x4xf32>
    %cst_53 = arith.constant dense<0.000000e+00> : vector<4x256xf32>
    %77 = tpu.matmul %76, %74, %cst_53 {dimension_numbers = #tpu.dot_dimension_numbers<[1], [0], [0], [1], [0, 0, 1, 1], [], []>} : vector<4x4xf32>, vector<4x256xf32>, vector<4x256xf32> -> vector<4x256xf32>
    %78 = arith.addf %70, %77 : vector<4x256xf32>
    %c0_54 = arith.constant 0 : index
    %c0_55 = arith.constant 0 : index
    %79 = vector.load %arg4[%c0_54, %c0_55] : memref<4x1xf32, #tpu.memory_space<vmem>>, vector<4x1xf32>
    %80 = vector.broadcast %79 : vector<4x1xf32> to vector<4x256xf32>
    %81 = arith.addf %78, %80 : vector<4x256xf32>
    %cst_56 = arith.constant 2.000000e-01 : f32
    %82 = vector.broadcast %cst_56 : f32 to vector<4x256xf32>
    %83 = arith.mulf %82, %81 : vector<4x256xf32>
    %84 = arith.maximumf %81, %83 : vector<4x256xf32>
    %c0_57 = arith.constant 0 : index
    %c4_58 = arith.constant 4 : index
    %c0_59 = arith.constant 0 : index
    %85 = vector.load %arg9[%c0_57, %c4_58, %c0_59] : memref<1x16x256xf32, #tpu.memory_space<vmem>>, vector<1x4x256xf32>
    %86 = vector.shape_cast %85 : vector<1x4x256xf32> to vector<4x256xf32>
    %87 = vector.shape_cast %84 : vector<4x256xf32> to vector<1x4x256xf32>
    tpu.vector_store %arg9[%c0_57, %c4_58, %c0_59], %87 {strides = array<i32>} : memref<1x16x256xf32, #tpu.memory_space<vmem>>, vector<1x4x256xf32>,
    %c0_60 = arith.constant 0 : index
    %c4_61 = arith.constant 4 : index
    %c0_62 = arith.constant 0 : index
    %88 = vector.load %arg9[%c0_60, %c4_61, %c0_62] : memref<1x16x256xf32, #tpu.memory_space<vmem>>, vector<1x4x256xf32>
    %89 = vector.shape_cast %88 : vector<1x4x256xf32> to vector<4x256xf32>
    %cst_63 = arith.constant 0.000000e+00 : f32
    %90 = vector.broadcast %cst_63 : f32 to vector<4x256xf32>
    %c17_i32_64 = arith.constant 17 : i32
    %91 = tpu.dynamic_rotate %89 by %c17_i32_64 dim 1 : vector<4x256xf32>, i32 -> vector<4x256xf32>
    %c0_65 = arith.constant 0 : index
    %c0_66 = arith.constant 0 : index
    %92 = vector.load %arg1[%c0_65, %c0_66] : memref<9x256xf32, #tpu.memory_space<vmem>>, vector<1x256xf32>
    %93 = vector.broadcast %92 : vector<1x256xf32> to vector<4x256xf32>
    %94 = arith.mulf %91, %93 : vector<4x256xf32>
    %c0_67 = arith.constant 0 : index
    %c0_68 = arith.constant 0 : index
    %c0_69 = arith.constant 0 : index
    %95 = vector.load %arg5[%c0_67, %c0_68, %c0_69] : memref<9x4x4xf32, #tpu.memory_space<vmem>>, vector<1x4x4xf32>
    %96 = vector.shape_cast %95 : vector<1x4x4xf32> to vector<4x4xf32>
    %cst_70 = arith.constant dense<0.000000e+00> : vector<4x256xf32>
    %97 = tpu.matmul %96, %94, %cst_70 {dimension_numbers = #tpu.dot_dimension_numbers<[1], [0], [0], [1], [0, 0, 1, 1], [], []>} : vector<4x4xf32>, vector<4x256xf32>, vector<4x256xf32> -> vector<4x256xf32>
    %98 = arith.addf %90, %97 : vector<4x256xf32>
    %c16_i32_71 = arith.constant 16 : i32
    %99 = tpu.dynamic_rotate %89 by %c16_i32_71 dim 1 : vector<4x256xf32>, i32 -> vector<4x256xf32>
    %c1_72 = arith.constant 1 : index
    %c0_73 = arith.constant 0 : index
    %100 = vector.load %arg1[%c1_72, %c0_73] : memref<9x256xf32, #tpu.memory_space<vmem>>, vector<1x256xf32>
    %101 = vector.broadcast %100 : vector<1x256xf32> to vector<4x256xf32>
    %102 = arith.mulf %99, %101 : vector<4x256xf32>
    %c1_74 = arith.constant 1 : index
    %c0_75 = arith.constant 0 : index
    %c0_76 = arith.constant 0 : index
    %103 = vector.load %arg5[%c1_74, %c0_75, %c0_76] : memref<9x4x4xf32, #tpu.memory_space<vmem>>, vector<1x4x4xf32>
    %104 = vector.shape_cast %103 : vector<1x4x4xf32> to vector<4x4xf32>
    %cst_77 = arith.constant dense<0.000000e+00> : vector<4x256xf32>
    %105 = tpu.matmul %104, %102, %cst_77 {dimension_numbers = #tpu.dot_dimension_numbers<[1], [0], [0], [1], [0, 0, 1, 1], [], []>} : vector<4x4xf32>, vector<4x256xf32>, vector<4x256xf32> -> vector<4x256xf32>
    %106 = arith.addf %98, %105 : vector<4x256xf32>
    %c15_i32_78 = arith.constant 15 : i32
    %107 = tpu.dynamic_rotate %89 by %c15_i32_78 dim 1 : vector<4x256xf32>, i32 -> vector<4x256xf32>
    %c2_79 = arith.constant 2 : index
    %c0_80 = arith.constant 0 : index
    %108 = vector.load %arg1[%c2_79, %c0_80] : memref<9x256xf32, #tpu.memory_space<vmem>>, vector<1x256xf32>
    %109 = vector.broadcast %108 : vector<1x256xf32> to vector<4x256xf32>
    %110 = arith.mulf %107, %109 : vector<4x256xf32>
    %c2_81 = arith.constant 2 : index
    %c0_82 = arith.constant 0 : index
    %c0_83 = arith.constant 0 : index
    %111 = vector.load %arg5[%c2_81, %c0_82, %c0_83] : memref<9x4x4xf32, #tpu.memory_space<vmem>>, vector<1x4x4xf32>
    %112 = vector.shape_cast %111 : vector<1x4x4xf32> to vector<4x4xf32>
    %cst_84 = arith.constant dense<0.000000e+00> : vector<4x256xf32>
    %113 = tpu.matmul %112, %110, %cst_84 {dimension_numbers = #tpu.dot_dimension_numbers<[1], [0], [0], [1], [0, 0, 1, 1], [], []>} : vector<4x4xf32>, vector<4x256xf32>, vector<4x256xf32> -> vector<4x256xf32>
    %114 = arith.addf %106, %113 : vector<4x256xf32>
    %c1_i32_85 = arith.constant 1 : i32
    %115 = tpu.dynamic_rotate %89 by %c1_i32_85 dim 1 : vector<4x256xf32>, i32 -> vector<4x256xf32>
    %c3_86 = arith.constant 3 : index
    %c0_87 = arith.constant 0 : index
    %116 = vector.load %arg1[%c3_86, %c0_87] : memref<9x256xf32, #tpu.memory_space<vmem>>, vector<1x256xf32>
    %117 = vector.broadcast %116 : vector<1x256xf32> to vector<4x256xf32>
    %118 = arith.mulf %115, %117 : vector<4x256xf32>
    %c3_88 = arith.constant 3 : index
    %c0_89 = arith.constant 0 : index
    %c0_90 = arith.constant 0 : index
    %119 = vector.load %arg5[%c3_88, %c0_89, %c0_90] : memref<9x4x4xf32, #tpu.memory_space<vmem>>, vector<1x4x4xf32>
    %120 = vector.shape_cast %119 : vector<1x4x4xf32> to vector<4x4xf32>
    %cst_91 = arith.constant dense<0.000000e+00> : vector<4x256xf32>
    %121 = tpu.matmul %120, %118, %cst_91 {dimension_numbers = #tpu.dot_dimension_numbers<[1], [0], [0], [1], [0, 0, 1, 1], [], []>} : vector<4x4xf32>, vector<4x256xf32>, vector<4x256xf32> -> vector<4x256xf32>
    %122 = arith.addf %114, %121 : vector<4x256xf32>
    %c4_92 = arith.constant 4 : index
    %c0_93 = arith.constant 0 : index
    %123 = vector.load %arg1[%c4_92, %c0_93] : memref<9x256xf32, #tpu.memory_space<vmem>>, vector<1x256xf32>
    %124 = vector.broadcast %123 : vector<1x256xf32> to vector<4x256xf32>
    %125 = arith.mulf %89, %124 : vector<4x256xf32>
    %c4_94 = arith.constant 4 : index
    %c0_95 = arith.constant 0 : index
    %c0_96 = arith.constant 0 : index
    %126 = vector.load %arg5[%c4_94, %c0_95, %c0_96] : memref<9x4x4xf32, #tpu.memory_space<vmem>>, vector<1x4x4xf32>
    %127 = vector.shape_cast %126 : vector<1x4x4xf32> to vector<4x4xf32>
    %cst_97 = arith.constant dense<0.000000e+00> : vector<4x256xf32>
    %128 = tpu.matmul %127, %125, %cst_97 {dimension_numbers = #tpu.dot_dimension_numbers<[1], [0], [0], [1], [0, 0, 1, 1], [], []>} : vector<4x4xf32>, vector<4x256xf32>, vector<4x256xf32> -> vector<4x256xf32>
    %129 = arith.addf %122, %128 : vector<4x256xf32>
    %c255_i32_98 = arith.constant 255 : i32
    %130 = tpu.dynamic_rotate %89 by %c255_i32_98 dim 1 : vector<4x256xf32>, i32 -> vector<4x256xf32>
    %c5_99 = arith.constant 5 : index
    %c0_100 = arith.constant 0 : index
    %131 = vector.load %arg1[%c5_99, %c0_100] : memref<9x256xf32, #tpu.memory_space<vmem>>, vector<1x256xf32>
    %132 = vector.broadcast %131 : vector<1x256xf32> to vector<4x256xf32>
    %133 = arith.mulf %130, %132 : vector<4x256xf32>
    %c5_101 = arith.constant 5 : index
    %c0_102 = arith.constant 0 : index
    %c0_103 = arith.constant 0 : index
    %134 = vector.load %arg5[%c5_101, %c0_102, %c0_103] : memref<9x4x4xf32, #tpu.memory_space<vmem>>, vector<1x4x4xf32>
    %135 = vector.shape_cast %134 : vector<1x4x4xf32> to vector<4x4xf32>
    %cst_104 = arith.constant dense<0.000000e+00> : vector<4x256xf32>
    %136 = tpu.matmul %135, %133, %cst_104 {dimension_numbers = #tpu.dot_dimension_numbers<[1], [0], [0], [1], [0, 0, 1, 1], [], []>} : vector<4x4xf32>, vector<4x256xf32>, vector<4x256xf32> -> vector<4x256xf32>
    %137 = arith.addf %129, %136 : vector<4x256xf32>
    %c241_i32_105 = arith.constant 241 : i32
    %138 = tpu.dynamic_rotate %89 by %c241_i32_105 dim 1 : vector<4x256xf32>, i32 -> vector<4x256xf32>
    %c6_106 = arith.constant 6 : index
    %c0_107 = arith.constant 0 : index
    %139 = vector.load %arg1[%c6_106, %c0_107] : memref<9x256xf32, #tpu.memory_space<vmem>>, vector<1x256xf32>
    %140 = vector.broadcast %139 : vector<1x256xf32> to vector<4x256xf32>
    %141 = arith.mulf %138, %140 : vector<4x256xf32>
    %c6_108 = arith.constant 6 : index
    %c0_109 = arith.constant 0 : index
    %c0_110 = arith.constant 0 : index
    %142 = vector.load %arg5[%c6_108, %c0_109, %c0_110] : memref<9x4x4xf32, #tpu.memory_space<vmem>>, vector<1x4x4xf32>
    %143 = vector.shape_cast %142 : vector<1x4x4xf32> to vector<4x4xf32>
    %cst_111 = arith.constant dense<0.000000e+00> : vector<4x256xf32>
    %144 = tpu.matmul %143, %141, %cst_111 {dimension_numbers = #tpu.dot_dimension_numbers<[1], [0], [0], [1], [0, 0, 1, 1], [], []>} : vector<4x4xf32>, vector<4x256xf32>, vector<4x256xf32> -> vector<4x256xf32>
    %145 = arith.addf %137, %144 : vector<4x256xf32>
    %c240_i32_112 = arith.constant 240 : i32
    %146 = tpu.dynamic_rotate %89 by %c240_i32_112 dim 1 : vector<4x256xf32>, i32 -> vector<4x256xf32>
    %c7_113 = arith.constant 7 : index
    %c0_114 = arith.constant 0 : index
    %147 = vector.load %arg1[%c7_113, %c0_114] : memref<9x256xf32, #tpu.memory_space<vmem>>, vector<1x256xf32>
    %148 = vector.broadcast %147 : vector<1x256xf32> to vector<4x256xf32>
    %149 = arith.mulf %146, %148 : vector<4x256xf32>
    %c7_115 = arith.constant 7 : index
    %c0_116 = arith.constant 0 : index
    %c0_117 = arith.constant 0 : index
    %150 = vector.load %arg5[%c7_115, %c0_116, %c0_117] : memref<9x4x4xf32, #tpu.memory_space<vmem>>, vector<1x4x4xf32>
    %151 = vector.shape_cast %150 : vector<1x4x4xf32> to vector<4x4xf32>
    %cst_118 = arith.constant dense<0.000000e+00> : vector<4x256xf32>
    %152 = tpu.matmul %151, %149, %cst_118 {dimension_numbers = #tpu.dot_dimension_numbers<[1], [0], [0], [1], [0, 0, 1, 1], [], []>} : vector<4x4xf32>, vector<4x256xf32>, vector<4x256xf32> -> vector<4x256xf32>
    %153 = arith.addf %145, %152 : vector<4x256xf32>
    %c239_i32_119 = arith.constant 239 : i32
    %154 = tpu.dynamic_rotate %89 by %c239_i32_119 dim 1 : vector<4x256xf32>, i32 -> vector<4x256xf32>
    %c8_120 = arith.constant 8 : index
    %c0_121 = arith.constant 0 : index
    %155 = vector.load %arg1[%c8_120, %c0_121] : memref<9x256xf32, #tpu.memory_space<vmem>>, vector<1x256xf32>
    %156 = vector.broadcast %155 : vector<1x256xf32> to vector<4x256xf32>
    %157 = arith.mulf %154, %156 : vector<4x256xf32>
    %c8_122 = arith.constant 8 : index
    %c0_123 = arith.constant 0 : index
    %c0_124 = arith.constant 0 : index
    %158 = vector.load %arg5[%c8_122, %c0_123, %c0_124] : memref<9x4x4xf32, #tpu.memory_space<vmem>>, vector<1x4x4xf32>
    %159 = vector.shape_cast %158 : vector<1x4x4xf32> to vector<4x4xf32>
    %cst_125 = arith.constant dense<0.000000e+00> : vector<4x256xf32>
    %160 = tpu.matmul %159, %157, %cst_125 {dimension_numbers = #tpu.dot_dimension_numbers<[1], [0], [0], [1], [0, 0, 1, 1], [], []>} : vector<4x4xf32>, vector<4x256xf32>, vector<4x256xf32> -> vector<4x256xf32>
    %161 = arith.addf %153, %160 : vector<4x256xf32>
    %c0_126 = arith.constant 0 : index
    %c0_127 = arith.constant 0 : index
    %162 = vector.load %arg6[%c0_126, %c0_127] : memref<4x1xf32, #tpu.memory_space<vmem>>, vector<4x1xf32>
    %163 = vector.broadcast %162 : vector<4x1xf32> to vector<4x256xf32>
    %164 = arith.addf %161, %163 : vector<4x256xf32>
    %cst_128 = arith.constant 2.000000e-01 : f32
    %165 = vector.broadcast %cst_128 : f32 to vector<4x256xf32>
    %166 = arith.mulf %165, %164 : vector<4x256xf32>
    %167 = arith.maximumf %164, %166 : vector<4x256xf32>
    %c0_129 = arith.constant 0 : index
    %c8_130 = arith.constant 8 : index
    %c0_131 = arith.constant 0 : index
    %168 = vector.load %arg9[%c0_129, %c8_130, %c0_131] : memref<1x16x256xf32, #tpu.memory_space<vmem>>, vector<1x4x256xf32>
    %169 = vector.shape_cast %168 : vector<1x4x256xf32> to vector<4x256xf32>
    %170 = vector.shape_cast %167 : vector<4x256xf32> to vector<1x4x256xf32>
    tpu.vector_store %arg9[%c0_129, %c8_130, %c0_131], %170 {strides = array<i32>} : memref<1x16x256xf32, #tpu.memory_space<vmem>>, vector<1x4x256xf32>,
    %c0_132 = arith.constant 0 : index
    %c4_133 = arith.constant 4 : index
    %c0_134 = arith.constant 0 : index
    %171 = vector.load %arg9[%c0_132, %c4_133, %c0_134] : memref<1x16x256xf32, #tpu.memory_space<vmem>>, vector<1x8x256xf32>
    %172 = vector.shape_cast %171 : vector<1x8x256xf32> to vector<8x256xf32>
    %cst_135 = arith.constant 0.000000e+00 : f32
    %173 = vector.broadcast %cst_135 : f32 to vector<4x256xf32>
    %c17_i32_136 = arith.constant 17 : i32
    %174 = tpu.dynamic_rotate %172 by %c17_i32_136 dim 1 : vector<8x256xf32>, i32 -> vector<8x256xf32>
    %c0_137 = arith.constant 0 : index
    %c0_138 = arith.constant 0 : index
    %175 = vector.load %arg1[%c0_137, %c0_138] : memref<9x256xf32, #tpu.memory_space<vmem>>, vector<1x256xf32>
    %176 = vector.broadcast %175 : vector<1x256xf32> to vector<8x256xf32>
    %177 = arith.mulf %174, %176 : vector<8x256xf32>
    %c0_139 = arith.constant 0 : index
    %c0_140 = arith.constant 0 : index
    %c0_141 = arith.constant 0 : index
    %178 = vector.load %arg7[%c0_139, %c0_140, %c0_141] : memref<9x4x8xf32, #tpu.memory_space<vmem>>, vector<1x4x8xf32>
    %179 = vector.shape_cast %178 : vector<1x4x8xf32> to vector<4x8xf32>
    %cst_142 = arith.constant dense<0.000000e+00> : vector<4x256xf32>
    %180 = tpu.matmul %179, %177, %cst_142 {dimension_numbers = #tpu.dot_dimension_numbers<[1], [0], [0], [1], [0, 0, 1, 1], [], []>} : vector<4x8xf32>, vector<8x256xf32>, vector<4x256xf32> -> vector<4x256xf32>
    %181 = arith.addf %173, %180 : vector<4x256xf32>
    %c16_i32_143 = arith.constant 16 : i32
    %182 = tpu.dynamic_rotate %172 by %c16_i32_143 dim 1 : vector<8x256xf32>, i32 -> vector<8x256xf32>
    %c1_144 = arith.constant 1 : index
    %c0_145 = arith.constant 0 : index
    %183 = vector.load %arg1[%c1_144, %c0_145] : memref<9x256xf32, #tpu.memory_space<vmem>>, vector<1x256xf32>
    %184 = vector.broadcast %183 : vector<1x256xf32> to vector<8x256xf32>
    %185 = arith.mulf %182, %184 : vector<8x256xf32>
    %c1_146 = arith.constant 1 : index
    %c0_147 = arith.constant 0 : index
    %c0_148 = arith.constant 0 : index
    %186 = vector.load %arg7[%c1_146, %c0_147, %c0_148] : memref<9x4x8xf32, #tpu.memory_space<vmem>>, vector<1x4x8xf32>
    %187 = vector.shape_cast %186 : vector<1x4x8xf32> to vector<4x8xf32>
    %cst_149 = arith.constant dense<0.000000e+00> : vector<4x256xf32>
    %188 = tpu.matmul %187, %185, %cst_149 {dimension_numbers = #tpu.dot_dimension_numbers<[1], [0], [0], [1], [0, 0, 1, 1], [], []>} : vector<4x8xf32>, vector<8x256xf32>, vector<4x256xf32> -> vector<4x256xf32>
    %189 = arith.addf %181, %188 : vector<4x256xf32>
    %c15_i32_150 = arith.constant 15 : i32
    %190 = tpu.dynamic_rotate %172 by %c15_i32_150 dim 1 : vector<8x256xf32>, i32 -> vector<8x256xf32>
    %c2_151 = arith.constant 2 : index
    %c0_152 = arith.constant 0 : index
    %191 = vector.load %arg1[%c2_151, %c0_152] : memref<9x256xf32, #tpu.memory_space<vmem>>, vector<1x256xf32>
    %192 = vector.broadcast %191 : vector<1x256xf32> to vector<8x256xf32>
    %193 = arith.mulf %190, %192 : vector<8x256xf32>
    %c2_153 = arith.constant 2 : index
    %c0_154 = arith.constant 0 : index
    %c0_155 = arith.constant 0 : index
    %194 = vector.load %arg7[%c2_153, %c0_154, %c0_155] : memref<9x4x8xf32, #tpu.memory_space<vmem>>, vector<1x4x8xf32>
    %195 = vector.shape_cast %194 : vector<1x4x8xf32> to vector<4x8xf32>
    %cst_156 = arith.constant dense<0.000000e+00> : vector<4x256xf32>
    %196 = tpu.matmul %195, %193, %cst_156 {dimension_numbers = #tpu.dot_dimension_numbers<[1], [0], [0], [1], [0, 0, 1, 1], [], []>} : vector<4x8xf32>, vector<8x256xf32>, vector<4x256xf32> -> vector<4x256xf32>
    %197 = arith.addf %189, %196 : vector<4x256xf32>
    %c1_i32_157 = arith.constant 1 : i32
    %198 = tpu.dynamic_rotate %172 by %c1_i32_157 dim 1 : vector<8x256xf32>, i32 -> vector<8x256xf32>
    %c3_158 = arith.constant 3 : index
    %c0_159 = arith.constant 0 : index
    %199 = vector.load %arg1[%c3_158, %c0_159] : memref<9x256xf32, #tpu.memory_space<vmem>>, vector<1x256xf32>
    %200 = vector.broadcast %199 : vector<1x256xf32> to vector<8x256xf32>
    %201 = arith.mulf %198, %200 : vector<8x256xf32>
    %c3_160 = arith.constant 3 : index
    %c0_161 = arith.constant 0 : index
    %c0_162 = arith.constant 0 : index
    %202 = vector.load %arg7[%c3_160, %c0_161, %c0_162] : memref<9x4x8xf32, #tpu.memory_space<vmem>>, vector<1x4x8xf32>
    %203 = vector.shape_cast %202 : vector<1x4x8xf32> to vector<4x8xf32>
    %cst_163 = arith.constant dense<0.000000e+00> : vector<4x256xf32>
    %204 = tpu.matmul %203, %201, %cst_163 {dimension_numbers = #tpu.dot_dimension_numbers<[1], [0], [0], [1], [0, 0, 1, 1], [], []>} : vector<4x8xf32>, vector<8x256xf32>, vector<4x256xf32> -> vector<4x256xf32>
    %205 = arith.addf %197, %204 : vector<4x256xf32>
    %c4_164 = arith.constant 4 : index
    %c0_165 = arith.constant 0 : index
    %206 = vector.load %arg1[%c4_164, %c0_165] : memref<9x256xf32, #tpu.memory_space<vmem>>, vector<1x256xf32>
    %207 = vector.broadcast %206 : vector<1x256xf32> to vector<8x256xf32>
    %208 = arith.mulf %172, %207 : vector<8x256xf32>
    %c4_166 = arith.constant 4 : index
    %c0_167 = arith.constant 0 : index
    %c0_168 = arith.constant 0 : index
    %209 = vector.load %arg7[%c4_166, %c0_167, %c0_168] : memref<9x4x8xf32, #tpu.memory_space<vmem>>, vector<1x4x8xf32>
    %210 = vector.shape_cast %209 : vector<1x4x8xf32> to vector<4x8xf32>
    %cst_169 = arith.constant dense<0.000000e+00> : vector<4x256xf32>
    %211 = tpu.matmul %210, %208, %cst_169 {dimension_numbers = #tpu.dot_dimension_numbers<[1], [0], [0], [1], [0, 0, 1, 1], [], []>} : vector<4x8xf32>, vector<8x256xf32>, vector<4x256xf32> -> vector<4x256xf32>
    %212 = arith.addf %205, %211 : vector<4x256xf32>
    %c255_i32_170 = arith.constant 255 : i32
    %213 = tpu.dynamic_rotate %172 by %c255_i32_170 dim 1 : vector<8x256xf32>, i32 -> vector<8x256xf32>
    %c5_171 = arith.constant 5 : index
    %c0_172 = arith.constant 0 : index
    %214 = vector.load %arg1[%c5_171, %c0_172] : memref<9x256xf32, #tpu.memory_space<vmem>>, vector<1x256xf32>
    %215 = vector.broadcast %214 : vector<1x256xf32> to vector<8x256xf32>
    %216 = arith.mulf %213, %215 : vector<8x256xf32>
    %c5_173 = arith.constant 5 : index
    %c0_174 = arith.constant 0 : index
    %c0_175 = arith.constant 0 : index
    %217 = vector.load %arg7[%c5_173, %c0_174, %c0_175] : memref<9x4x8xf32, #tpu.memory_space<vmem>>, vector<1x4x8xf32>
    %218 = vector.shape_cast %217 : vector<1x4x8xf32> to vector<4x8xf32>
    %cst_176 = arith.constant dense<0.000000e+00> : vector<4x256xf32>
    %219 = tpu.matmul %218, %216, %cst_176 {dimension_numbers = #tpu.dot_dimension_numbers<[1], [0], [0], [1], [0, 0, 1, 1], [], []>} : vector<4x8xf32>, vector<8x256xf32>, vector<4x256xf32> -> vector<4x256xf32>
    %220 = arith.addf %212, %219 : vector<4x256xf32>
    %c241_i32_177 = arith.constant 241 : i32
    %221 = tpu.dynamic_rotate %172 by %c241_i32_177 dim 1 : vector<8x256xf32>, i32 -> vector<8x256xf32>
    %c6_178 = arith.constant 6 : index
    %c0_179 = arith.constant 0 : index
    %222 = vector.load %arg1[%c6_178, %c0_179] : memref<9x256xf32, #tpu.memory_space<vmem>>, vector<1x256xf32>
    %223 = vector.broadcast %222 : vector<1x256xf32> to vector<8x256xf32>
    %224 = arith.mulf %221, %223 : vector<8x256xf32>
    %c6_180 = arith.constant 6 : index
    %c0_181 = arith.constant 0 : index
    %c0_182 = arith.constant 0 : index
    %225 = vector.load %arg7[%c6_180, %c0_181, %c0_182] : memref<9x4x8xf32, #tpu.memory_space<vmem>>, vector<1x4x8xf32>
    %226 = vector.shape_cast %225 : vector<1x4x8xf32> to vector<4x8xf32>
    %cst_183 = arith.constant dense<0.000000e+00> : vector<4x256xf32>
    %227 = tpu.matmul %226, %224, %cst_183 {dimension_numbers = #tpu.dot_dimension_numbers<[1], [0], [0], [1], [0, 0, 1, 1], [], []>} : vector<4x8xf32>, vector<8x256xf32>, vector<4x256xf32> -> vector<4x256xf32>
    %228 = arith.addf %220, %227 : vector<4x256xf32>
    %c240_i32_184 = arith.constant 240 : i32
    %229 = tpu.dynamic_rotate %172 by %c240_i32_184 dim 1 : vector<8x256xf32>, i32 -> vector<8x256xf32>
    %c7_185 = arith.constant 7 : index
    %c0_186 = arith.constant 0 : index
    %230 = vector.load %arg1[%c7_185, %c0_186] : memref<9x256xf32, #tpu.memory_space<vmem>>, vector<1x256xf32>
    %231 = vector.broadcast %230 : vector<1x256xf32> to vector<8x256xf32>
    %232 = arith.mulf %229, %231 : vector<8x256xf32>
    %c7_187 = arith.constant 7 : index
    %c0_188 = arith.constant 0 : index
    %c0_189 = arith.constant 0 : index
    %233 = vector.load %arg7[%c7_187, %c0_188, %c0_189] : memref<9x4x8xf32, #tpu.memory_space<vmem>>, vector<1x4x8xf32>
    %234 = vector.shape_cast %233 : vector<1x4x8xf32> to vector<4x8xf32>
    %cst_190 = arith.constant dense<0.000000e+00> : vector<4x256xf32>
    %235 = tpu.matmul %234, %232, %cst_190 {dimension_numbers = #tpu.dot_dimension_numbers<[1], [0], [0], [1], [0, 0, 1, 1], [], []>} : vector<4x8xf32>, vector<8x256xf32>, vector<4x256xf32> -> vector<4x256xf32>
    %236 = arith.addf %228, %235 : vector<4x256xf32>
    %c239_i32_191 = arith.constant 239 : i32
    %237 = tpu.dynamic_rotate %172 by %c239_i32_191 dim 1 : vector<8x256xf32>, i32 -> vector<8x256xf32>
    %c8_192 = arith.constant 8 : index
    %c0_193 = arith.constant 0 : index
    %238 = vector.load %arg1[%c8_192, %c0_193] : memref<9x256xf32, #tpu.memory_space<vmem>>, vector<1x256xf32>
    %239 = vector.broadcast %238 : vector<1x256xf32> to vector<8x256xf32>
    %240 = arith.mulf %237, %239 : vector<8x256xf32>
    %c8_194 = arith.constant 8 : index
    %c0_195 = arith.constant 0 : index
    %c0_196 = arith.constant 0 : index
    %241 = vector.load %arg7[%c8_194, %c0_195, %c0_196] : memref<9x4x8xf32, #tpu.memory_space<vmem>>, vector<1x4x8xf32>
    %242 = vector.shape_cast %241 : vector<1x4x8xf32> to vector<4x8xf32>
    %cst_197 = arith.constant dense<0.000000e+00> : vector<4x256xf32>
    %243 = tpu.matmul %242, %240, %cst_197 {dimension_numbers = #tpu.dot_dimension_numbers<[1], [0], [0], [1], [0, 0, 1, 1], [], []>} : vector<4x8xf32>, vector<8x256xf32>, vector<4x256xf32> -> vector<4x256xf32>
    %244 = arith.addf %236, %243 : vector<4x256xf32>
    %c0_198 = arith.constant 0 : index
    %c0_199 = arith.constant 0 : index
    %245 = vector.load %arg8[%c0_198, %c0_199] : memref<4x1xf32, #tpu.memory_space<vmem>>, vector<4x1xf32>
    %246 = vector.broadcast %245 : vector<4x1xf32> to vector<4x256xf32>
    %247 = arith.addf %244, %246 : vector<4x256xf32>
    %cst_200 = arith.constant 2.000000e-01 : f32
    %248 = vector.broadcast %cst_200 : f32 to vector<4x256xf32>
    %249 = arith.mulf %248, %247 : vector<4x256xf32>
    %250 = arith.maximumf %247, %249 : vector<4x256xf32>
    %c0_201 = arith.constant 0 : index
    %c12 = arith.constant 12 : index
    %c0_202 = arith.constant 0 : index
    %251 = vector.load %arg9[%c0_201, %c12, %c0_202] : memref<1x16x256xf32, #tpu.memory_space<vmem>>, vector<1x4x256xf32>
    %252 = vector.shape_cast %251 : vector<1x4x256xf32> to vector<4x256xf32>
    %253 = vector.shape_cast %250 : vector<4x256xf32> to vector<1x4x256xf32>
    tpu.vector_store %arg9[%c0_201, %c12, %c0_202], %253 {strides = array<i32>} : memref<1x16x256xf32, #tpu.memory_space<vmem>>, vector<1x4x256xf32>,
    return
  }
  func.func @transform_0(%arg0: i32) -> (i32, i32) {
    %c0_i32 = arith.constant 0 : i32
    %c0_i32_0 = arith.constant 0 : i32
    %c0_i32_1 = arith.constant 0 : i32
    return %c0_i32, %c0_i32_0 : i32, i32
  }
  func.func @transform_1(%arg0: i32) -> (i32, i32, i32) {
    %c0_i32 = arith.constant 0 : i32
    %c0_i32_0 = arith.constant 0 : i32
    %c0_i32_1 = arith.constant 0 : i32
    return %arg0, %c0_i32, %c0_i32_0 : i32, i32, i32
  }
  func.func @transform_2(%arg0: i32) -> (i32, i32, i32) {
    %c0_i32 = arith.constant 0 : i32
    %c0_i32_0 = arith.constant 0 : i32
    %c0_i32_1 = arith.constant 0 : i32
    %c0_i32_2 = arith.constant 0 : i32
    return %c0_i32, %c0_i32_0, %c0_i32_1 : i32, i32, i32
  }
  func.func @transform_3(%arg0: i32) -> (i32, i32) {
    %c0_i32 = arith.constant 0 : i32
    %c0_i32_0 = arith.constant 0 : i32
    %c0_i32_1 = arith.constant 0 : i32
    return %c0_i32, %c0_i32_0 : i32, i32
  }
  func.func @transform_4(%arg0: i32) -> (i32, i32, i32) {
    %c0_i32 = arith.constant 0 : i32
    %c0_i32_0 = arith.constant 0 : i32
    %c0_i32_1 = arith.constant 0 : i32
    %c0_i32_2 = arith.constant 0 : i32
    return %c0_i32, %c0_i32_0, %c0_i32_1 : i32, i32, i32
  }
  func.func @transform_5(%arg0: i32) -> (i32, i32) {
    %c0_i32 = arith.constant 0 : i32
    %c0_i32_0 = arith.constant 0 : i32
    %c0_i32_1 = arith.constant 0 : i32
    return %c0_i32, %c0_i32_0 : i32, i32
  }
  func.func @transform_6(%arg0: i32) -> (i32, i32, i32) {
    %c0_i32 = arith.constant 0 : i32
    %c0_i32_0 = arith.constant 0 : i32
    %c0_i32_1 = arith.constant 0 : i32
    %c0_i32_2 = arith.constant 0 : i32
    return %c0_i32, %c0_i32_0, %c0_i32_1 : i32, i32, i32
  }
  func.func @transform_7(%arg0: i32) -> (i32, i32) {
    %c0_i32 = arith.constant 0 : i32
    %c0_i32_0 = arith.constant 0 : i32
    %c0_i32_1 = arith.constant 0 : i32
    return %c0_i32, %c0_i32_0 : i32, i32
  }
  func.func @transform_8(%arg0: i32) -> (i32, i32, i32) {
    %c0_i32 = arith.constant 0 : i32
    %c0_i32_0 = arith.constant 0 : i32
    %c0_i32_1 = arith.constant 0 : i32
    return %arg0, %c0_i32, %c0_i32_0 : i32, i32, i32
  }
}

</mosaic_0001>

<llo_original>
// kernel: tpu_custom_call.1
$region0: #{tpu_custom_call.1}
  #allocation0 [shape = 'u32[]', space=smem, size = 0x4, offset = 0x4, fixed_abs, tag = 'smem constant byte address 0x4 - core index']
  #allocation1 [shape = 'u32[144,128]{1,0:T(1,128)}', space=vmem, size = 0x12000, scoped, tag = 'internal scratch']
  %s0 = inlined_call_operand.vmem [shape: f32[9,256], index: 0, kind: input, shape index: {}]
  %s1 = inlined_call_operand.vmem [shape: f32[2,4,256], index: 1, kind: input, shape index: {}]
  %s2 = inlined_call_operand.vmem [shape: f32[9,4,4], index: 2, kind: input, shape index: {}]
  %s3 = inlined_call_operand.vmem [shape: f32[4,1], index: 3, kind: input, shape index: {}]
  %s4 = inlined_call_operand.vmem [shape: f32[9,4,4], index: 4, kind: input, shape index: {}]
  %s5 = inlined_call_operand.vmem [shape: f32[4,1], index: 5, kind: input, shape index: {}]
  %s6 = inlined_call_operand.vmem [shape: f32[9,4,8], index: 6, kind: input, shape index: {}]
  %s7 = inlined_call_operand.vmem [shape: f32[4,1], index: 7, kind: input, shape index: {}]
  %s8 = inlined_call_operand.hbm [shape: f32[2,16,256], index: 8, kind: output, shape index: {}]
  %s9 = sld [smem:[#allocation0]]
  $region65: #{tpu_custom_call.1} parent=0
    _
  %s11 = ssub.s32 1, %s9
  %s12 = scalar_select 0, %s11, %s9
  $region1: #{tpu_custom_call.1} parent=0
    #allocation2 [shape = 'u8[32768]{0}', space=vmem, size = 0x8000, scoped, tag = 'output window, operand 0']
    #allocation3 [shape = 's32[2]{0}', space=sflag, size = 0x8, scoped, tag = 'scoped memory for tpu_custom_call.1']
    %13 = vsyncpa [#allocation3], 0
    %s14 = scalar_lea.sflag [#allocation3], 1
    %15 = vsyncpa %s14, 0
    loop: start=0, step=1, limit=4
    $region2: #{tpu_custom_call.1} parent=1 // loop_pre_header
      _
    $region3: #{tpu_custom_call.1} parent=1 // loop_header
      %s17 = sphi 0, %s21
      %p18 = scmp.ge.s32.totalorder %s17, 4
      %s25 = sphi 0, %s25
      %s27 = sphi 0, %s25
      %s28 = sphi 0, %s27
      %s42 = sphi 0, %s28
      %s48 = sphi 0, %s50
      %s51 = sphi 0, %s48
      %s52 = sphi 0, %s51
      %s68 = sphi 0, %s52
      %s72 = sphi 0, %s72
      %s74 = sphi 0, %s72
      %s75 = sphi 0, %s74
      %s89 = sphi 0, %s75
      %s93 = sphi 0, %s93
      %s95 = sphi 0, %s93
      %s96 = sphi 0, %s95
      %s110 = sphi 0, %s96
      %s114 = sphi 0, %s114
      %s116 = sphi 0, %s114
      %s117 = sphi 0, %s116
      %s131 = sphi 0, %s117
      %s135 = sphi 0, %s135
      %s137 = sphi 0, %s135
      %s138 = sphi 0, %s137
      %s152 = sphi 0, %s138
      %s156 = sphi 0, %s156
      %s158 = sphi 0, %s156
      %s159 = sphi 0, %s158
      %s173 = sphi 0, %s159
      %s177 = sphi 0, %s177
      %s179 = sphi 0, %s177
      %s180 = sphi 0, %s179
      %s194 = sphi 0, %s180
      %s200 = sphi 0, %s202
      %s203 = sphi 0, %s200
      %s204 = sphi 0, %s203
      %s220 = sphi 0, %s204
    $region4: #{tpu_custom_call.1} parent=1 // loop_header_branch
      %20 = sbr.rel (%p18) target = $region8
    $region5: #{tpu_custom_call.1} parent=1 // loop_body
      %s22 = ssub.s32 %s17, 1
      %s23 = ssub.s32 %s17, 2
      %s24 = sadd.s32 %s17, 1
      %s26 = sadd.s32 %s25, 1
      %p29 = scmp.eq.s32.totalorder %s17, 1
      %p30 = scmp.ne.s32.totalorder %s25, %s27
      %p31 = scmp.eq.s32.totalorder %s17, 0
      %p32 = por %p30, %p31
      %p33 = scmp.ne.s32.totalorder %s25, %s27
      %p34 = scmp.eq.s32.totalorder %s22, 1
      %p35 = por %p33, %p34
      %p36 = scmp.ne.s32.totalorder %s27, %s28
      %p37 = scmp.eq.s32.totalorder %s22, 0
      %p38 = por %p36, %p37
      %p39 = scmp.ne.s32.totalorder %s27, %s28
      %p40 = scmp.eq.s32.totalorder %s23, 1
      %p41 = por %p39, %p40
      %p43 = scmp.ne.s32.totalorder %s28, %s42
      %p44 = scmp.eq.s32.totalorder %s23, 0
      %p45 = por %p43, %p44
      %s46 = ssub.s32 %s17, %s24
      %p47 = scmp.eq.s32.totalorder %s46, 0
      %s49 = sadd.s32 %s48, 1
      %s50 = scalar_select %p47, %s48, %s49
      %p53 = pneg %p47
      %p54 = scmp.eq.s32.totalorder %s17, 1
      %p55 = por %p53, %p54
      %p56 = scmp.ne.s32.totalorder %s48, %s51
      %p57 = scmp.eq.s32.totalorder %s17, 0
      %p58 = por %p56, %p57
      %p59 = scmp.ne.s32.totalorder %s48, %s51
      %p60 = scmp.eq.s32.totalorder %s22, 1
      %p61 = por %p59, %p60
      %p62 = scmp.ne.s32.totalorder %s51, %s52
      %p63 = scmp.eq.s32.totalorder %s22, 0
      %p64 = por %p62, %p63
      %p65 = scmp.ne.s32.totalorder %s51, %s52
      %p66 = scmp.eq.s32.totalorder %s23, 1
      %p67 = por %p65, %p66
      %p69 = scmp.ne.s32.totalorder %s52, %s68
      %p70 = scmp.eq.s32.totalorder %s23, 0
      %p71 = por %p69, %p70
      %s73 = sadd.s32 %s72, 1
      %p76 = scmp.eq.s32.totalorder %s17, 1
      %p77 = scmp.ne.s32.totalorder %s72, %s74
      %p78 = scmp.eq.s32.totalorder %s17, 0
      %p79 = por %p77, %p78
      %p80 = scmp.ne.s32.totalorder %s72, %s74
      %p81 = scmp.eq.s32.totalorder %s22, 1
      %p82 = por %p80, %p81
      %p83 = scmp.ne.s32.totalorder %s74, %s75
      %p84 = scmp.eq.s32.totalorder %s22, 0
      %p85 = por %p83, %p84
      %p86 = scmp.ne.s32.totalorder %s74, %s75
      %p87 = scmp.eq.s32.totalorder %s23, 1
      %p88 = por %p86, %p87
      %p90 = scmp.ne.s32.totalorder %s75, %s89
      %p91 = scmp.eq.s32.totalorder %s23, 0
      %p92 = por %p90, %p91
      %s94 = sadd.s32 %s93, 1
      %p97 = scmp.eq.s32.totalorder %s17, 1
      %p98 = scmp.ne.s32.totalorder %s93, %s95
      %p99 = scmp.eq.s32.totalorder %s17, 0
      %p100 = por %p98, %p99
      %p101 = scmp.ne.s32.totalorder %s93, %s95
      %p102 = scmp.eq.s32.totalorder %s22, 1
      %p103 = por %p101, %p102
      %p104 = scmp.ne.s32.totalorder %s95, %s96
      %p105 = scmp.eq.s32.totalorder %s22, 0
      %p106 = por %p104, %p105
      %p107 = scmp.ne.s32.totalorder %s95, %s96
      %p108 = scmp.eq.s32.totalorder %s23, 1
      %p109 = por %p107, %p108
      %p111 = scmp.ne.s32.totalorder %s96, %s110
      %p112 = scmp.eq.s32.totalorder %s23, 0
      %p113 = por %p111, %p112
      %s115 = sadd.s32 %s114, 1
      %p118 = scmp.eq.s32.totalorder %s17, 1
      %p119 = scmp.ne.s32.totalorder %s114, %s116
      %p120 = scmp.eq.s32.totalorder %s17, 0
      %p121 = por %p119, %p120
      %p122 = scmp.ne.s32.totalorder %s114, %s116
      %p123 = scmp.eq.s32.totalorder %s22, 1
      %p124 = por %p122, %p123
      %p125 = scmp.ne.s32.totalorder %s116, %s117
      %p126 = scmp.eq.s32.totalorder %s22, 0
      %p127 = por %p125, %p126
      %p128 = scmp.ne.s32.totalorder %s116, %s117
      %p129 = scmp.eq.s32.totalorder %s23, 1
      %p130 = por %p128, %p129
      %p132 = scmp.ne.s32.totalorder %s117, %s131
      %p133 = scmp.eq.s32.totalorder %s23, 0
      %p134 = por %p132, %p133
      %s136 = sadd.s32 %s135, 1
      %p139 = scmp.eq.s32.totalorder %s17, 1
      %p140 = scmp.ne.s32.totalorder %s135, %s137
      %p141 = scmp.eq.s32.totalorder %s17, 0
      %p142 = por %p140, %p141
      %p143 = scmp.ne.s32.totalorder %s135, %s137
      %p144 = scmp.eq.s32.totalorder %s22, 1
      %p145 = por %p143, %p144
      %p146 = scmp.ne.s32.totalorder %s137, %s138
      %p147 = scmp.eq.s32.totalorder %s22, 0
      %p148 = por %p146, %p147
      %p149 = scmp.ne.s32.totalorder %s137, %s138
      %p150 = scmp.eq.s32.totalorder %s23, 1
      %p151 = por %p149, %p150
      %p153 = scmp.ne.s32.totalorder %s138, %s152
      %p154 = scmp.eq.s32.totalorder %s23, 0
      %p155 = por %p153, %p154
      %s157 = sadd.s32 %s156, 1
      %p160 = scmp.eq.s32.totalorder %s17, 1
      %p161 = scmp.ne.s32.totalorder %s156, %s158
      %p162 = scmp.eq.s32.totalorder %s17, 0
      %p163 = por %p161, %p162
      %p164 = scmp.ne.s32.totalorder %s156, %s158
      %p165 = scmp.eq.s32.totalorder %s22, 1
      %p166 = por %p164, %p165
      %p167 = scmp.ne.s32.totalorder %s158, %s159
      %p168 = scmp.eq.s32.totalorder %s22, 0
      %p169 = por %p167, %p168
      %p170 = scmp.ne.s32.totalorder %s158, %s159
      %p171 = scmp.eq.s32.totalorder %s23, 1
      %p172 = por %p170, %p171
      %p174 = scmp.ne.s32.totalorder %s159, %s173
      %p175 = scmp.eq.s32.totalorder %s23, 0
      %p176 = por %p174, %p175
      %s178 = sadd.s32 %s177, 1
      %p181 = scmp.eq.s32.totalorder %s17, 1
      %p182 = scmp.ne.s32.totalorder %s177, %s179
      %p183 = scmp.eq.s32.totalorder %s17, 0
      %p184 = por %p182, %p183
      %p185 = scmp.ne.s32.totalorder %s177, %s179
      %p186 = scmp.eq.s32.totalorder %s22, 1
      %p187 = por %p185, %p186
      %p188 = scmp.ne.s32.totalorder %s179, %s180
      %p189 = scmp.eq.s32.totalorder %s22, 0
      %p190 = por %p188, %p189
      %p191 = scmp.ne.s32.totalorder %s179, %s180
      %p192 = scmp.eq.s32.totalorder %s23, 1
      %p193 = por %p191, %p192
      %p195 = scmp.ne.s32.totalorder %s180, %s194
      %p196 = scmp.eq.s32.totalorder %s23, 0
      %p197 = por %p195, %p196
      %s198 = ssub.s32 %s17, %s24
      %p199 = scmp.eq.s32.totalorder %s198, 0
      %s201 = sadd.s32 %s200, 1
      %s202 = scalar_select %p199, %s200, %s201
      %p205 = pneg %p199
      %p206 = scmp.eq.s32.totalorder %s17, 1
      %p207 = por %p205, %p206
      %p208 = scmp.ne.s32.totalorder %s200, %s203
      %p209 = scmp.eq.s32.totalorder %s17, 0
      %p210 = por %p208, %p209
      %p211 = scmp.ne.s32.totalorder %s200, %s203
      %p212 = scmp.eq.s32.totalorder %s22, 1
      %p213 = por %p211, %p212
      %p214 = scmp.ne.s32.totalorder %s203, %s204
      %p215 = scmp.eq.s32.totalorder %s22, 0
      %p216 = por %p214, %p215
      %p217 = scmp.ne.s32.totalorder %s203, %s204
      %p218 = scmp.eq.s32.totalorder %s23, 1
      %p219 = por %p217, %p218
      %p221 = scmp.ne.s32.totalorder %s204, %s220
      %p222 = scmp.eq.s32.totalorder %s23, 0
      %p223 = por %p221, %p222
      %p224 = scmp.le.s32.totalorder 1, %s17
      %p225 = scmp.lt.s32.totalorder %s17, 3
      %p226 = pnand %p224, %p225
      %p227 = pneg %p226
      // Predicated region
      $region9: #{tpu_custom_call.1} parent=5 // pred_check
        _
      $region10: #{tpu_custom_call.1} parent=5 // pred_check_branch
        %229 = sbr.rel (%p226) target = $region12
      $region11: #{tpu_custom_call.1} parent=5 // pred_region
        %s230 = ssub.s32 %s17, 1
        // Predicated region
        $region13: #{tpu_custom_call.1} parent=11 // pred_check
          %p231 = pneg %p38
        $region14: #{tpu_custom_call.1} parent=11 // pred_check_branch
          %233 = sbr.rel (%p231) target = $region16
        $region15: #{tpu_custom_call.1} parent=11 // pred_region
          _
        $region16: #{tpu_custom_call.1} parent=11 // pred_fallthru
          _
        // Predicated region
        $region17: #{tpu_custom_call.1} parent=11 // pred_check
          %p234 = pneg %p85
        $region18: #{tpu_custom_call.1} parent=11 // pred_check_branch
          %236 = sbr.rel (%p234) target = $region20
        $region19: #{tpu_custom_call.1} parent=11 // pred_region
          _
        $region20: #{tpu_custom_call.1} parent=11 // pred_fallthru
          _
        // Predicated region
        $region21: #{tpu_custom_call.1} parent=11 // pred_check
          %p237 = pneg %p106
        $region22: #{tpu_custom_call.1} parent=11 // pred_check_branch
          %239 = sbr.rel (%p237) target = $region24
        $region23: #{tpu_custom_call.1} parent=11 // pred_region
          _
        $region24: #{tpu_custom_call.1} parent=11 // pred_fallthru
          _
        // Predicated region
        $region25: #{tpu_custom_call.1} parent=11 // pred_check
          %p240 = pneg %p127
        $region26: #{tpu_custom_call.1} parent=11 // pred_check_branch
          %242 = sbr.rel (%p240) target = $region28
        $region27: #{tpu_custom_call.1} parent=11 // pred_region
          _
        $region28: #{tpu_custom_call.1} parent=11 // pred_fallthru
          _
        // Predicated region
        $region29: #{tpu_custom_call.1} parent=11 // pred_check
          %p243 = pneg %p148
        $region30: #{tpu_custom_call.1} parent=11 // pred_check_branch
          %245 = sbr.rel (%p243) target = $region32
        $region31: #{tpu_custom_call.1} parent=11 // pred_region
          _
        $region32: #{tpu_custom_call.1} parent=11 // pred_fallthru
          _
        // Predicated region
        $region33: #{tpu_custom_call.1} parent=11 // pred_check
          %p246 = pneg %p169
        $region34: #{tpu_custom_call.1} parent=11 // pred_check_branch
          %248 = sbr.rel (%p246) target = $region36
        $region35: #{tpu_custom_call.1} parent=11 // pred_region
          _
        $region36: #{tpu_custom_call.1} parent=11 // pred_fallthru
          _
        // Predicated region
        $region37: #{tpu_custom_call.1} parent=11 // pred_check
          %p249 = pneg %p190
        $region38: #{tpu_custom_call.1} parent=11 // pred_check_branch
          %251 = sbr.rel (%p249) target = $region40
        $region39: #{tpu_custom_call.1} parent=11 // pred_region
          _
        $region40: #{tpu_custom_call.1} parent=11 // pred_fallthru
          _
      $region12: #{tpu_custom_call.1} parent=5 // pred_fallthru
        _
      %p252 = scmp.lt.s32.totalorder %s17, 2
      // Predicated region
      $region41: #{tpu_custom_call.1} parent=5 // pred_check
        %p253 = pneg %p252
      $region42: #{tpu_custom_call.1} parent=5 // pred_check_branch
        %255 = sbr.rel (%p253) target = $region44
      $region43: #{tpu_custom_call.1} parent=5 // pred_region
        // Predicated region
        $region45: #{tpu_custom_call.1} parent=43 // pred_check
          %p256 = pneg %p58
        $region46: #{tpu_custom_call.1} parent=43 // pred_check_branch
          %258 = sbr.rel (%p256) target = $region48
        $region47: #{tpu_custom_call.1} parent=43 // pred_region
          %p259 = scmp.lt.s32.totalorder %s17, 1
          %s260 = scalar_select %p259, %s17, 1
          %s261 = smul.addr %s260, 2
          %s262 = smul.addr %s261, 4
          %s263 = scalar_lea.vmem %s1, %s262
        $region48: #{tpu_custom_call.1} parent=43 // pred_fallthru
          _
      $region44: #{tpu_custom_call.1} parent=5 // pred_fallthru
        _
      %p264 = scmp.le.s32.totalorder 1, %s17
      %p265 = scmp.lt.s32.totalorder %s17, 3
      %p266 = pnand %p264, %p265
      %p267 = pneg %p266
      // Predicated region
      $region49: #{tpu_custom_call.1} parent=5 // pred_check
        _
      $region50: #{tpu_custom_call.1} parent=5 // pred_check_branch
        %269 = sbr.rel (%p266) target = $region52
      $region51: #{tpu_custom_call.1} parent=5 // pred_region
        %s270 = ssub.s32 %s17, 1
        %p271 = pneg %p38
        %p272 = pneg %p35
        %p273 = scmp.lt.s32.totalorder %s22, 1
        %s274 = scalar_select %p273, %s22, 1
        %s275 = smul.addr %s274, 2
        %s276 = smul.addr %s275, 4
        %s277 = scalar_lea.vmem %s1, %s276
        %p278 = pneg %p64
        %p279 = pneg %p61
        %p280 = pneg %p85
        %p281 = pneg %p82
        %p282 = pneg %p106
        %p283 = pneg %p103
        %p284 = pneg %p127
        %p285 = pneg %p124
        %p286 = pneg %p148
        %p287 = pneg %p145
        %p288 = pneg %p169
        %p289 = pneg %p166
        %p290 = pneg %p190
        %p291 = pneg %p187
        %p292 = pneg %p216
        %p293 = pneg %p213
        %s294 = sand.u32 %s203, 1
        %s295 = scalar_lea.sflag [#allocation3], %s294
        %s296 = sand.u32 %s203, 1
        %s297 = smul.addr %s296, 32
        %s298 = scalar_lea.vmem [#allocation2], %s297
        %p299 = scmp.lt.s32.totalorder %s22, 1
        %s300 = scalar_select %p299, %s22, 1
        %s301 = smul.addr %s300, 2
        %s302 = smul.addr %s301, 4
        %s303 = scalar_lea.vmem %s1, %s302
        %v304 = vld [vmem:[%s303] sm:$0xff]
        %v306 = vcombine.high %v304, %v304
        %308 = vst [vmem:[%s298] sm:$0xf] %v304
        %309 = vst [vmem:[%s298 + $0x8] sm:$0xf] %v306
        %v310 = vld [vmem:[%s303] sm:$0xff]
        %v312 = vcombine.high %v310, %v310
        %314 = vrot.lane.b32.xlu0 %v310, 17
        %v315 = vpop.permute.xlu0 %314
        %316 = vrot.lane.b32.xlu0 %v312, 17
        %v317 = vpop.permute.xlu0 %316
        %v318 = vlaneseq
        %v319 = vand.u32 %v318, 127
        %vm320 = vcmp.lt.s32.totalorder %v319, 17
        %v321 = vsel %vm320, %v315, %v317
        %v322 = vsel %vm320, %v317, %v315
        %v323 = vld [vmem:[%s0] ss:$8 sm:$0x3]
        %v325 = vlaneseq
        %v326 = vshrl.u32 %v325, 7
        %v327 = vsub.s32 0, %v326
        %v328 = vrot.slane %v323, %v327
        %v329 = vlaneseq
        %v330 = vshrl.u32 %v329, 7
        %v331 = vsub.s32 1, %v330
        %v332 = vrot.slane %v323, %v331
        %v335 = vmul.f32 %v322, %v328
        %v336 = vmul.f32 %v321, %v332
        %v337 = vld [vmem:[%s2] sm:$0xf]
        %338 = vrot.lane.b32.xlu0 %v310, 16
        %v339 = vpop.permute.xlu0 %338
        %340 = vrot.lane.b32.xlu0 %v312, 16
        %v341 = vpop.permute.xlu0 %340
        %vm342 = vcmp.lt.s32.totalorder %v319, 16
        %v343 = vsel %vm342, %v339, %v341
        %v344 = vsel %vm342, %v341, %v339
        %s345 = scalar_lea.vmem %s0, 1
        %v346 = vld [vmem:[%s345] ss:$8 sm:$0x3]
        %v348 = vlaneseq
        %v349 = vshrl.u32 %v348, 7
        %v350 = vsub.s32 0, %v349
        %v351 = vrot.slane %v346, %v350
        %v352 = vlaneseq
        %v353 = vshrl.u32 %v352, 7
        %v354 = vsub.s32 1, %v353
        %v355 = vrot.slane %v346, %v354
        %v358 = vmul.f32 %v344, %v351
        %v359 = vmul.f32 %v343, %v355
        %s360 = scalar_lea.vmem %s2, 4
        %v361 = vld [vmem:[%s360] sm:$0xf]
        %vm362 = vcmask 31744
        %v364 = vsel %vm362, %v361, 0
        %vm366 = vcmask 1043456
        %v368 = vsel %vm366, %v358, 0
        %v371 = vsel %vm366, %v359, 0
        %373 = vmatprep.subr.mxu0 %v371
        %374 = vmatpush1.msra.mxu0 %v368
        %375 = vmatprep.subr.mxu0 0.0
        %376 = vmatpush1.msra.mxu0 0.0
        %377 = vmatprep.subr.mxu0 0.0
        %378 = vmatpush1.msra.mxu0 0.0
        %379 = vmatprep.subr.mxu0 0.0
        %380 = vmatpush1.msra.mxu0 0.0
        %381 = vmatprep.subr.mxu0 0.0
        %382 = vmatpush1.msra.mxu0 0.0
        %383 = vmatprep.subr.mxu0 0.0
        %384 = vmatpush1.msra.mxu0 0.0
        %385 = vmatprep.subr.mxu0 0.0
        %386 = vmatpush1.msra.mxu0 0.0
        %387 = vmatprep.subr.mxu0 0.0
        %388 = vmatpush1.msra.mxu0 0.0
        %389 = vmatprep.subr.mxu0 0.0
        %390 = vmatpush1.msra.mxu0 0.0
        %391 = vmatprep.subr.mxu0 0.0
        %392 = vmatpush1.msra.mxu0 0.0
        %393 = vmatprep.subr.mxu0 0.0
        %394 = vmatpush1.msra.mxu0 0.0
        %395 = vmatprep.subr.mxu0 0.0
        %396 = vmatpush1.msra.mxu0 0.0
        %397 = vmatprep.subr.mxu0 0.0
        %398 = vmatpush1.msra.mxu0 0.0
        %399 = vmatprep.subr.mxu0 0.0
        %400 = vmatpush1.msra.mxu0 0.0
        %401 = vmatprep.subr.mxu0 0.0
        %402 = vmatpush1.msra.mxu0 0.0
        %403 = vmatprep.subr.mxu0 0.0
        %404 = vmatpush1.msra.mxu0 0.0
        %405 = vmatprep.subr.mxu0 0.0
        %406 = vmatpush1.msra.mxu0 0.0
        %407 = vmatprep.subr.mxu0 0.0
        %408 = vmatpush1.msra.mxu0 0.0
        %409 = vmatprep.subr.mxu0 0.0
        %410 = vmatpush1.msra.mxu0 0.0
        %411 = vmatprep.subr.mxu0 0.0
        %412 = vmatpush1.msra.mxu0 0.0
        %413 = vmatprep.subr.mxu0 0.0
        %414 = vmatpush1.msra.mxu0 0.0
        %415 = vmatprep.subr.mxu0 0.0
        %416 = vmatpush1.msra.mxu0 0.0
        %417 = vmatprep.subr.mxu0 0.0
        %418 = vmatpush1.msra.mxu0 0.0
        %419 = vmatprep.subr.mxu0 0.0
        %420 = vmatpush1.msra.mxu0 0.0
        %421 = vmatprep.subr.mxu0 0.0
        %422 = vmatpush1.msra.mxu0 0.0
        %423 = vmatprep.subr.mxu0 0.0
        %424 = vmatpush1.msra.mxu0 0.0
        %425 = vmatprep.subr.mxu0 0.0
        %426 = vmatpush1.msra.mxu0 0.0
        %427 = vmatprep.subr.mxu0 0.0
        %428 = vmatpush1.msra.mxu0 0.0
        %429 = vmatprep.subr.mxu0 0.0
        %430 = vmatpush1.msra.mxu0 0.0
        %431 = vmatprep.subr.mxu0 0.0
        %432 = vmatpush1.msra.mxu0 0.0
        %433 = vmatprep.subr.mxu0 0.0
        %434 = vmatpush1.msra.mxu0 0.0
        %435 = vmatprep.subr.mxu0 0.0
        %436 = vmatpush1.msra.mxu0 0.0
        %437 = vmatprep.mubr.f32.mxu0 0.0
        %438 = vmatmul.mubr.f32.gmra.mrb[0].mxu0 %v364
        %v439 = vpop.f32.mrb[0].mxu0
        %v440 = vadd.f32 0.0, %v439
        %v441 = vpop.f32.mrb[0].mxu0
        %v442 = vadd.f32 0.0, %v441
        %443 = vdwg.mxu0
        %v445 = vsel %vm362, %v337, 0
        %v448 = vsel %vm366, %v335, 0
        %v451 = vsel %vm366, %v336, 0
        %453 = vmatprep.subr.mxu0 %v451
        %454 = vmatpush1.msra.mxu0 %v448
        %455 = vmatprep.subr.mxu0 0.0
        %456 = vmatpush1.msra.mxu0 0.0
        %457 = vmatprep.subr.mxu0 0.0
        %458 = vmatpush1.msra.mxu0 0.0
        %459 = vmatprep.subr.mxu0 0.0
        %460 = vmatpush1.msra.mxu0 0.0
        %461 = vmatprep.subr.mxu0 0.0
        %462 = vmatpush1.msra.mxu0 0.0
        %463 = vmatprep.subr.mxu0 0.0
        %464 = vmatpush1.msra.mxu0 0.0
        %465 = vmatprep.subr.mxu0 0.0
        %466 = vmatpush1.msra.mxu0 0.0
        %467 = vmatprep.subr.mxu0 0.0
        %468 = vmatpush1.msra.mxu0 0.0
        %469 = vmatprep.subr.mxu0 0.0
        %470 = vmatpush1.msra.mxu0 0.0
        %471 = vmatprep.subr.mxu0 0.0
        %472 = vmatpush1.msra.mxu0 0.0
        %473 = vmatprep.subr.mxu0 0.0
        %474 = vmatpush1.msra.mxu0 0.0
        %475 = vmatprep.subr.mxu0 0.0
        %476 = vmatpush1.msra.mxu0 0.0
        %477 = vmatprep.subr.mxu0 0.0
        %478 = vmatpush1.msra.mxu0 0.0
        %479 = vmatprep.subr.mxu0 0.0
        %480 = vmatpush1.msra.mxu0 0.0
        %481 = vmatprep.subr.mxu0 0.0
        %482 = vmatpush1.msra.mxu0 0.0
        %483 = vmatprep.subr.mxu0 0.0
        %484 = vmatpush1.msra.mxu0 0.0
        %485 = vmatprep.subr.mxu0 0.0
        %486 = vmatpush1.msra.mxu0 0.0
        %487 = vmatprep.subr.mxu0 0.0
        %488 = vmatpush1.msra.mxu0 0.0
        %489 = vmatprep.subr.mxu0 0.0
        %490 = vmatpush1.msra.mxu0 0.0
        %491 = vmatprep.subr.mxu0 0.0
        %492 = vmatpush1.msra.mxu0 0.0
        %493 = vmatprep.subr.mxu0 0.0
        %494 = vmatpush1.msra.mxu0 0.0
        %495 = vmatprep.subr.mxu0 0.0
        %496 = vmatpush1.msra.mxu0 0.0
        %497 = vmatprep.subr.mxu0 0.0
        %498 = vmatpush1.msra.mxu0 0.0
        %499 = vmatprep.subr.mxu0 0.0
        %500 = vmatpush1.msra.mxu0 0.0
        %501 = vmatprep.subr.mxu0 0.0
        %502 = vmatpush1.msra.mxu0 0.0
        %503 = vmatprep.subr.mxu0 0.0
        %504 = vmatpush1.msra.mxu0 0.0
        %505 = vmatprep.subr.mxu0 0.0
        %506 = vmatpush1.msra.mxu0 0.0
        %507 = vmatprep.subr.mxu0 0.0
        %508 = vmatpush1.msra.mxu0 0.0
        %509 = vmatprep.subr.mxu0 0.0
        %510 = vmatpush1.msra.mxu0 0.0
        %511 = vmatprep.subr.mxu0 0.0
        %512 = vmatpush1.msra.mxu0 0.0
        %513 = vmatprep.subr.mxu0 0.0
        %514 = vmatpush1.msra.mxu0 0.0
        %515 = vmatprep.subr.mxu0 0.0
        %516 = vmatpush1.msra.mxu0 0.0
        %517 = vmatprep.mubr.f32.mxu0 0.0
        %518 = vmatmul.mubr.f32.gmra.mrb[0].mxu0 %v445
        %v519 = vpop.f32.mrb[0].mxu0
        %v520 = vadd.f32 %v440, %v519
        %v521 = vpop.f32.mrb[0].mxu0
        %v522 = vadd.f32 %v442, %v521
        %523 = vdwg.mxu0
        %524 = vrot.lane.b32.xlu0 %v310, 15
        %v525 = vpop.permute.xlu0 %524
        %526 = vrot.lane.b32.xlu0 %v312, 15
        %v527 = vpop.permute.xlu0 %526
        %vm528 = vcmp.lt.s32.totalorder %v319, 15
        %v529 = vsel %vm528, %v525, %v527
        %v530 = vsel %vm528, %v527, %v525
        %s531 = scalar_lea.vmem %s0, 2
        %v532 = vld [vmem:[%s531] ss:$8 sm:$0x3]
        %v534 = vlaneseq
        %v535 = vshrl.u32 %v534, 7
        %v536 = vsub.s32 0, %v535
        %v537 = vrot.slane %v532, %v536
        %v538 = vlaneseq
        %v539 = vshrl.u32 %v538, 7
        %v540 = vsub.s32 1, %v539
        %v541 = vrot.slane %v532, %v540
        %v544 = vmul.f32 %v530, %v537
        %v545 = vmul.f32 %v529, %v541
        %s546 = scalar_lea.vmem %s2, 8
        %v547 = vld [vmem:[%s546] sm:$0xf]
        %v549 = vsel %vm362, %v547, 0
        %v552 = vsel %vm366, %v544, 0
        %v555 = vsel %vm366, %v545, 0
        %557 = vmatprep.subr.mxu0 %v555
        %558 = vmatpush1.msra.mxu0 %v552
        %559 = vmatprep.subr.mxu0 0.0
        %560 = vmatpush1.msra.mxu0 0.0
        %561 = vmatprep.subr.mxu0 0.0
        %562 = vmatpush1.msra.mxu0 0.0
        %563 = vmatprep.subr.mxu0 0.0
        %564 = vmatpush1.msra.mxu0 0.0
        %565 = vmatprep.subr.mxu0 0.0
        %566 = vmatpush1.msra.mxu0 0.0
        %567 = vmatprep.subr.mxu0 0.0
        %568 = vmatpush1.msra.mxu0 0.0
        %569 = vmatprep.subr.mxu0 0.0
        %570 = vmatpush1.msra.mxu0 0.0
        %571 = vmatprep.subr.mxu0 0.0
        %572 = vmatpush1.msra.mxu0 0.0
        %573 = vmatprep.subr.mxu0 0.0
        %574 = vmatpush1.msra.mxu0 0.0
        %575 = vmatprep.subr.mxu0 0.0
        %576 = vmatpush1.msra.mxu0 0.0
        %577 = vmatprep.subr.mxu0 0.0
        %578 = vmatpush1.msra.mxu0 0.0
        %579 = vmatprep.subr.mxu0 0.0
        %580 = vmatpush1.msra.mxu0 0.0
        %581 = vmatprep.subr.mxu0 0.0
        %582 = vmatpush1.msra.mxu0 0.0
        %583 = vmatprep.subr.mxu0 0.0
        %584 = vmatpush1.msra.mxu0 0.0
        %585 = vmatprep.subr.mxu0 0.0
        %586 = vmatpush1.msra.mxu0 0.0
        %587 = vmatprep.subr.mxu0 0.0
        %588 = vmatpush1.msra.mxu0 0.0
        %589 = vmatprep.subr.mxu0 0.0
        %590 = vmatpush1.msra.mxu0 0.0
        %591 = vmatprep.subr.mxu0 0.0
        %592 = vmatpush1.msra.mxu0 0.0
        %593 = vmatprep.subr.mxu0 0.0
        %594 = vmatpush1.msra.mxu0 0.0
        %595 = vmatprep.subr.mxu0 0.0
        %596 = vmatpush1.msra.mxu0 0.0
        %597 = vmatprep.subr.mxu0 0.0
        %598 = vmatpush1.msra.mxu0 0.0
        %599 = vmatprep.subr.mxu0 0.0
        %600 = vmatpush1.msra.mxu0 0.0
        %601 = vmatprep.subr.mxu0 0.0
        %602 = vmatpush1.msra.mxu0 0.0
        %603 = vmatprep.subr.mxu0 0.0
        %604 = vmatpush1.msra.mxu0 0.0
        %605 = vmatprep.subr.mxu0 0.0
        %606 = vmatpush1.msra.mxu0 0.0
        %607 = vmatprep.subr.mxu0 0.0
        %608 = vmatpush1.msra.mxu0 0.0
        %609 = vmatprep.subr.mxu0 0.0
        %610 = vmatpush1.msra.mxu0 0.0
        %611 = vmatprep.subr.mxu0 0.0
        %612 = vmatpush1.msra.mxu0 0.0
        %613 = vmatprep.subr.mxu0 0.0
        %614 = vmatpush1.msra.mxu0 0.0
        %615 = vmatprep.subr.mxu0 0.0
        %616 = vmatpush1.msra.mxu0 0.0
        %617 = vmatprep.subr.mxu0 0.0
        %618 = vmatpush1.msra.mxu0 0.0
        %619 = vmatprep.subr.mxu0 0.0
        %620 = vmatpush1.msra.mxu0 0.0
        %621 = vmatprep.mubr.f32.mxu0 0.0
        %622 = vmatmul.mubr.f32.gmra.mrb[0].mxu0 %v549
        %v623 = vpop.f32.mrb[0].mxu0
        %v624 = vadd.f32 0.0, %v623
        %v625 = vpop.f32.mrb[0].mxu0
        %v626 = vadd.f32 0.0, %v625
        %627 = vdwg.mxu0
        %v628 = vadd.f32 %v520, %v624
        %v629 = vadd.f32 %v522, %v626
        %630 = vrot.lane.b32.xlu0 %v310, 1
        %v631 = vpop.permute.xlu0 %630
        %632 = vrot.lane.b32.xlu0 %v312, 1
        %v633 = vpop.permute.xlu0 %632
        %vm634 = vcmp.lt.s32.totalorder %v319, 1
        %v635 = vsel %vm634, %v631, %v633
        %v636 = vsel %vm634, %v633, %v631
        %s637 = scalar_lea.vmem %s0, 3
        %v638 = vld [vmem:[%s637] ss:$8 sm:$0x3]
        %v640 = vlaneseq
        %v641 = vshrl.u32 %v640, 7
        %v642 = vsub.s32 0, %v641
        %v643 = vrot.slane %v638, %v642
        %v644 = vlaneseq
        %v645 = vshrl.u32 %v644, 7
        %v646 = vsub.s32 1, %v645
        %v647 = vrot.slane %v638, %v646
        %v650 = vmul.f32 %v636, %v643
        %v651 = vmul.f32 %v635, %v647
        %s652 = scalar_lea.vmem %s2, 12
        %v653 = vld [vmem:[%s652] sm:$0xf]
        %v655 = vsel %vm362, %v653, 0
        %v658 = vsel %vm366, %v650, 0
        %v661 = vsel %vm366, %v651, 0
        %663 = vmatprep.subr.mxu0 %v661
        %664 = vmatpush1.msra.mxu0 %v658
        %665 = vmatprep.subr.mxu0 0.0
        %666 = vmatpush1.msra.mxu0 0.0
        %667 = vmatprep.subr.mxu0 0.0
        %668 = vmatpush1.msra.mxu0 0.0
        %669 = vmatprep.subr.mxu0 0.0
        %670 = vmatpush1.msra.mxu0 0.0
        %671 = vmatprep.subr.mxu0 0.0
        %672 = vmatpush1.msra.mxu0 0.0
        %673 = vmatprep.subr.mxu0 0.0
        %674 = vmatpush1.msra.mxu0 0.0
        %675 = vmatprep.subr.mxu0 0.0
        %676 = vmatpush1.msra.mxu0 0.0
        %677 = vmatprep.subr.mxu0 0.0
        %678 = vmatpush1.msra.mxu0 0.0
        %679 = vmatprep.subr.mxu0 0.0
        %680 = vmatpush1.msra.mxu0 0.0
        %681 = vmatprep.subr.mxu0 0.0
        %682 = vmatpush1.msra.mxu0 0.0
        %683 = vmatprep.subr.mxu0 0.0
        %684 = vmatpush1.msra.mxu0 0.0
        %685 = vmatprep.subr.mxu0 0.0
        %686 = vmatpush1.msra.mxu0 0.0
        %687 = vmatprep.subr.mxu0 0.0
        %688 = vmatpush1.msra.mxu0 0.0
        %689 = vmatprep.subr.mxu0 0.0
        %690 = vmatpush1.msra.mxu0 0.0
        %691 = vmatprep.subr.mxu0 0.0
        %692 = vmatpush1.msra.mxu0 0.0
        %693 = vmatprep.subr.mxu0 0.0
        %694 = vmatpush1.msra.mxu0 0.0
        %695 = vmatprep.subr.mxu0 0.0
        %696 = vmatpush1.msra.mxu0 0.0
        %697 = vmatprep.subr.mxu0 0.0
        %698 = vmatpush1.msra.mxu0 0.0
        %699 = vmatprep.subr.mxu0 0.0
        %700 = vmatpush1.msra.mxu0 0.0
        %701 = vmatprep.subr.mxu0 0.0
        %702 = vmatpush1.msra.mxu0 0.0
        %703 = vmatprep.subr.mxu0 0.0
        %704 = vmatpush1.msra.mxu0 0.0
        %705 = vmatprep.subr.mxu0 0.0
        %706 = vmatpush1.msra.mxu0 0.0
        %707 = vmatprep.subr.mxu0 0.0
        %708 = vmatpush1.msra.mxu0 0.0
        %709 = vmatprep.subr.mxu0 0.0
        %710 = vmatpush1.msra.mxu0 0.0
        %711 = vmatprep.subr.mxu0 0.0
        %712 = vmatpush1.msra.mxu0 0.0
        %713 = vmatprep.subr.mxu0 0.0
        %714 = vmatpush1.msra.mxu0 0.0
        %715 = vmatprep.subr.mxu0 0.0
        %716 = vmatpush1.msra.mxu0 0.0
        %717 = vmatprep.subr.mxu0 0.0
        %718 = vmatpush1.msra.mxu0 0.0
        %719 = vmatprep.subr.mxu0 0.0
        %720 = vmatpush1.msra.mxu0 0.0
        %721 = vmatprep.subr.mxu0 0.0
        %722 = vmatpush1.msra.mxu0 0.0
        %723 = vmatprep.subr.mxu0 0.0
        %724 = vmatpush1.msra.mxu0 0.0
        %725 = vmatprep.subr.mxu0 0.0
        %726 = vmatpush1.msra.mxu0 0.0
        %727 = vmatprep.mubr.f32.mxu0 0.0
        %728 = vmatmul.mubr.f32.gmra.mrb[0].mxu0 %v655
        %v729 = vpop.f32.mrb[0].mxu0
        %v730 = vadd.f32 0.0, %v729
        %v731 = vpop.f32.mrb[0].mxu0
        %v732 = vadd.f32 0.0, %v731
        %733 = vdwg.mxu0
        %v734 = vadd.f32 %v628, %v730
        %v735 = vadd.f32 %v629, %v732
        %s736 = scalar_lea.vmem %s0, 4
        %v737 = vld [vmem:[%s736] ss:$8 sm:$0x3]
        %v739 = vlaneseq
        %v740 = vshrl.u32 %v739, 7
        %v741 = vsub.s32 0, %v740
        %v742 = vrot.slane %v737, %v741
        %v743 = vlaneseq
        %v744 = vshrl.u32 %v743, 7
        %v745 = vsub.s32 1, %v744
        %v746 = vrot.slane %v737, %v745
        %v747 = vcombine.low %v742, %v746
        %v749 = vmul.f32 %v310, %v747
        %s750 = scalar_lea.vmem %s2, 16
        %v751 = vld [vmem:[%s750] sm:$0xf]
        %v753 = vcombine.high %v749, %v749
        %v755 = vsel %vm362, %v751, 0
        %v757 = vsel %vm366, %v749, 0
        %v759 = vsel %vm366, %v753, 0
        %761 = vmatprep.subr.mxu0 %v759
        %762 = vmatpush1.msra.mxu0 %v757
        %763 = vmatprep.subr.mxu0 0.0
        %764 = vmatpush1.msra.mxu0 0.0
        %765 = vmatprep.subr.mxu0 0.0
        %766 = vmatpush1.msra.mxu0 0.0
        %767 = vmatprep.subr.mxu0 0.0
        %768 = vmatpush1.msra.mxu0 0.0
        %769 = vmatprep.subr.mxu0 0.0
        %770 = vmatpush1.msra.mxu0 0.0
        %771 = vmatprep.subr.mxu0 0.0
        %772 = vmatpush1.msra.mxu0 0.0
        %773 = vmatprep.subr.mxu0 0.0
        %774 = vmatpush1.msra.mxu0 0.0
        %775 = vmatprep.subr.mxu0 0.0
        %776 = vmatpush1.msra.mxu0 0.0
        %777 = vmatprep.subr.mxu0 0.0
        %778 = vmatpush1.msra.mxu0 0.0
        %779 = vmatprep.subr.mxu0 0.0
        %780 = vmatpush1.msra.mxu0 0.0
        %781 = vmatprep.subr.mxu0 0.0
        %782 = vmatpush1.msra.mxu0 0.0
        %783 = vmatprep.subr.mxu0 0.0
        %784 = vmatpush1.msra.mxu0 0.0
        %785 = vmatprep.subr.mxu0 0.0
        %786 = vmatpush1.msra.mxu0 0.0
        %787 = vmatprep.subr.mxu0 0.0
        %788 = vmatpush1.msra.mxu0 0.0
        %789 = vmatprep.subr.mxu0 0.0
        %790 = vmatpush1.msra.mxu0 0.0
        %791 = vmatprep.subr.mxu0 0.0
        %792 = vmatpush1.msra.mxu0 0.0
        %793 = vmatprep.subr.mxu0 0.0
        %794 = vmatpush1.msra.mxu0 0.0
        %795 = vmatprep.subr.mxu0 0.0
        %796 = vmatpush1.msra.mxu0 0.0
        %797 = vmatprep.subr.mxu0 0.0
        %798 = vmatpush1.msra.mxu0 0.0
        %799 = vmatprep.subr.mxu0 0.0
        %800 = vmatpush1.msra.mxu0 0.0
        %801 = vmatprep.subr.mxu0 0.0
        %802 = vmatpush1.msra.mxu0 0.0
        %803 = vmatprep.subr.mxu0 0.0
        %804 = vmatpush1.msra.mxu0 0.0
        %805 = vmatprep.subr.mxu0 0.0
        %806 = vmatpush1.msra.mxu0 0.0
        %807 = vmatprep.subr.mxu0 0.0
        %808 = vmatpush1.msra.mxu0 0.0
        %809 = vmatprep.subr.mxu0 0.0
        %810 = vmatpush1.msra.mxu0 0.0
        %811 = vmatprep.subr.mxu0 0.0
        %812 = vmatpush1.msra.mxu0 0.0
        %813 = vmatprep.subr.mxu0 0.0
        %814 = vmatpush1.msra.mxu0 0.0
        %815 = vmatprep.subr.mxu0 0.0
        %816 = vmatpush1.msra.mxu0 0.0
        %817 = vmatprep.subr.mxu0 0.0
        %818 = vmatpush1.msra.mxu0 0.0
        %819 = vmatprep.subr.mxu0 0.0
        %820 = vmatpush1.msra.mxu0 0.0
        %821 = vmatprep.subr.mxu0 0.0
        %822 = vmatpush1.msra.mxu0 0.0
        %823 = vmatprep.subr.mxu0 0.0
        %824 = vmatpush1.msra.mxu0 0.0
        %825 = vmatprep.mubr.f32.mxu0 0.0
        %826 = vmatmul.mubr.f32.gmra.mrb[0].mxu0 %v755
        %v827 = vpop.f32.mrb[0].mxu0
        %v828 = vadd.f32 0.0, %v827
        %v829 = vpop.f32.mrb[0].mxu0
        %v830 = vadd.f32 0.0, %v829
        %831 = vdwg.mxu0
        %v832 = vadd.f32 %v734, %v828
        %v833 = vadd.f32 %v735, %v830
        %834 = vrot.lane.b32.xlu0 %v310, 127
        %v835 = vpop.permute.xlu0 %834
        %836 = vrot.lane.b32.xlu0 %v312, 127
        %v837 = vpop.permute.xlu0 %836
        %vm838 = vcmp.lt.s32.totalorder %v319, 127
        %v839 = vsel %vm838, %v835, %v837
        %v840 = vsel %vm838, %v837, %v835
        %s841 = scalar_lea.vmem %s0, 5
        %v842 = vld [vmem:[%s841] ss:$8 sm:$0x3]
        %v844 = vlaneseq
        %v845 = vshrl.u32 %v844, 7
        %v846 = vsub.s32 0, %v845
        %v847 = vrot.slane %v842, %v846
        %v848 = vlaneseq
        %v849 = vshrl.u32 %v848, 7
        %v850 = vsub.s32 1, %v849
        %v851 = vrot.slane %v842, %v850
        %v854 = vmul.f32 %v839, %v847
        %v855 = vmul.f32 %v840, %v851
        %s856 = scalar_lea.vmem %s2, 20
        %v857 = vld [vmem:[%s856] sm:$0xf]
        %v859 = vsel %vm362, %v857, 0
        %v862 = vsel %vm366, %v854, 0
        %v865 = vsel %vm366, %v855, 0
        %867 = vmatprep.subr.mxu0 %v865
        %868 = vmatpush1.msra.mxu0 %v862
        %869 = vmatprep.subr.mxu0 0.0
        %870 = vmatpush1.msra.mxu0 0.0
        %871 = vmatprep.subr.mxu0 0.0
        %872 = vmatpush1.msra.mxu0 0.0
        %873 = vmatprep.subr.mxu0 0.0
        %874 = vmatpush1.msra.mxu0 0.0
        %875 = vmatprep.subr.mxu0 0.0
        %876 = vmatpush1.msra.mxu0 0.0
        %877 = vmatprep.subr.mxu0 0.0
        %878 = vmatpush1.msra.mxu0 0.0
        %879 = vmatprep.subr.mxu0 0.0
        %880 = vmatpush1.msra.mxu0 0.0
        %881 = vmatprep.subr.mxu0 0.0
        %882 = vmatpush1.msra.mxu0 0.0
        %883 = vmatprep.subr.mxu0 0.0
        %884 = vmatpush1.msra.mxu0 0.0
        %885 = vmatprep.subr.mxu0 0.0
        %886 = vmatpush1.msra.mxu0 0.0
        %887 = vmatprep.subr.mxu0 0.0
        %888 = vmatpush1.msra.mxu0 0.0
        %889 = vmatprep.subr.mxu0 0.0
        %890 = vmatpush1.msra.mxu0 0.0
        %891 = vmatprep.subr.mxu0 0.0
        %892 = vmatpush1.msra.mxu0 0.0
        %893 = vmatprep.subr.mxu0 0.0
        %894 = vmatpush1.msra.mxu0 0.0
        %895 = vmatprep.subr.mxu0 0.0
        %896 = vmatpush1.msra.mxu0 0.0
        %897 = vmatprep.subr.mxu0 0.0
        %898 = vmatpush1.msra.mxu0 0.0
        %899 = vmatprep.subr.mxu0 0.0
        %900 = vmatpush1.msra.mxu0 0.0
        %901 = vmatprep.subr.mxu0 0.0
        %902 = vmatpush1.msra.mxu0 0.0
        %903 = vmatprep.subr.mxu0 0.0
        %904 = vmatpush1.msra.mxu0 0.0
        %905 = vmatprep.subr.mxu0 0.0
        %906 = vmatpush1.msra.mxu0 0.0
        %907 = vmatprep.subr.mxu0 0.0
        %908 = vmatpush1.msra.mxu0 0.0
        %909 = vmatprep.subr.mxu0 0.0
        %910 = vmatpush1.msra.mxu0 0.0
        %911 = vmatprep.subr.mxu0 0.0
        %912 = vmatpush1.msra.mxu0 0.0
        %913 = vmatprep.subr.mxu0 0.0
        %914 = vmatpush1.msra.mxu0 0.0
        %915 = vmatprep.subr.mxu0 0.0
        %916 = vmatpush1.msra.mxu0 0.0
        %917 = vmatprep.subr.mxu0 0.0
        %918 = vmatpush1.msra.mxu0 0.0
        %919 = vmatprep.subr.mxu0 0.0
        %920 = vmatpush1.msra.mxu0 0.0
        %921 = vmatprep.subr.mxu0 0.0
        %922 = vmatpush1.msra.mxu0 0.0
        %923 = vmatprep.subr.mxu0 0.0
        %924 = vmatpush1.msra.mxu0 0.0
        %925 = vmatprep.subr.mxu0 0.0
        %926 = vmatpush1.msra.mxu0 0.0
        %927 = vmatprep.subr.mxu0 0.0
        %928 = vmatpush1.msra.mxu0 0.0
        %929 = vmatprep.subr.mxu0 0.0
        %930 = vmatpush1.msra.mxu0 0.0
        %931 = vmatprep.mubr.f32.mxu0 0.0
        %932 = vmatmul.mubr.f32.gmra.mrb[0].mxu0 %v859
        %v933 = vpop.f32.mrb[0].mxu0
        %v934 = vadd.f32 0.0, %v933
        %v935 = vpop.f32.mrb[0].mxu0
        %v936 = vadd.f32 0.0, %v935
        %937 = vdwg.mxu0
        %v938 = vadd.f32 %v832, %v934
        %v939 = vadd.f32 %v833, %v936
        %940 = vrot.lane.b32.xlu0 %v310, 113
        %v941 = vpop.permute.xlu0 %940
        %942 = vrot.lane.b32.xlu0 %v312, 113
        %v943 = vpop.permute.xlu0 %942
        %vm944 = vcmp.lt.s32.totalorder %v319, 113
        %v945 = vsel %vm944, %v941, %v943
        %v946 = vsel %vm944, %v943, %v941
        %s947 = scalar_lea.vmem %s0, 6
        %v948 = vld [vmem:[%s947] ss:$8 sm:$0x3]
        %v950 = vlaneseq
        %v951 = vshrl.u32 %v950, 7
        %v952 = vsub.s32 0, %v951
        %v953 = vrot.slane %v948, %v952
        %v954 = vlaneseq
        %v955 = vshrl.u32 %v954, 7
        %v956 = vsub.s32 1, %v955
        %v957 = vrot.slane %v948, %v956
        %v960 = vmul.f32 %v945, %v953
        %v961 = vmul.f32 %v946, %v957
        %s962 = scalar_lea.vmem %s2, 24
        %v963 = vld [vmem:[%s962] sm:$0xf]
        %v965 = vsel %vm362, %v963, 0
        %v968 = vsel %vm366, %v960, 0
        %v971 = vsel %vm366, %v961, 0
        %973 = vmatprep.subr.mxu0 %v971
        %974 = vmatpush1.msra.mxu0 %v968
        %975 = vmatprep.subr.mxu0 0.0
        %976 = vmatpush1.msra.mxu0 0.0
        %977 = vmatprep.subr.mxu0 0.0
        %978 = vmatpush1.msra.mxu0 0.0
        %979 = vmatprep.subr.mxu0 0.0
        %980 = vmatpush1.msra.mxu0 0.0
        %981 = vmatprep.subr.mxu0 0.0
        %982 = vmatpush1.msra.mxu0 0.0
        %983 = vmatprep.subr.mxu0 0.0
        %984 = vmatpush1.msra.mxu0 0.0
        %985 = vmatprep.subr.mxu0 0.0
        %986 = vmatpush1.msra.mxu0 0.0
        %987 = vmatprep.subr.mxu0 0.0
        %988 = vmatpush1.msra.mxu0 0.0
        %989 = vmatprep.subr.mxu0 0.0
        %990 = vmatpush1.msra.mxu0 0.0
        %991 = vmatprep.subr.mxu0 0.0
        %992 = vmatpush1.msra.mxu0 0.0
        %993 = vmatprep.subr.mxu0 0.0
        %994 = vmatpush1.msra.mxu0 0.0
        %995 = vmatprep.subr.mxu0 0.0
        %996 = vmatpush1.msra.mxu0 0.0
        %997 = vmatprep.subr.mxu0 0.0
        %998 = vmatpush1.msra.mxu0 0.0
        %999 = vmatprep.subr.mxu0 0.0
        %1000 = vmatpush1.msra.mxu0 0.0
        %1001 = vmatprep.subr.mxu0 0.0
        %1002 = vmatpush1.msra.mxu0 0.0
        %1003 = vmatprep.subr.mxu0 0.0
        %1004 = vmatpush1.msra.mxu0 0.0
        %1005 = vmatprep.subr.mxu0 0.0
        %1006 = vmatpush1.msra.mxu0 0.0
        %1007 = vmatprep.subr.mxu0 0.0
        %1008 = vmatpush1.msra.mxu0 0.0
        %1009 = vmatprep.subr.mxu0 0.0
        %1010 = vmatpush1.msra.mxu0 0.0
        %1011 = vmatprep.subr.mxu0 0.0
        %1012 = vmatpush1.msra.mxu0 0.0
        %1013 = vmatprep.subr.mxu0 0.0
        %1014 = vmatpush1.msra.mxu0 0.0
        %1015 = vmatprep.subr.mxu0 0.0
        %1016 = vmatpush1.msra.mxu0 0.0
        %1017 = vmatprep.subr.mxu0 0.0
        %1018 = vmatpush1.msra.mxu0 0.0
        %1019 = vmatprep.subr.mxu0 0.0
        %1020 = vmatpush1.msra.mxu0 0.0
        %1021 = vmatprep.subr.mxu0 0.0
        %1022 = vmatpush1.msra.mxu0 0.0
        %1023 = vmatprep.subr.mxu0 0.0
        %1024 = vmatpush1.msra.mxu0 0.0
        %1025 = vmatprep.subr.mxu0 0.0
        %1026 = vmatpush1.msra.mxu0 0.0
        %1027 = vmatprep.subr.mxu0 0.0
        %1028 = vmatpush1.msra.mxu0 0.0
        %1029 = vmatprep.subr.mxu0 0.0
        %1030 = vmatpush1.msra.mxu0 0.0
        %1031 = vmatprep.subr.mxu0 0.0
        %1032 = vmatpush1.msra.mxu0 0.0
        %1033 = vmatprep.subr.mxu0 0.0
        %1034 = vmatpush1.msra.mxu0 0.0
        %1035 = vmatprep.subr.mxu0 0.0
        %1036 = vmatpush1.msra.mxu0 0.0
        %1037 = vmatprep.mubr.f32.mxu0 0.0
        %1038 = vmatmul.mubr.f32.gmra.mrb[0].mxu0 %v965
        %v1039 = vpop.f32.mrb[0].mxu0
        %v1040 = vadd.f32 0.0, %v1039
        %v1041 = vpop.f32.mrb[0].mxu0
        %v1042 = vadd.f32 0.0, %v1041
        %1043 = vdwg.mxu0
        %v1044 = vadd.f32 %v938, %v1040
        %v1045 = vadd.f32 %v939, %v1042
        %1046 = vrot.lane.b32.xlu0 %v310, 112
        %v1047 = vpop.permute.xlu0 %1046
        %1048 = vrot.lane.b32.xlu0 %v312, 112
        %v1049 = vpop.permute.xlu0 %1048
        %vm1050 = vcmp.lt.s32.totalorder %v319, 112
        %v1051 = vsel %vm1050, %v1047, %v1049
        %v1052 = vsel %vm1050, %v1049, %v1047
        %s1053 = scalar_lea.vmem %s0, 7
        %v1054 = vld [vmem:[%s1053] ss:$8 sm:$0x3]
        %v1056 = vlaneseq
        %v1057 = vshrl.u32 %v1056, 7
        %v1058 = vsub.s32 0, %v1057
        %v1059 = vrot.slane %v1054, %v1058
        %v1060 = vlaneseq
        %v1061 = vshrl.u32 %v1060, 7
        %v1062 = vsub.s32 1, %v1061
        %v1063 = vrot.slane %v1054, %v1062
        %v1066 = vmul.f32 %v1051, %v1059
        %v1067 = vmul.f32 %v1052, %v1063
        %s1068 = scalar_lea.vmem %s2, 28
        %v1069 = vld [vmem:[%s1068] sm:$0xf]
        %v1071 = vsel %vm362, %v1069, 0
        %v1074 = vsel %vm366, %v1066, 0
        %v1077 = vsel %vm366, %v1067, 0
        %1079 = vmatprep.subr.mxu0 %v1077
        %1080 = vmatpush1.msra.mxu0 %v1074
        %1081 = vmatprep.subr.mxu0 0.0
        %1082 = vmatpush1.msra.mxu0 0.0
        %1083 = vmatprep.subr.mxu0 0.0
        %1084 = vmatpush1.msra.mxu0 0.0
        %1085 = vmatprep.subr.mxu0 0.0
        %1086 = vmatpush1.msra.mxu0 0.0
        %1087 = vmatprep.subr.mxu0 0.0
        %1088 = vmatpush1.msra.mxu0 0.0
        %1089 = vmatprep.subr.mxu0 0.0
        %1090 = vmatpush1.msra.mxu0 0.0
        %1091 = vmatprep.subr.mxu0 0.0
        %1092 = vmatpush1.msra.mxu0 0.0
        %1093 = vmatprep.subr.mxu0 0.0
        %1094 = vmatpush1.msra.mxu0 0.0
        %1095 = vmatprep.subr.mxu0 0.0
        %1096 = vmatpush1.msra.mxu0 0.0
        %1097 = vmatprep.subr.mxu0 0.0
        %1098 = vmatpush1.msra.mxu0 0.0
        %1099 = vmatprep.subr.mxu0 0.0
        %1100 = vmatpush1.msra.mxu0 0.0
        %1101 = vmatprep.subr.mxu0 0.0
        %1102 = vmatpush1.msra.mxu0 0.0
        %1103 = vmatprep.subr.mxu0 0.0
        %1104 = vmatpush1.msra.mxu0 0.0
        %1105 = vmatprep.subr.mxu0 0.0
        %1106 = vmatpush1.msra.mxu0 0.0
        %1107 = vmatprep.subr.mxu0 0.0
        %1108 = vmatpush1.msra.mxu0 0.0
        %1109 = vmatprep.subr.mxu0 0.0
        %1110 = vmatpush1.msra.mxu0 0.0
        %1111 = vmatprep.subr.mxu0 0.0
        %1112 = vmatpush1.msra.mxu0 0.0
        %1113 = vmatprep.subr.mxu0 0.0
        %1114 = vmatpush1.msra.mxu0 0.0
        %1115 = vmatprep.subr.mxu0 0.0
        %1116 = vmatpush1.msra.mxu0 0.0
        %1117 = vmatprep.subr.mxu0 0.0
        %1118 = vmatpush1.msra.mxu0 0.0
        %1119 = vmatprep.subr.mxu0 0.0
        %1120 = vmatpush1.msra.mxu0 0.0
        %1121 = vmatprep.subr.mxu0 0.0
        %1122 = vmatpush1.msra.mxu0 0.0
        %1123 = vmatprep.subr.mxu0 0.0
        %1124 = vmatpush1.msra.mxu0 0.0
        %1125 = vmatprep.subr.mxu0 0.0
        %1126 = vmatpush1.msra.mxu0 0.0
        %1127 = vmatprep.subr.mxu0 0.0
        %1128 = vmatpush1.msra.mxu0 0.0
        %1129 = vmatprep.subr.mxu0 0.0
        %1130 = vmatpush1.msra.mxu0 0.0
        %1131 = vmatprep.subr.mxu0 0.0
        %1132 = vmatpush1.msra.mxu0 0.0
        %1133 = vmatprep.subr.mxu0 0.0
        %1134 = vmatpush1.msra.mxu0 0.0
        %1135 = vmatprep.subr.mxu0 0.0
        %1136 = vmatpush1.msra.mxu0 0.0
        %1137 = vmatprep.subr.mxu0 0.0
        %1138 = vmatpush1.msra.mxu0 0.0
        %1139 = vmatprep.subr.mxu0 0.0
        %1140 = vmatpush1.msra.mxu0 0.0
        %1141 = vmatprep.subr.mxu0 0.0
        %1142 = vmatpush1.msra.mxu0 0.0
        %1143 = vmatprep.mubr.f32.mxu0 0.0
        %1144 = vmatmul.mubr.f32.gmra.mrb[0].mxu0 %v1071
        %v1145 = vpop.f32.mrb[0].mxu0
        %v1146 = vadd.f32 0.0, %v1145
        %v1147 = vpop.f32.mrb[0].mxu0
        %v1148 = vadd.f32 0.0, %v1147
        %1149 = vdwg.mxu0
        %v1150 = vadd.f32 %v1044, %v1146
        %v1151 = vadd.f32 %v1045, %v1148
        %1152 = vrot.lane.b32.xlu0 %v310, 111
        %v1153 = vpop.permute.xlu0 %1152
        %1154 = vrot.lane.b32.xlu0 %v312, 111
        %v1155 = vpop.permute.xlu0 %1154
        %vm1156 = vcmp.lt.s32.totalorder %v319, 111
        %v1157 = vsel %vm1156, %v1153, %v1155
        %v1158 = vsel %vm1156, %v1155, %v1153
        %s1159 = scalar_lea.vmem %s0, 16
        %v1160 = vld [vmem:[%s1159] ss:$8 sm:$0x3]
        %v1162 = vlaneseq
        %v1163 = vshrl.u32 %v1162, 7
        %v1164 = vsub.s32 0, %v1163
        %v1165 = vrot.slane %v1160, %v1164
        %v1166 = vlaneseq
        %v1167 = vshrl.u32 %v1166, 7
        %v1168 = vsub.s32 1, %v1167
        %v1169 = vrot.slane %v1160, %v1168
        %v1172 = vmul.f32 %v1157, %v1165
        %v1173 = vmul.f32 %v1158, %v1169
        %s1174 = scalar_lea.vmem %s2, 32
        %v1175 = vld [vmem:[%s1174] sm:$0xf]
        %v1177 = vsel %vm362, %v1175, 0
        %v1180 = vsel %vm366, %v1172, 0
        %v1183 = vsel %vm366, %v1173, 0
        %1185 = vmatprep.subr.mxu0 %v1183
        %1186 = vmatpush1.msra.mxu0 %v1180
        %1187 = vmatprep.subr.mxu0 0.0
        %1188 = vmatpush1.msra.mxu0 0.0
        %1189 = vmatprep.subr.mxu0 0.0
        %1190 = vmatpush1.msra.mxu0 0.0
        %1191 = vmatprep.subr.mxu0 0.0
        %1192 = vmatpush1.msra.mxu0 0.0
        %1193 = vmatprep.subr.mxu0 0.0
        %1194 = vmatpush1.msra.mxu0 0.0
        %1195 = vmatprep.subr.mxu0 0.0
        %1196 = vmatpush1.msra.mxu0 0.0
        %1197 = vmatprep.subr.mxu0 0.0
        %1198 = vmatpush1.msra.mxu0 0.0
        %1199 = vmatprep.subr.mxu0 0.0
        %1200 = vmatpush1.msra.mxu0 0.0
        %1201 = vmatprep.subr.mxu0 0.0
        %1202 = vmatpush1.msra.mxu0 0.0
        %1203 = vmatprep.subr.mxu0 0.0
        %1204 = vmatpush1.msra.mxu0 0.0
        %1205 = vmatprep.subr.mxu0 0.0
        %1206 = vmatpush1.msra.mxu0 0.0
        %1207 = vmatprep.subr.mxu0 0.0
        %1208 = vmatpush1.msra.mxu0 0.0
        %1209 = vmatprep.subr.mxu0 0.0
        %1210 = vmatpush1.msra.mxu0 0.0
        %1211 = vmatprep.subr.mxu0 0.0
        %1212 = vmatpush1.msra.mxu0 0.0
        %1213 = vmatprep.subr.mxu0 0.0
        %1214 = vmatpush1.msra.mxu0 0.0
        %1215 = vmatprep.subr.mxu0 0.0
        %1216 = vmatpush1.msra.mxu0 0.0
        %1217 = vmatprep.subr.mxu0 0.0
        %1218 = vmatpush1.msra.mxu0 0.0
        %1219 = vmatprep.subr.mxu0 0.0
        %1220 = vmatpush1.msra.mxu0 0.0
        %1221 = vmatprep.subr.mxu0 0.0
        %1222 = vmatpush1.msra.mxu0 0.0
        %1223 = vmatprep.subr.mxu0 0.0
        %1224 = vmatpush1.msra.mxu0 0.0
        %1225 = vmatprep.subr.mxu0 0.0
        %1226 = vmatpush1.msra.mxu0 0.0
        %1227 = vmatprep.subr.mxu0 0.0
        %1228 = vmatpush1.msra.mxu0 0.0
        %1229 = vmatprep.subr.mxu0 0.0
        %1230 = vmatpush1.msra.mxu0 0.0
        %1231 = vmatprep.subr.mxu0 0.0
        %1232 = vmatpush1.msra.mxu0 0.0
        %1233 = vmatprep.subr.mxu0 0.0
        %1234 = vmatpush1.msra.mxu0 0.0
        %1235 = vmatprep.subr.mxu0 0.0
        %1236 = vmatpush1.msra.mxu0 0.0
        %1237 = vmatprep.subr.mxu0 0.0
        %1238 = vmatpush1.msra.mxu0 0.0
        %1239 = vmatprep.subr.mxu0 0.0
        %1240 = vmatpush1.msra.mxu0 0.0
        %1241 = vmatprep.subr.mxu0 0.0
        %1242 = vmatpush1.msra.mxu0 0.0
        %1243 = vmatprep.subr.mxu0 0.0
        %1244 = vmatpush1.msra.mxu0 0.0
        %1245 = vmatprep.subr.mxu0 0.0
        %1246 = vmatpush1.msra.mxu0 0.0
        %1247 = vmatprep.subr.mxu0 0.0
        %1248 = vmatpush1.msra.mxu0 0.0
        %1249 = vmatprep.mubr.f32.mxu0 0.0
        %1250 = vmatmul.mubr.f32.gmra.mrb[0].mxu0 %v1177
        %v1251 = vpop.f32.mrb[0].mxu0
        %v1252 = vadd.f32 0.0, %v1251
        %v1253 = vpop.f32.mrb[0].mxu0
        %v1254 = vadd.f32 0.0, %v1253
        %1255 = vdwg.mxu0
        %v1256 = vadd.f32 %v1150, %v1252
        %v1257 = vadd.f32 %v1151, %v1254
        %v1258 = vld [vmem:[%s3] sm:$0xf]
        %1260 = vset.pattern.permute.xlu0 0
        %1261 = vperm.xlu0 %1260, %v1258
        %v1262 = vpop.permute.xlu0 %1261
        %v1264 = vadd.f32 %v1256, %v1262
        %v1265 = vadd.f32 %v1257, %v1262
        %v1266 = vmul.f32 %v1264, 0.2
        %v1267 = vmul.f32 %v1265, 0.2
        %v1268 = vmax.f32 %v1264, %v1266
        %v1269 = vmax.f32 %v1265, %v1267
        %v1272 = vrot.slane %v1268, 4
        %v1273 = vrot.slane %v1269, 4
        %1276 = vst [vmem:[%s298] sm:$0xf0] %v1272
        %1277 = vst [vmem:[%s298 + $0x8] sm:$0xf0] %v1273
        %v1278 = vld [vmem:[%s298] sm:$0xf0]
        %v1279 = vld [vmem:[%s298 + $0x8] sm:$0xf0]
        %v1282 = vrot.slane %v1278, 4
        %v1283 = vrot.slane %v1279, 4
        %1286 = vrot.lane.b32.xlu0 %v1282, 17
        %v1287 = vpop.permute.xlu0 %1286
        %1288 = vrot.lane.b32.xlu0 %v1283, 17
        %v1289 = vpop.permute.xlu0 %1288
        %v1290 = vsel %vm320, %v1287, %v1289
        %v1291 = vsel %vm320, %v1289, %v1287
        %v1292 = vld [vmem:[%s0] ss:$8 sm:$0x3]
        %v1294 = vlaneseq
        %v1295 = vshrl.u32 %v1294, 7
        %v1296 = vsub.s32 0, %v1295
        %v1297 = vrot.slane %v1292, %v1296
        %v1298 = vlaneseq
        %v1299 = vshrl.u32 %v1298, 7
        %v1300 = vsub.s32 1, %v1299
        %v1301 = vrot.slane %v1292, %v1300
        %v1304 = vmul.f32 %v1291, %v1297
        %v1305 = vmul.f32 %v1290, %v1301
        %v1306 = vld [vmem:[%s4] sm:$0xf]
        %1307 = vrot.lane.b32.xlu0 %v1282, 16
        %v1308 = vpop.permute.xlu0 %1307
        %1309 = vrot.lane.b32.xlu0 %v1283, 16
        %v1310 = vpop.permute.xlu0 %1309
        %v1311 = vsel %vm342, %v1308, %v1310
        %v1312 = vsel %vm342, %v1310, %v1308
        %v1313 = vld [vmem:[%s345] ss:$8 sm:$0x3]
        %v1315 = vlaneseq
        %v1316 = vshrl.u32 %v1315, 7
        %v1317 = vsub.s32 0, %v1316
        %v1318 = vrot.slane %v1313, %v1317
        %v1319 = vlaneseq
        %v1320 = vshrl.u32 %v1319, 7
        %v1321 = vsub.s32 1, %v1320
        %v1322 = vrot.slane %v1313, %v1321
        %v1325 = vmul.f32 %v1312, %v1318
        %v1326 = vmul.f32 %v1311, %v1322
        %s1327 = scalar_lea.vmem %s4, 4
        %v1328 = vld [vmem:[%s1327] sm:$0xf]
        %v1330 = vsel %vm362, %v1328, 0
        %v1333 = vsel %vm366, %v1325, 0
        %v1336 = vsel %vm366, %v1326, 0
        %1338 = vmatprep.subr.mxu0 %v1336
        %1339 = vmatpush1.msra.mxu0 %v1333
        %1340 = vmatprep.subr.mxu0 0.0
        %1341 = vmatpush1.msra.mxu0 0.0
        %1342 = vmatprep.subr.mxu0 0.0
        %1343 = vmatpush1.msra.mxu0 0.0
        %1344 = vmatprep.subr.mxu0 0.0
        %1345 = vmatpush1.msra.mxu0 0.0
        %1346 = vmatprep.subr.mxu0 0.0
        %1347 = vmatpush1.msra.mxu0 0.0
        %1348 = vmatprep.subr.mxu0 0.0
        %1349 = vmatpush1.msra.mxu0 0.0
        %1350 = vmatprep.subr.mxu0 0.0
        %1351 = vmatpush1.msra.mxu0 0.0
        %1352 = vmatprep.subr.mxu0 0.0
        %1353 = vmatpush1.msra.mxu0 0.0
        %1354 = vmatprep.subr.mxu0 0.0
        %1355 = vmatpush1.msra.mxu0 0.0
        %1356 = vmatprep.subr.mxu0 0.0
        %1357 = vmatpush1.msra.mxu0 0.0
        %1358 = vmatprep.subr.mxu0 0.0
        %1359 = vmatpush1.msra.mxu0 0.0
        %1360 = vmatprep.subr.mxu0 0.0
        %1361 = vmatpush1.msra.mxu0 0.0
        %1362 = vmatprep.subr.mxu0 0.0
        %1363 = vmatpush1.msra.mxu0 0.0
        %1364 = vmatprep.subr.mxu0 0.0
        %1365 = vmatpush1.msra.mxu0 0.0
        %1366 = vmatprep.subr.mxu0 0.0
        %1367 = vmatpush1.msra.mxu0 0.0
        %1368 = vmatprep.subr.mxu0 0.0
        %1369 = vmatpush1.msra.mxu0 0.0
        %1370 = vmatprep.subr.mxu0 0.0
        %1371 = vmatpush1.msra.mxu0 0.0
        %1372 = vmatprep.subr.mxu0 0.0
        %1373 = vmatpush1.msra.mxu0 0.0
        %1374 = vmatprep.subr.mxu0 0.0
        %1375 = vmatpush1.msra.mxu0 0.0
        %1376 = vmatprep.subr.mxu0 0.0
        %1377 = vmatpush1.msra.mxu0 0.0
        %1378 = vmatprep.subr.mxu0 0.0
        %1379 = vmatpush1.msra.mxu0 0.0
        %1380 = vmatprep.subr.mxu0 0.0
        %1381 = vmatpush1.msra.mxu0 0.0
        %1382 = vmatprep.subr.mxu0 0.0
        %1383 = vmatpush1.msra.mxu0 0.0
        %1384 = vmatprep.subr.mxu0 0.0
        %1385 = vmatpush1.msra.mxu0 0.0
        %1386 = vmatprep.subr.mxu0 0.0
        %1387 = vmatpush1.msra.mxu0 0.0
        %1388 = vmatprep.subr.mxu0 0.0
        %1389 = vmatpush1.msra.mxu0 0.0
        %1390 = vmatprep.subr.mxu0 0.0
        %1391 = vmatpush1.msra.mxu0 0.0
        %1392 = vmatprep.subr.mxu0 0.0
        %1393 = vmatpush1.msra.mxu0 0.0
        %1394 = vmatprep.subr.mxu0 0.0
        %1395 = vmatpush1.msra.mxu0 0.0
        %1396 = vmatprep.subr.mxu0 0.0
        %1397 = vmatpush1.msra.mxu0 0.0
        %1398 = vmatprep.subr.mxu0 0.0
        %1399 = vmatpush1.msra.mxu0 0.0
        %1400 = vmatprep.subr.mxu0 0.0
        %1401 = vmatpush1.msra.mxu0 0.0
        %1402 = vmatprep.mubr.f32.mxu0 0.0
        %1403 = vmatmul.mubr.f32.gmra.mrb[0].mxu0 %v1330
        %v1404 = vpop.f32.mrb[0].mxu0
        %v1405 = vadd.f32 0.0, %v1404
        %v1406 = vpop.f32.mrb[0].mxu0
        %v1407 = vadd.f32 0.0, %v1406
        %1408 = vdwg.mxu0
        %v1410 = vsel %vm362, %v1306, 0
        %v1413 = vsel %vm366, %v1304, 0
        %v1416 = vsel %vm366, %v1305, 0
        %1418 = vmatprep.subr.mxu0 %v1416
        %1419 = vmatpush1.msra.mxu0 %v1413
        %1420 = vmatprep.subr.mxu0 0.0
        %1421 = vmatpush1.msra.mxu0 0.0
        %1422 = vmatprep.subr.mxu0 0.0
        %1423 = vmatpush1.msra.mxu0 0.0
        %1424 = vmatprep.subr.mxu0 0.0
        %1425 = vmatpush1.msra.mxu0 0.0
        %1426 = vmatprep.subr.mxu0 0.0
        %1427 = vmatpush1.msra.mxu0 0.0
        %1428 = vmatprep.subr.mxu0 0.0
        %1429 = vmatpush1.msra.mxu0 0.0
        %1430 = vmatprep.subr.mxu0 0.0
        %1431 = vmatpush1.msra.mxu0 0.0
        %1432 = vmatprep.subr.mxu0 0.0
        %1433 = vmatpush1.msra.mxu0 0.0
        %1434 = vmatprep.subr.mxu0 0.0
        %1435 = vmatpush1.msra.mxu0 0.0
        %1436 = vmatprep.subr.mxu0 0.0
        %1437 = vmatpush1.msra.mxu0 0.0
        %1438 = vmatprep.subr.mxu0 0.0
        %1439 = vmatpush1.msra.mxu0 0.0
        %1440 = vmatprep.subr.mxu0 0.0
        %1441 = vmatpush1.msra.mxu0 0.0
        %1442 = vmatprep.subr.mxu0 0.0
        %1443 = vmatpush1.msra.mxu0 0.0
        %1444 = vmatprep.subr.mxu0 0.0
        %1445 = vmatpush1.msra.mxu0 0.0
        %1446 = vmatprep.subr.mxu0 0.0
        %1447 = vmatpush1.msra.mxu0 0.0
        %1448 = vmatprep.subr.mxu0 0.0
        %1449 = vmatpush1.msra.mxu0 0.0
        %1450 = vmatprep.subr.mxu0 0.0
        %1451 = vmatpush1.msra.mxu0 0.0
        %1452 = vmatprep.subr.mxu0 0.0
        %1453 = vmatpush1.msra.mxu0 0.0
        %1454 = vmatprep.subr.mxu0 0.0
        %1455 = vmatpush1.msra.mxu0 0.0
        %1456 = vmatprep.subr.mxu0 0.0
        %1457 = vmatpush1.msra.mxu0 0.0
        %1458 = vmatprep.subr.mxu0 0.0
        %1459 = vmatpush1.msra.mxu0 0.0
        %1460 = vmatprep.subr.mxu0 0.0
        %1461 = vmatpush1.msra.mxu0 0.0
        %1462 = vmatprep.subr.mxu0 0.0
        %1463 = vmatpush1.msra.mxu0 0.0
        %1464 = vmatprep.subr.mxu0 0.0
        %1465 = vmatpush1.msra.mxu0 0.0
        %1466 = vmatprep.subr.mxu0 0.0
        %1467 = vmatpush1.msra.mxu0 0.0
        %1468 = vmatprep.subr.mxu0 0.0
        %1469 = vmatpush1.msra.mxu0 0.0
        %1470 = vmatprep.subr.mxu0 0.0
        %1471 = vmatpush1.msra.mxu0 0.0
        %1472 = vmatprep.subr.mxu0 0.0
        %1473 = vmatpush1.msra.mxu0 0.0
        %1474 = vmatprep.subr.mxu0 0.0
        %1475 = vmatpush1.msra.mxu0 0.0
        %1476 = vmatprep.subr.mxu0 0.0
        %1477 = vmatpush1.msra.mxu0 0.0
        %1478 = vmatprep.subr.mxu0 0.0
        %1479 = vmatpush1.msra.mxu0 0.0
        %1480 = vmatprep.subr.mxu0 0.0
        %1481 = vmatpush1.msra.mxu0 0.0
        %1482 = vmatprep.mubr.f32.mxu0 0.0
        %1483 = vmatmul.mubr.f32.gmra.mrb[0].mxu0 %v1410
        %v1484 = vpop.f32.mrb[0].mxu0
        %v1485 = vadd.f32 %v1405, %v1484
        %v1486 = vpop.f32.mrb[0].mxu0
        %v1487 = vadd.f32 %v1407, %v1486
        %1488 = vdwg.mxu0
        %1489 = vrot.lane.b32.xlu0 %v1282, 15
        %v1490 = vpop.permute.xlu0 %1489
        %1491 = vrot.lane.b32.xlu0 %v1283, 15
        %v1492 = vpop.permute.xlu0 %1491
        %v1493 = vsel %vm528, %v1490, %v1492
        %v1494 = vsel %vm528, %v1492, %v1490
        %v1495 = vld [vmem:[%s531] ss:$8 sm:$0x3]
        %v1497 = vlaneseq
        %v1498 = vshrl.u32 %v1497, 7
        %v1499 = vsub.s32 0, %v1498
        %v1500 = vrot.slane %v1495, %v1499
        %v1501 = vlaneseq
        %v1502 = vshrl.u32 %v1501, 7
        %v1503 = vsub.s32 1, %v1502
        %v1504 = vrot.slane %v1495, %v1503
        %v1507 = vmul.f32 %v1494, %v1500
        %v1508 = vmul.f32 %v1493, %v1504
        %s1509 = scalar_lea.vmem %s4, 8
        %v1510 = vld [vmem:[%s1509] sm:$0xf]
        %v1512 = vsel %vm362, %v1510, 0
        %v1515 = vsel %vm366, %v1507, 0
        %v1518 = vsel %vm366, %v1508, 0
        %1520 = vmatprep.subr.mxu0 %v1518
        %1521 = vmatpush1.msra.mxu0 %v1515
        %1522 = vmatprep.subr.mxu0 0.0
        %1523 = vmatpush1.msra.mxu0 0.0
        %1524 = vmatprep.subr.mxu0 0.0
        %1525 = vmatpush1.msra.mxu0 0.0
        %1526 = vmatprep.subr.mxu0 0.0
        %1527 = vmatpush1.msra.mxu0 0.0
        %1528 = vmatprep.subr.mxu0 0.0
        %1529 = vmatpush1.msra.mxu0 0.0
        %1530 = vmatprep.subr.mxu0 0.0
        %1531 = vmatpush1.msra.mxu0 0.0
        %1532 = vmatprep.subr.mxu0 0.0
        %1533 = vmatpush1.msra.mxu0 0.0
        %1534 = vmatprep.subr.mxu0 0.0
        %1535 = vmatpush1.msra.mxu0 0.0
        %1536 = vmatprep.subr.mxu0 0.0
        %1537 = vmatpush1.msra.mxu0 0.0
        %1538 = vmatprep.subr.mxu0 0.0
        %1539 = vmatpush1.msra.mxu0 0.0
        %1540 = vmatprep.subr.mxu0 0.0
        %1541 = vmatpush1.msra.mxu0 0.0
        %1542 = vmatprep.subr.mxu0 0.0
        %1543 = vmatpush1.msra.mxu0 0.0
        %1544 = vmatprep.subr.mxu0 0.0
        %1545 = vmatpush1.msra.mxu0 0.0
        %1546 = vmatprep.subr.mxu0 0.0
        %1547 = vmatpush1.msra.mxu0 0.0
        %1548 = vmatprep.subr.mxu0 0.0
        %1549 = vmatpush1.msra.mxu0 0.0
        %1550 = vmatprep.subr.mxu0 0.0
        %1551 = vmatpush1.msra.mxu0 0.0
        %1552 = vmatprep.subr.mxu0 0.0
        %1553 = vmatpush1.msra.mxu0 0.0
        %1554 = vmatprep.subr.mxu0 0.0
        %1555 = vmatpush1.msra.mxu0 0.0
        %1556 = vmatprep.subr.mxu0 0.0
        %1557 = vmatpush1.msra.mxu0 0.0
        %1558 = vmatprep.subr.mxu0 0.0
        %1559 = vmatpush1.msra.mxu0 0.0
        %1560 = vmatprep.subr.mxu0 0.0
        %1561 = vmatpush1.msra.mxu0 0.0
        %1562 = vmatprep.subr.mxu0 0.0
        %1563 = vmatpush1.msra.mxu0 0.0
        %1564 = vmatprep.subr.mxu0 0.0
        %1565 = vmatpush1.msra.mxu0 0.0
        %1566 = vmatprep.subr.mxu0 0.0
        %1567 = vmatpush1.msra.mxu0 0.0
        %1568 = vmatprep.subr.mxu0 0.0
        %1569 = vmatpush1.msra.mxu0 0.0
        %1570 = vmatprep.subr.mxu0 0.0
        %1571 = vmatpush1.msra.mxu0 0.0
        %1572 = vmatprep.subr.mxu0 0.0
        %1573 = vmatpush1.msra.mxu0 0.0
        %1574 = vmatprep.subr.mxu0 0.0
        %1575 = vmatpush1.msra.mxu0 0.0
        %1576 = vmatprep.subr.mxu0 0.0
        %1577 = vmatpush1.msra.mxu0 0.0
        %1578 = vmatprep.subr.mxu0 0.0
        %1579 = vmatpush1.msra.mxu0 0.0
        %1580 = vmatprep.subr.mxu0 0.0
        %1581 = vmatpush1.msra.mxu0 0.0
        %1582 = vmatprep.subr.mxu0 0.0
        %1583 = vmatpush1.msra.mxu0 0.0
        %1584 = vmatprep.mubr.f32.mxu0 0.0
        %1585 = vmatmul.mubr.f32.gmra.mrb[0].mxu0 %v1512
        %v1586 = vpop.f32.mrb[0].mxu0
        %v1587 = vadd.f32 0.0, %v1586
        %v1588 = vpop.f32.mrb[0].mxu0
        %v1589 = vadd.f32 0.0, %v1588
        %1590 = vdwg.mxu0
        %v1591 = vadd.f32 %v1485, %v1587
        %v1592 = vadd.f32 %v1487, %v1589
        %1593 = vrot.lane.b32.xlu0 %v1282, 1
        %v1594 = vpop.permute.xlu0 %1593
        %1595 = vrot.lane.b32.xlu0 %v1283, 1
        %v1596 = vpop.permute.xlu0 %1595
        %v1597 = vsel %vm634, %v1594, %v1596
        %v1598 = vsel %vm634, %v1596, %v1594
        %v1599 = vld [vmem:[%s637] ss:$8 sm:$0x3]
        %v1601 = vlaneseq
        %v1602 = vshrl.u32 %v1601, 7
        %v1603 = vsub.s32 0, %v1602
        %v1604 = vrot.slane %v1599, %v1603
        %v1605 = vlaneseq
        %v1606 = vshrl.u32 %v1605, 7
        %v1607 = vsub.s32 1, %v1606
        %v1608 = vrot.slane %v1599, %v1607
        %v1611 = vmul.f32 %v1598, %v1604
        %v1612 = vmul.f32 %v1597, %v1608
        %s1613 = scalar_lea.vmem %s4, 12
        %v1614 = vld [vmem:[%s1613] sm:$0xf]
        %v1616 = vsel %vm362, %v1614, 0
        %v1619 = vsel %vm366, %v1611, 0
        %v1622 = vsel %vm366, %v1612, 0
        %1624 = vmatprep.subr.mxu0 %v1622
        %1625 = vmatpush1.msra.mxu0 %v1619
        %1626 = vmatprep.subr.mxu0 0.0
        %1627 = vmatpush1.msra.mxu0 0.0
        %1628 = vmatprep.subr.mxu0 0.0
        %1629 = vmatpush1.msra.mxu0 0.0
        %1630 = vmatprep.subr.mxu0 0.0
        %1631 = vmatpush1.msra.mxu0 0.0
        %1632 = vmatprep.subr.mxu0 0.0
        %1633 = vmatpush1.msra.mxu0 0.0
        %1634 = vmatprep.subr.mxu0 0.0
        %1635 = vmatpush1.msra.mxu0 0.0
        %1636 = vmatprep.subr.mxu0 0.0
        %1637 = vmatpush1.msra.mxu0 0.0
        %1638 = vmatprep.subr.mxu0 0.0
        %1639 = vmatpush1.msra.mxu0 0.0
        %1640 = vmatprep.subr.mxu0 0.0
        %1641 = vmatpush1.msra.mxu0 0.0
        %1642 = vmatprep.subr.mxu0 0.0
        %1643 = vmatpush1.msra.mxu0 0.0
        %1644 = vmatprep.subr.mxu0 0.0
        %1645 = vmatpush1.msra.mxu0 0.0
        %1646 = vmatprep.subr.mxu0 0.0
        %1647 = vmatpush1.msra.mxu0 0.0
        %1648 = vmatprep.subr.mxu0 0.0
        %1649 = vmatpush1.msra.mxu0 0.0
        %1650 = vmatprep.subr.mxu0 0.0
        %1651 = vmatpush1.msra.mxu0 0.0
        %1652 = vmatprep.subr.mxu0 0.0
        %1653 = vmatpush1.msra.mxu0 0.0
        %1654 = vmatprep.subr.mxu0 0.0
        %1655 = vmatpush1.msra.mxu0 0.0
        %1656 = vmatprep.subr.mxu0 0.0
        %1657 = vmatpush1.msra.mxu0 0.0
        %1658 = vmatprep.subr.mxu0 0.0
        %1659 = vmatpush1.msra.mxu0 0.0
        %1660 = vmatprep.subr.mxu0 0.0
        %1661 = vmatpush1.msra.mxu0 0.0
        %1662 = vmatprep.subr.mxu0 0.0
        %1663 = vmatpush1.msra.mxu0 0.0
        %1664 = vmatprep.subr.mxu0 0.0
        %1665 = vmatpush1.msra.mxu0 0.0
        %1666 = vmatprep.subr.mxu0 0.0
        %1667 = vmatpush1.msra.mxu0 0.0
        %1668 = vmatprep.subr.mxu0 0.0
        %1669 = vmatpush1.msra.mxu0 0.0
        %1670 = vmatprep.subr.mxu0 0.0
        %1671 = vmatpush1.msra.mxu0 0.0
        %1672 = vmatprep.subr.mxu0 0.0
        %1673 = vmatpush1.msra.mxu0 0.0
        %1674 = vmatprep.subr.mxu0 0.0
        %1675 = vmatpush1.msra.mxu0 0.0
        %1676 = vmatprep.subr.mxu0 0.0
        %1677 = vmatpush1.msra.mxu0 0.0
        %1678 = vmatprep.subr.mxu0 0.0
        %1679 = vmatpush1.msra.mxu0 0.0
        %1680 = vmatprep.subr.mxu0 0.0
        %1681 = vmatpush1.msra.mxu0 0.0
        %1682 = vmatprep.subr.mxu0 0.0
        %1683 = vmatpush1.msra.mxu0 0.0
        %1684 = vmatprep.subr.mxu0 0.0
        %1685 = vmatpush1.msra.mxu0 0.0
        %1686 = vmatprep.subr.mxu0 0.0
        %1687 = vmatpush1.msra.mxu0 0.0
        %1688 = vmatprep.mubr.f32.mxu0 0.0
        %1689 = vmatmul.mubr.f32.gmra.mrb[0].mxu0 %v1616
        %v1690 = vpop.f32.mrb[0].mxu0
        %v1691 = vadd.f32 0.0, %v1690
        %v1692 = vpop.f32.mrb[0].mxu0
        %v1693 = vadd.f32 0.0, %v1692
        %1694 = vdwg.mxu0
        %v1695 = vadd.f32 %v1591, %v1691
        %v1696 = vadd.f32 %v1592, %v1693
        %v1697 = vld [vmem:[%s736] ss:$8 sm:$0x3]
        %v1699 = vlaneseq
        %v1700 = vshrl.u32 %v1699, 7
        %v1701 = vsub.s32 0, %v1700
        %v1702 = vrot.slane %v1697, %v1701
        %v1703 = vlaneseq
        %v1704 = vshrl.u32 %v1703, 7
        %v1705 = vsub.s32 1, %v1704
        %v1706 = vrot.slane %v1697, %v1705
        %v1709 = vmul.f32 %v1278, %v1702
        %v1710 = vmul.f32 %v1279, %v1706
        %s1711 = scalar_lea.vmem %s4, 16
        %v1712 = vld [vmem:[%s1711] sm:$0xf]
        %v1715 = vrot.slane %v1709, 4
        %v1716 = vrot.slane %v1710, 4
        %v1718 = vsel %vm362, %v1712, 0
        %v1720 = vsel %vm366, %v1715, 0
        %v1722 = vsel %vm366, %v1716, 0
        %1724 = vmatprep.subr.mxu0 %v1722
        %1725 = vmatpush1.msra.mxu0 %v1720
        %1726 = vmatprep.subr.mxu0 0.0
        %1727 = vmatpush1.msra.mxu0 0.0
        %1728 = vmatprep.subr.mxu0 0.0
        %1729 = vmatpush1.msra.mxu0 0.0
        %1730 = vmatprep.subr.mxu0 0.0
        %1731 = vmatpush1.msra.mxu0 0.0
        %1732 = vmatprep.subr.mxu0 0.0
        %1733 = vmatpush1.msra.mxu0 0.0
        %1734 = vmatprep.subr.mxu0 0.0
        %1735 = vmatpush1.msra.mxu0 0.0
        %1736 = vmatprep.subr.mxu0 0.0
        %1737 = vmatpush1.msra.mxu0 0.0
        %1738 = vmatprep.subr.mxu0 0.0
        %1739 = vmatpush1.msra.mxu0 0.0
        %1740 = vmatprep.subr.mxu0 0.0
        %1741 = vmatpush1.msra.mxu0 0.0
        %1742 = vmatprep.subr.mxu0 0.0
        %1743 = vmatpush1.msra.mxu0 0.0
        %1744 = vmatprep.subr.mxu0 0.0
        %1745 = vmatpush1.msra.mxu0 0.0
        %1746 = vmatprep.subr.mxu0 0.0
        %1747 = vmatpush1.msra.mxu0 0.0
        %1748 = vmatprep.subr.mxu0 0.0
        %1749 = vmatpush1.msra.mxu0 0.0
        %1750 = vmatprep.subr.mxu0 0.0
        %1751 = vmatpush1.msra.mxu0 0.0
        %1752 = vmatprep.subr.mxu0 0.0
        %1753 = vmatpush1.msra.mxu0 0.0
        %1754 = vmatprep.subr.mxu0 0.0
        %1755 = vmatpush1.msra.mxu0 0.0
        %1756 = vmatprep.subr.mxu0 0.0
        %1757 = vmatpush1.msra.mxu0 0.0
        %1758 = vmatprep.subr.mxu0 0.0
        %1759 = vmatpush1.msra.mxu0 0.0
        %1760 = vmatprep.subr.mxu0 0.0
        %1761 = vmatpush1.msra.mxu0 0.0
        %1762 = vmatprep.subr.mxu0 0.0
        %1763 = vmatpush1.msra.mxu0 0.0
        %1764 = vmatprep.subr.mxu0 0.0
        %1765 = vmatpush1.msra.mxu0 0.0
        %1766 = vmatprep.subr.mxu0 0.0
        %1767 = vmatpush1.msra.mxu0 0.0
        %1768 = vmatprep.subr.mxu0 0.0
        %1769 = vmatpush1.msra.mxu0 0.0
        %1770 = vmatprep.subr.mxu0 0.0
        %1771 = vmatpush1.msra.mxu0 0.0
        %1772 = vmatprep.subr.mxu0 0.0
        %1773 = vmatpush1.msra.mxu0 0.0
        %1774 = vmatprep.subr.mxu0 0.0
        %1775 = vmatpush1.msra.mxu0 0.0
        %1776 = vmatprep.subr.mxu0 0.0
        %1777 = vmatpush1.msra.mxu0 0.0
        %1778 = vmatprep.subr.mxu0 0.0
        %1779 = vmatpush1.msra.mxu0 0.0
        %1780 = vmatprep.subr.mxu0 0.0
        %1781 = vmatpush1.msra.mxu0 0.0
        %1782 = vmatprep.subr.mxu0 0.0
        %1783 = vmatpush1.msra.mxu0 0.0
        %1784 = vmatprep.subr.mxu0 0.0
        %1785 = vmatpush1.msra.mxu0 0.0
        %1786 = vmatprep.subr.mxu0 0.0
        %1787 = vmatpush1.msra.mxu0 0.0
        %1788 = vmatprep.mubr.f32.mxu0 0.0
        %1789 = vmatmul.mubr.f32.gmra.mrb[0].mxu0 %v1718
        %v1790 = vpop.f32.mrb[0].mxu0
        %v1791 = vadd.f32 0.0, %v1790
        %v1792 = vpop.f32.mrb[0].mxu0
        %v1793 = vadd.f32 0.0, %v1792
        %1794 = vdwg.mxu0
        %v1795 = vadd.f32 %v1695, %v1791
        %v1796 = vadd.f32 %v1696, %v1793
        %1797 = vrot.lane.b32.xlu0 %v1282, 127
        %v1798 = vpop.permute.xlu0 %1797
        %1799 = vrot.lane.b32.xlu0 %v1283, 127
        %v1800 = vpop.permute.xlu0 %1799
        %v1801 = vsel %vm838, %v1798, %v1800
        %v1802 = vsel %vm838, %v1800, %v1798
        %v1803 = vld [vmem:[%s841] ss:$8 sm:$0x3]
        %v1805 = vlaneseq
        %v1806 = vshrl.u32 %v1805, 7
        %v1807 = vsub.s32 0, %v1806
        %v1808 = vrot.slane %v1803, %v1807
        %v1809 = vlaneseq
        %v1810 = vshrl.u32 %v1809, 7
        %v1811 = vsub.s32 1, %v1810
        %v1812 = vrot.slane %v1803, %v1811
        %v1815 = vmul.f32 %v1801, %v1808
        %v1816 = vmul.f32 %v1802, %v1812
        %s1817 = scalar_lea.vmem %s4, 20
        %v1818 = vld [vmem:[%s1817] sm:$0xf]
        %v1820 = vsel %vm362, %v1818, 0
        %v1823 = vsel %vm366, %v1815, 0
        %v1826 = vsel %vm366, %v1816, 0
        %1828 = vmatprep.subr.mxu0 %v1826
        %1829 = vmatpush1.msra.mxu0 %v1823
        %1830 = vmatprep.subr.mxu0 0.0
        %1831 = vmatpush1.msra.mxu0 0.0
        %1832 = vmatprep.subr.mxu0 0.0
        %1833 = vmatpush1.msra.mxu0 0.0
        %1834 = vmatprep.subr.mxu0 0.0
        %1835 = vmatpush1.msra.mxu0 0.0
        %1836 = vmatprep.subr.mxu0 0.0
        %1837 = vmatpush1.msra.mxu0 0.0
        %1838 = vmatprep.subr.mxu0 0.0
        %1839 = vmatpush1.msra.mxu0 0.0
        %1840 = vmatprep.subr.mxu0 0.0
        %1841 = vmatpush1.msra.mxu0 0.0
        %1842 = vmatprep.subr.mxu0 0.0
        %1843 = vmatpush1.msra.mxu0 0.0
        %1844 = vmatprep.subr.mxu0 0.0
        %1845 = vmatpush1.msra.mxu0 0.0
        %1846 = vmatprep.subr.mxu0 0.0
        %1847 = vmatpush1.msra.mxu0 0.0
        %1848 = vmatprep.subr.mxu0 0.0
        %1849 = vmatpush1.msra.mxu0 0.0
        %1850 = vmatprep.subr.mxu0 0.0
        %1851 = vmatpush1.msra.mxu0 0.0
        %1852 = vmatprep.subr.mxu0 0.0
        %1853 = vmatpush1.msra.mxu0 0.0
        %1854 = vmatprep.subr.mxu0 0.0
        %1855 = vmatpush1.msra.mxu0 0.0
        %1856 = vmatprep.subr.mxu0 0.0
        %1857 = vmatpush1.msra.mxu0 0.0
        %1858 = vmatprep.subr.mxu0 0.0
        %1859 = vmatpush1.msra.mxu0 0.0
        %1860 = vmatprep.subr.mxu0 0.0
        %1861 = vmatpush1.msra.mxu0 0.0
        %1862 = vmatprep.subr.mxu0 0.0
        %1863 = vmatpush1.msra.mxu0 0.0
        %1864 = vmatprep.subr.mxu0 0.0
        %1865 = vmatpush1.msra.mxu0 0.0
        %1866 = vmatprep.subr.mxu0 0.0
        %1867 = vmatpush1.msra.mxu0 0.0
        %1868 = vmatprep.subr.mxu0 0.0
        %1869 = vmatpush1.msra.mxu0 0.0
        %1870 = vmatprep.subr.mxu0 0.0
        %1871 = vmatpush1.msra.mxu0 0.0
        %1872 = vmatprep.subr.mxu0 0.0
        %1873 = vmatpush1.msra.mxu0 0.0
        %1874 = vmatprep.subr.mxu0 0.0
        %1875 = vmatpush1.msra.mxu0 0.0
        %1876 = vmatprep.subr.mxu0 0.0
        %1877 = vmatpush1.msra.mxu0 0.0
        %1878 = vmatprep.subr.mxu0 0.0
        %1879 = vmatpush1.msra.mxu0 0.0
        %1880 = vmatprep.subr.mxu0 0.0
        %1881 = vmatpush1.msra.mxu0 0.0
        %1882 = vmatprep.subr.mxu0 0.0
        %1883 = vmatpush1.msra.mxu0 0.0
        %1884 = vmatprep.subr.mxu0 0.0
        %1885 = vmatpush1.msra.mxu0 0.0
        %1886 = vmatprep.subr.mxu0 0.0
        %1887 = vmatpush1.msra.mxu0 0.0
        %1888 = vmatprep.subr.mxu0 0.0
        %1889 = vmatpush1.msra.mxu0 0.0
        %1890 = vmatprep.subr.mxu0 0.0
        %1891 = vmatpush1.msra.mxu0 0.0
        %1892 = vmatprep.mubr.f32.mxu0 0.0
        %1893 = vmatmul.mubr.f32.gmra.mrb[0].mxu0 %v1820
        %v1894 = vpop.f32.mrb[0].mxu0
        %v1895 = vadd.f32 0.0, %v1894
        %v1896 = vpop.f32.mrb[0].mxu0
        %v1897 = vadd.f32 0.0, %v1896
        %1898 = vdwg.mxu0
        %v1899 = vadd.f32 %v1795, %v1895
        %v1900 = vadd.f32 %v1796, %v1897
        %1901 = vrot.lane.b32.xlu0 %v1282, 113
        %v1902 = vpop.permute.xlu0 %1901
        %1903 = vrot.lane.b32.xlu0 %v1283, 113
        %v1904 = vpop.permute.xlu0 %1903
        %v1905 = vsel %vm944, %v1902, %v1904
        %v1906 = vsel %vm944, %v1904, %v1902
        %v1907 = vld [vmem:[%s947] ss:$8 sm:$0x3]
        %v1909 = vlaneseq
        %v1910 = vshrl.u32 %v1909, 7
        %v1911 = vsub.s32 0, %v1910
        %v1912 = vrot.slane %v1907, %v1911
        %v1913 = vlaneseq
        %v1914 = vshrl.u32 %v1913, 7
        %v1915 = vsub.s32 1, %v1914
        %v1916 = vrot.slane %v1907, %v1915
        %v1919 = vmul.f32 %v1905, %v1912
        %v1920 = vmul.f32 %v1906, %v1916
        %s1921 = scalar_lea.vmem %s4, 24
        %v1922 = vld [vmem:[%s1921] sm:$0xf]
        %v1924 = vsel %vm362, %v1922, 0
        %v1927 = vsel %vm366, %v1919, 0
        %v1930 = vsel %vm366, %v1920, 0
        %1932 = vmatprep.subr.mxu0 %v1930
        %1933 = vmatpush1.msra.mxu0 %v1927
        %1934 = vmatprep.subr.mxu0 0.0
        %1935 = vmatpush1.msra.mxu0 0.0
        %1936 = vmatprep.subr.mxu0 0.0
        %1937 = vmatpush1.msra.mxu0 0.0
        %1938 = vmatprep.subr.mxu0 0.0
        %1939 = vmatpush1.msra.mxu0 0.0
        %1940 = vmatprep.subr.mxu0 0.0
        %1941 = vmatpush1.msra.mxu0 0.0
        %1942 = vmatprep.subr.mxu0 0.0
        %1943 = vmatpush1.msra.mxu0 0.0
        %1944 = vmatprep.subr.mxu0 0.0
        %1945 = vmatpush1.msra.mxu0 0.0
        %1946 = vmatprep.subr.mxu0 0.0
        %1947 = vmatpush1.msra.mxu0 0.0
        %1948 = vmatprep.subr.mxu0 0.0
        %1949 = vmatpush1.msra.mxu0 0.0
        %1950 = vmatprep.subr.mxu0 0.0
        %1951 = vmatpush1.msra.mxu0 0.0
        %1952 = vmatprep.subr.mxu0 0.0
        %1953 = vmatpush1.msra.mxu0 0.0
        %1954 = vmatprep.subr.mxu0 0.0
        %1955 = vmatpush1.msra.mxu0 0.0
        %1956 = vmatprep.subr.mxu0 0.0
        %1957 = vmatpush1.msra.mxu0 0.0
        %1958 = vmatprep.subr.mxu0 0.0
        %1959 = vmatpush1.msra.mxu0 0.0
        %1960 = vmatprep.subr.mxu0 0.0
        %1961 = vmatpush1.msra.mxu0 0.0
        %1962 = vmatprep.subr.mxu0 0.0
        %1963 = vmatpush1.msra.mxu0 0.0
        %1964 = vmatprep.subr.mxu0 0.0
        %1965 = vmatpush1.msra.mxu0 0.0
        %1966 = vmatprep.subr.mxu0 0.0
        %1967 = vmatpush1.msra.mxu0 0.0
        %1968 = vmatprep.subr.mxu0 0.0
        %1969 = vmatpush1.msra.mxu0 0.0
        %1970 = vmatprep.subr.mxu0 0.0
        %1971 = vmatpush1.msra.mxu0 0.0
        %1972 = vmatprep.subr.mxu0 0.0
        %1973 = vmatpush1.msra.mxu0 0.0
        %1974 = vmatprep.subr.mxu0 0.0
        %1975 = vmatpush1.msra.mxu0 0.0
        %1976 = vmatprep.subr.mxu0 0.0
        %1977 = vmatpush1.msra.mxu0 0.0
        %1978 = vmatprep.subr.mxu0 0.0
        %1979 = vmatpush1.msra.mxu0 0.0
        %1980 = vmatprep.subr.mxu0 0.0
        %1981 = vmatpush1.msra.mxu0 0.0
        %1982 = vmatprep.subr.mxu0 0.0
        %1983 = vmatpush1.msra.mxu0 0.0
        %1984 = vmatprep.subr.mxu0 0.0
        %1985 = vmatpush1.msra.mxu0 0.0
        %1986 = vmatprep.subr.mxu0 0.0
        %1987 = vmatpush1.msra.mxu0 0.0
        %1988 = vmatprep.subr.mxu0 0.0
        %1989 = vmatpush1.msra.mxu0 0.0
        %1990 = vmatprep.subr.mxu0 0.0
        %1991 = vmatpush1.msra.mxu0 0.0
        %1992 = vmatprep.subr.mxu0 0.0
        %1993 = vmatpush1.msra.mxu0 0.0
        %1994 = vmatprep.subr.mxu0 0.0
        %1995 = vmatpush1.msra.mxu0 0.0
        %1996 = vmatprep.mubr.f32.mxu0 0.0
        %1997 = vmatmul.mubr.f32.gmra.mrb[0].mxu0 %v1924
        %v1998 = vpop.f32.mrb[0].mxu0
        %v1999 = vadd.f32 0.0, %v1998
        %v2000 = vpop.f32.mrb[0].mxu0
        %v2001 = vadd.f32 0.0, %v2000
        %2002 = vdwg.mxu0
        %v2003 = vadd.f32 %v1899, %v1999
        %v2004 = vadd.f32 %v1900, %v2001
        %2005 = vrot.lane.b32.xlu0 %v1282, 112
        %v2006 = vpop.permute.xlu0 %2005
        %2007 = vrot.lane.b32.xlu0 %v1283, 112
        %v2008 = vpop.permute.xlu0 %2007
        %v2009 = vsel %vm1050, %v2006, %v2008
        %v2010 = vsel %vm1050, %v2008, %v2006
        %v2011 = vld [vmem:[%s1053] ss:$8 sm:$0x3]
        %v2013 = vlaneseq
        %v2014 = vshrl.u32 %v2013, 7
        %v2015 = vsub.s32 0, %v2014
        %v2016 = vrot.slane %v2011, %v2015
        %v2017 = vlaneseq
        %v2018 = vshrl.u32 %v2017, 7
        %v2019 = vsub.s32 1, %v2018
        %v2020 = vrot.slane %v2011, %v2019
        %v2023 = vmul.f32 %v2009, %v2016
        %v2024 = vmul.f32 %v2010, %v2020
        %s2025 = scalar_lea.vmem %s4, 28
        %v2026 = vld [vmem:[%s2025] sm:$0xf]
        %v2028 = vsel %vm362, %v2026, 0
        %v2031 = vsel %vm366, %v2023, 0
        %v2034 = vsel %vm366, %v2024, 0
        %2036 = vmatprep.subr.mxu0 %v2034
        %2037 = vmatpush1.msra.mxu0 %v2031
        %2038 = vmatprep.subr.mxu0 0.0
        %2039 = vmatpush1.msra.mxu0 0.0
        %2040 = vmatprep.subr.mxu0 0.0
        %2041 = vmatpush1.msra.mxu0 0.0
        %2042 = vmatprep.subr.mxu0 0.0
        %2043 = vmatpush1.msra.mxu0 0.0
        %2044 = vmatprep.subr.mxu0 0.0
        %2045 = vmatpush1.msra.mxu0 0.0
        %2046 = vmatprep.subr.mxu0 0.0
        %2047 = vmatpush1.msra.mxu0 0.0
        %2048 = vmatprep.subr.mxu0 0.0
        %2049 = vmatpush1.msra.mxu0 0.0
        %2050 = vmatprep.subr.mxu0 0.0
        %2051 = vmatpush1.msra.mxu0 0.0
        %2052 = vmatprep.subr.mxu0 0.0
        %2053 = vmatpush1.msra.mxu0 0.0
        %2054 = vmatprep.subr.mxu0 0.0
        %2055 = vmatpush1.msra.mxu0 0.0
        %2056 = vmatprep.subr.mxu0 0.0
        %2057 = vmatpush1.msra.mxu0 0.0
        %2058 = vmatprep.subr.mxu0 0.0
        %2059 = vmatpush1.msra.mxu0 0.0
        %2060 = vmatprep.subr.mxu0 0.0
        %2061 = vmatpush1.msra.mxu0 0.0
        %2062 = vmatprep.subr.mxu0 0.0
        %2063 = vmatpush1.msra.mxu0 0.0
        %2064 = vmatprep.subr.mxu0 0.0
        %2065 = vmatpush1.msra.mxu0 0.0
        %2066 = vmatprep.subr.mxu0 0.0
        %2067 = vmatpush1.msra.mxu0 0.0
        %2068 = vmatprep.subr.mxu0 0.0
        %2069 = vmatpush1.msra.mxu0 0.0
        %2070 = vmatprep.subr.mxu0 0.0
        %2071 = vmatpush1.msra.mxu0 0.0
        %2072 = vmatprep.subr.mxu0 0.0
        %2073 = vmatpush1.msra.mxu0 0.0
        %2074 = vmatprep.subr.mxu0 0.0
        %2075 = vmatpush1.msra.mxu0 0.0
        %2076 = vmatprep.subr.mxu0 0.0
        %2077 = vmatpush1.msra.mxu0 0.0
        %2078 = vmatprep.subr.mxu0 0.0
        %2079 = vmatpush1.msra.mxu0 0.0
        %2080 = vmatprep.subr.mxu0 0.0
        %2081 = vmatpush1.msra.mxu0 0.0
        %2082 = vmatprep.subr.mxu0 0.0
        %2083 = vmatpush1.msra.mxu0 0.0
        %2084 = vmatprep.subr.mxu0 0.0
        %2085 = vmatpush1.msra.mxu0 0.0
        %2086 = vmatprep.subr.mxu0 0.0
        %2087 = vmatpush1.msra.mxu0 0.0
        %2088 = vmatprep.subr.mxu0 0.0
        %2089 = vmatpush1.msra.mxu0 0.0
        %2090 = vmatprep.subr.mxu0 0.0
        %2091 = vmatpush1.msra.mxu0 0.0
        %2092 = vmatprep.subr.mxu0 0.0
        %2093 = vmatpush1.msra.mxu0 0.0
        %2094 = vmatprep.subr.mxu0 0.0
        %2095 = vmatpush1.msra.mxu0 0.0
        %2096 = vmatprep.subr.mxu0 0.0
        %2097 = vmatpush1.msra.mxu0 0.0
        %2098 = vmatprep.subr.mxu0 0.0
        %2099 = vmatpush1.msra.mxu0 0.0
        %2100 = vmatprep.mubr.f32.mxu0 0.0
        %2101 = vmatmul.mubr.f32.gmra.mrb[0].mxu0 %v2028
        %v2102 = vpop.f32.mrb[0].mxu0
        %v2103 = vadd.f32 0.0, %v2102
        %v2104 = vpop.f32.mrb[0].mxu0
        %v2105 = vadd.f32 0.0, %v2104
        %2106 = vdwg.mxu0
        %v2107 = vadd.f32 %v2003, %v2103
        %v2108 = vadd.f32 %v2004, %v2105
        %2109 = vrot.lane.b32.xlu0 %v1282, 111
        %v2110 = vpop.permute.xlu0 %2109
        %2111 = vrot.lane.b32.xlu0 %v1283, 111
        %v2112 = vpop.permute.xlu0 %2111
        %v2113 = vsel %vm1156, %v2110, %v2112
        %v2114 = vsel %vm1156, %v2112, %v2110
        %v2115 = vld [vmem:[%s1159] ss:$8 sm:$0x3]
        %v2117 = vlaneseq
        %v2118 = vshrl.u32 %v2117, 7
        %v2119 = vsub.s32 0, %v2118
        %v2120 = vrot.slane %v2115, %v2119
        %v2121 = vlaneseq
        %v2122 = vshrl.u32 %v2121, 7
        %v2123 = vsub.s32 1, %v2122
        %v2124 = vrot.slane %v2115, %v2123
        %v2127 = vmul.f32 %v2113, %v2120
        %v2128 = vmul.f32 %v2114, %v2124
        %s2129 = scalar_lea.vmem %s4, 32
        %v2130 = vld [vmem:[%s2129] sm:$0xf]
        %v2132 = vsel %vm362, %v2130, 0
        %v2135 = vsel %vm366, %v2127, 0
        %v2138 = vsel %vm366, %v2128, 0
        %2140 = vmatprep.subr.mxu0 %v2138
        %2141 = vmatpush1.msra.mxu0 %v2135
        %2142 = vmatprep.subr.mxu0 0.0
        %2143 = vmatpush1.msra.mxu0 0.0
        %2144 = vmatprep.subr.mxu0 0.0
        %2145 = vmatpush1.msra.mxu0 0.0
        %2146 = vmatprep.subr.mxu0 0.0
        %2147 = vmatpush1.msra.mxu0 0.0
        %2148 = vmatprep.subr.mxu0 0.0
        %2149 = vmatpush1.msra.mxu0 0.0
        %2150 = vmatprep.subr.mxu0 0.0
        %2151 = vmatpush1.msra.mxu0 0.0
        %2152 = vmatprep.subr.mxu0 0.0
        %2153 = vmatpush1.msra.mxu0 0.0
        %2154 = vmatprep.subr.mxu0 0.0
        %2155 = vmatpush1.msra.mxu0 0.0
        %2156 = vmatprep.subr.mxu0 0.0
        %2157 = vmatpush1.msra.mxu0 0.0
        %2158 = vmatprep.subr.mxu0 0.0
        %2159 = vmatpush1.msra.mxu0 0.0
        %2160 = vmatprep.subr.mxu0 0.0
        %2161 = vmatpush1.msra.mxu0 0.0
        %2162 = vmatprep.subr.mxu0 0.0
        %2163 = vmatpush1.msra.mxu0 0.0
        %2164 = vmatprep.subr.mxu0 0.0
        %2165 = vmatpush1.msra.mxu0 0.0
        %2166 = vmatprep.subr.mxu0 0.0
        %2167 = vmatpush1.msra.mxu0 0.0
        %2168 = vmatprep.subr.mxu0 0.0
        %2169 = vmatpush1.msra.mxu0 0.0
        %2170 = vmatprep.subr.mxu0 0.0
        %2171 = vmatpush1.msra.mxu0 0.0
        %2172 = vmatprep.subr.mxu0 0.0
        %2173 = vmatpush1.msra.mxu0 0.0
        %2174 = vmatprep.subr.mxu0 0.0
        %2175 = vmatpush1.msra.mxu0 0.0
        %2176 = vmatprep.subr.mxu0 0.0
        %2177 = vmatpush1.msra.mxu0 0.0
        %2178 = vmatprep.subr.mxu0 0.0
        %2179 = vmatpush1.msra.mxu0 0.0
        %2180 = vmatprep.subr.mxu0 0.0
        %2181 = vmatpush1.msra.mxu0 0.0
        %2182 = vmatprep.subr.mxu0 0.0
        %2183 = vmatpush1.msra.mxu0 0.0
        %2184 = vmatprep.subr.mxu0 0.0
        %2185 = vmatpush1.msra.mxu0 0.0
        %2186 = vmatprep.subr.mxu0 0.0
        %2187 = vmatpush1.msra.mxu0 0.0
        %2188 = vmatprep.subr.mxu0 0.0
        %2189 = vmatpush1.msra.mxu0 0.0
        %2190 = vmatprep.subr.mxu0 0.0
        %2191 = vmatpush1.msra.mxu0 0.0
        %2192 = vmatprep.subr.mxu0 0.0
        %2193 = vmatpush1.msra.mxu0 0.0
        %2194 = vmatprep.subr.mxu0 0.0
        %2195 = vmatpush1.msra.mxu0 0.0
        %2196 = vmatprep.subr.mxu0 0.0
        %2197 = vmatpush1.msra.mxu0 0.0
        %2198 = vmatprep.subr.mxu0 0.0
        %2199 = vmatpush1.msra.mxu0 0.0
        %2200 = vmatprep.subr.mxu0 0.0
        %2201 = vmatpush1.msra.mxu0 0.0
        %2202 = vmatprep.subr.mxu0 0.0
        %2203 = vmatpush1.msra.mxu0 0.0
        %2204 = vmatprep.mubr.f32.mxu0 0.0
        %2205 = vmatmul.mubr.f32.gmra.mrb[0].mxu0 %v2132
        %v2206 = vpop.f32.mrb[0].mxu0
        %v2207 = vadd.f32 0.0, %v2206
        %v2208 = vpop.f32.mrb[0].mxu0
        %v2209 = vadd.f32 0.0, %v2208
        %2210 = vdwg.mxu0
        %v2211 = vadd.f32 %v2107, %v2207
        %v2212 = vadd.f32 %v2108, %v2209
        %v2213 = vld [vmem:[%s5] sm:$0xf]
        %2215 = vset.pattern.permute.xlu0 0
        %2216 = vperm.xlu0 %2215, %v2213
        %v2217 = vpop.permute.xlu0 %2216
        %v2219 = vadd.f32 %v2211, %v2217
        %v2220 = vadd.f32 %v2212, %v2217
        %v2221 = vmul.f32 %v2219, 0.2
        %v2222 = vmul.f32 %v2220, 0.2
        %v2223 = vmax.f32 %v2219, %v2221
        %v2224 = vmax.f32 %v2220, %v2222
        %2225 = vst [vmem:[%s298 + $0x10] sm:$0xf] %v2223
        %2226 = vst [vmem:[%s298 + $0x18] sm:$0xf] %v2224
        %v2227 = vld [vmem:[%s298] sm:$0xf0]
        %v2228 = vld [vmem:[%s298 + $0x8] sm:$0xf0]
        %v2229 = vld [vmem:[%s298 + $0x10] sm:$0xf]
        %v2230 = vld [vmem:[%s298 + $0x18] sm:$0xf]
        %v2235 = vrot.slane %v2227, 4
        %v2236 = vrot.slane %v2229, 4
        %v2237 = vsel %vm366, %v2235, %v2236
        %v2238 = vrot.slane %v2228, 4
        %v2239 = vrot.slane %v2230, 4
        %v2240 = vsel %vm366, %v2238, %v2239
        %2243 = vrot.lane.b32.xlu0 %v2237, 17
        %v2244 = vpop.permute.xlu0 %2243
        %2245 = vrot.lane.b32.xlu0 %v2240, 17
        %v2246 = vpop.permute.xlu0 %2245
        %v2247 = vsel %vm320, %v2244, %v2246
        %v2248 = vsel %vm320, %v2246, %v2244
        %v2249 = vld [vmem:[%s0] ss:$8 sm:$0x3]
        %v2251 = vlaneseq
        %v2252 = vshrl.u32 %v2251, 7
        %v2253 = vsub.s32 0, %v2252
        %v2254 = vrot.slane %v2249, %v2253
        %v2255 = vlaneseq
        %v2256 = vshrl.u32 %v2255, 7
        %v2257 = vsub.s32 1, %v2256
        %v2258 = vrot.slane %v2249, %v2257
        %v2261 = vmul.f32 %v2248, %v2254
        %v2262 = vmul.f32 %v2247, %v2258
        %v2263 = vld [vmem:[%s6] sm:$0xf]
        %2264 = vrot.lane.b32.xlu0 %v2237, 16
        %v2265 = vpop.permute.xlu0 %2264
        %2266 = vrot.lane.b32.xlu0 %v2240, 16
        %v2267 = vpop.permute.xlu0 %2266
        %v2268 = vsel %vm342, %v2265, %v2267
        %v2269 = vsel %vm342, %v2267, %v2265
        %v2270 = vld [vmem:[%s345] ss:$8 sm:$0x3]
        %v2272 = vlaneseq
        %v2273 = vshrl.u32 %v2272, 7
        %v2274 = vsub.s32 0, %v2273
        %v2275 = vrot.slane %v2270, %v2274
        %v2276 = vlaneseq
        %v2277 = vshrl.u32 %v2276, 7
        %v2278 = vsub.s32 1, %v2277
        %v2279 = vrot.slane %v2270, %v2278
        %v2282 = vmul.f32 %v2269, %v2275
        %v2283 = vmul.f32 %v2268, %v2279
        %s2284 = scalar_lea.vmem %s6, 4
        %v2285 = vld [vmem:[%s2284] sm:$0xf]
        %vm2286 = vcmask 64512
        %v2288 = vsel %vm2286, %v2285, 0
        %2290 = vmatprep.subr.mxu0 %v2283
        %2291 = vmatpush1.msra.mxu0 %v2282
        %2292 = vmatprep.subr.mxu0 0.0
        %2293 = vmatpush1.msra.mxu0 0.0
        %2294 = vmatprep.subr.mxu0 0.0
        %2295 = vmatpush1.msra.mxu0 0.0
        %2296 = vmatprep.subr.mxu0 0.0
        %2297 = vmatpush1.msra.mxu0 0.0
        %2298 = vmatprep.subr.mxu0 0.0
        %2299 = vmatpush1.msra.mxu0 0.0
        %2300 = vmatprep.subr.mxu0 0.0
        %2301 = vmatpush1.msra.mxu0 0.0
        %2302 = vmatprep.subr.mxu0 0.0
        %2303 = vmatpush1.msra.mxu0 0.0
        %2304 = vmatprep.subr.mxu0 0.0
        %2305 = vmatpush1.msra.mxu0 0.0
        %2306 = vmatprep.subr.mxu0 0.0
        %2307 = vmatpush1.msra.mxu0 0.0
        %2308 = vmatprep.subr.mxu0 0.0
        %2309 = vmatpush1.msra.mxu0 0.0
        %2310 = vmatprep.subr.mxu0 0.0
        %2311 = vmatpush1.msra.mxu0 0.0
        %2312 = vmatprep.subr.mxu0 0.0
        %2313 = vmatpush1.msra.mxu0 0.0
        %2314 = vmatprep.subr.mxu0 0.0
        %2315 = vmatpush1.msra.mxu0 0.0
        %2316 = vmatprep.subr.mxu0 0.0
        %2317 = vmatpush1.msra.mxu0 0.0
        %2318 = vmatprep.subr.mxu0 0.0
        %2319 = vmatpush1.msra.mxu0 0.0
        %2320 = vmatprep.subr.mxu0 0.0
        %2321 = vmatpush1.msra.mxu0 0.0
        %2322 = vmatprep.subr.mxu0 0.0
        %2323 = vmatpush1.msra.mxu0 0.0
        %2324 = vmatprep.subr.mxu0 0.0
        %2325 = vmatpush1.msra.mxu0 0.0
        %2326 = vmatprep.subr.mxu0 0.0
        %2327 = vmatpush1.msra.mxu0 0.0
        %2328 = vmatprep.subr.mxu0 0.0
        %2329 = vmatpush1.msra.mxu0 0.0
        %2330 = vmatprep.subr.mxu0 0.0
        %2331 = vmatpush1.msra.mxu0 0.0
        %2332 = vmatprep.subr.mxu0 0.0
        %2333 = vmatpush1.msra.mxu0 0.0
        %2334 = vmatprep.subr.mxu0 0.0
        %2335 = vmatpush1.msra.mxu0 0.0
        %2336 = vmatprep.subr.mxu0 0.0
        %2337 = vmatpush1.msra.mxu0 0.0
        %2338 = vmatprep.subr.mxu0 0.0
        %2339 = vmatpush1.msra.mxu0 0.0
        %2340 = vmatprep.subr.mxu0 0.0
        %2341 = vmatpush1.msra.mxu0 0.0
        %2342 = vmatprep.subr.mxu0 0.0
        %2343 = vmatpush1.msra.mxu0 0.0
        %2344 = vmatprep.subr.mxu0 0.0
        %2345 = vmatpush1.msra.mxu0 0.0
        %2346 = vmatprep.subr.mxu0 0.0
        %2347 = vmatpush1.msra.mxu0 0.0
        %2348 = vmatprep.subr.mxu0 0.0
        %2349 = vmatpush1.msra.mxu0 0.0
        %2350 = vmatprep.subr.mxu0 0.0
        %2351 = vmatpush1.msra.mxu0 0.0
        %2352 = vmatprep.subr.mxu0 0.0
        %2353 = vmatpush1.msra.mxu0 0.0
        %2354 = vmatprep.mubr.f32.mxu0 0.0
        %2355 = vmatmul.mubr.f32.gmra.mrb[0].mxu0 %v2288
        %v2356 = vpop.f32.mrb[0].mxu0
        %v2357 = vadd.f32 0.0, %v2356
        %v2358 = vpop.f32.mrb[0].mxu0
        %v2359 = vadd.f32 0.0, %v2358
        %2360 = vdwg.mxu0
        %v2362 = vsel %vm2286, %v2263, 0
        %2364 = vmatprep.subr.mxu0 %v2262
        %2365 = vmatpush1.msra.mxu0 %v2261
        %2366 = vmatprep.subr.mxu0 0.0
        %2367 = vmatpush1.msra.mxu0 0.0
        %2368 = vmatprep.subr.mxu0 0.0
        %2369 = vmatpush1.msra.mxu0 0.0
        %2370 = vmatprep.subr.mxu0 0.0
        %2371 = vmatpush1.msra.mxu0 0.0
        %2372 = vmatprep.subr.mxu0 0.0
        %2373 = vmatpush1.msra.mxu0 0.0
        %2374 = vmatprep.subr.mxu0 0.0
        %2375 = vmatpush1.msra.mxu0 0.0
        %2376 = vmatprep.subr.mxu0 0.0
        %2377 = vmatpush1.msra.mxu0 0.0
        %2378 = vmatprep.subr.mxu0 0.0
        %2379 = vmatpush1.msra.mxu0 0.0
        %2380 = vmatprep.subr.mxu0 0.0
        %2381 = vmatpush1.msra.mxu0 0.0
        %2382 = vmatprep.subr.mxu0 0.0
        %2383 = vmatpush1.msra.mxu0 0.0
        %2384 = vmatprep.subr.mxu0 0.0
        %2385 = vmatpush1.msra.mxu0 0.0
        %2386 = vmatprep.subr.mxu0 0.0
        %2387 = vmatpush1.msra.mxu0 0.0
        %2388 = vmatprep.subr.mxu0 0.0
        %2389 = vmatpush1.msra.mxu0 0.0
        %2390 = vmatprep.subr.mxu0 0.0
        %2391 = vmatpush1.msra.mxu0 0.0
        %2392 = vmatprep.subr.mxu0 0.0
        %2393 = vmatpush1.msra.mxu0 0.0
        %2394 = vmatprep.subr.mxu0 0.0
        %2395 = vmatpush1.msra.mxu0 0.0
        %2396 = vmatprep.subr.mxu0 0.0
        %2397 = vmatpush1.msra.mxu0 0.0
        %2398 = vmatprep.subr.mxu0 0.0
        %2399 = vmatpush1.msra.mxu0 0.0
        %2400 = vmatprep.subr.mxu0 0.0
        %2401 = vmatpush1.msra.mxu0 0.0
        %2402 = vmatprep.subr.mxu0 0.0
        %2403 = vmatpush1.msra.mxu0 0.0
        %2404 = vmatprep.subr.mxu0 0.0
        %2405 = vmatpush1.msra.mxu0 0.0
        %2406 = vmatprep.subr.mxu0 0.0
        %2407 = vmatpush1.msra.mxu0 0.0
        %2408 = vmatprep.subr.mxu0 0.0
        %2409 = vmatpush1.msra.mxu0 0.0
        %2410 = vmatprep.subr.mxu0 0.0
        %2411 = vmatpush1.msra.mxu0 0.0
        %2412 = vmatprep.subr.mxu0 0.0
        %2413 = vmatpush1.msra.mxu0 0.0
        %2414 = vmatprep.subr.mxu0 0.0
        %2415 = vmatpush1.msra.mxu0 0.0
        %2416 = vmatprep.subr.mxu0 0.0
        %2417 = vmatpush1.msra.mxu0 0.0
        %2418 = vmatprep.subr.mxu0 0.0
        %2419 = vmatpush1.msra.mxu0 0.0
        %2420 = vmatprep.subr.mxu0 0.0
        %2421 = vmatpush1.msra.mxu0 0.0
        %2422 = vmatprep.subr.mxu0 0.0
        %2423 = vmatpush1.msra.mxu0 0.0
        %2424 = vmatprep.subr.mxu0 0.0
        %2425 = vmatpush1.msra.mxu0 0.0
        %2426 = vmatprep.subr.mxu0 0.0
        %2427 = vmatpush1.msra.mxu0 0.0
        %2428 = vmatprep.mubr.f32.mxu0 0.0
        %2429 = vmatmul.mubr.f32.gmra.mrb[0].mxu0 %v2362
        %v2430 = vpop.f32.mrb[0].mxu0
        %v2431 = vadd.f32 %v2357, %v2430
        %v2432 = vpop.f32.mrb[0].mxu0
        %v2433 = vadd.f32 %v2359, %v2432
        %2434 = vdwg.mxu0
        %2435 = vrot.lane.b32.xlu0 %v2237, 15
        %v2436 = vpop.permute.xlu0 %2435
        %2437 = vrot.lane.b32.xlu0 %v2240, 15
        %v2438 = vpop.permute.xlu0 %2437
        %v2439 = vsel %vm528, %v2436, %v2438
        %v2440 = vsel %vm528, %v2438, %v2436
        %v2441 = vld [vmem:[%s531] ss:$8 sm:$0x3]
        %v2443 = vlaneseq
        %v2444 = vshrl.u32 %v2443, 7
        %v2445 = vsub.s32 0, %v2444
        %v2446 = vrot.slane %v2441, %v2445
        %v2447 = vlaneseq
        %v2448 = vshrl.u32 %v2447, 7
        %v2449 = vsub.s32 1, %v2448
        %v2450 = vrot.slane %v2441, %v2449
        %v2453 = vmul.f32 %v2440, %v2446
        %v2454 = vmul.f32 %v2439, %v2450
        %s2455 = scalar_lea.vmem %s6, 8
        %v2456 = vld [vmem:[%s2455] sm:$0xf]
        %v2458 = vsel %vm2286, %v2456, 0
        %2460 = vmatprep.subr.mxu0 %v2454
        %2461 = vmatpush1.msra.mxu0 %v2453
        %2462 = vmatprep.subr.mxu0 0.0
        %2463 = vmatpush1.msra.mxu0 0.0
        %2464 = vmatprep.subr.mxu0 0.0
        %2465 = vmatpush1.msra.mxu0 0.0
        %2466 = vmatprep.subr.mxu0 0.0
        %2467 = vmatpush1.msra.mxu0 0.0
        %2468 = vmatprep.subr.mxu0 0.0
        %2469 = vmatpush1.msra.mxu0 0.0
        %2470 = vmatprep.subr.mxu0 0.0
        %2471 = vmatpush1.msra.mxu0 0.0
        %2472 = vmatprep.subr.mxu0 0.0
        %2473 = vmatpush1.msra.mxu0 0.0
        %2474 = vmatprep.subr.mxu0 0.0
        %2475 = vmatpush1.msra.mxu0 0.0
        %2476 = vmatprep.subr.mxu0 0.0
        %2477 = vmatpush1.msra.mxu0 0.0
        %2478 = vmatprep.subr.mxu0 0.0
        %2479 = vmatpush1.msra.mxu0 0.0
        %2480 = vmatprep.subr.mxu0 0.0
        %2481 = vmatpush1.msra.mxu0 0.0
        %2482 = vmatprep.subr.mxu0 0.0
        %2483 = vmatpush1.msra.mxu0 0.0
        %2484 = vmatprep.subr.mxu0 0.0
        %2485 = vmatpush1.msra.mxu0 0.0
        %2486 = vmatprep.subr.mxu0 0.0
        %2487 = vmatpush1.msra.mxu0 0.0
        %2488 = vmatprep.subr.mxu0 0.0
        %2489 = vmatpush1.msra.mxu0 0.0
        %2490 = vmatprep.subr.mxu0 0.0
        %2491 = vmatpush1.msra.mxu0 0.0
        %2492 = vmatprep.subr.mxu0 0.0
        %2493 = vmatpush1.msra.mxu0 0.0
        %2494 = vmatprep.subr.mxu0 0.0
        %2495 = vmatpush1.msra.mxu0 0.0
        %2496 = vmatprep.subr.mxu0 0.0
        %2497 = vmatpush1.msra.mxu0 0.0
        %2498 = vmatprep.subr.mxu0 0.0
        %2499 = vmatpush1.msra.mxu0 0.0
        %2500 = vmatprep.subr.mxu0 0.0
        %2501 = vmatpush1.msra.mxu0 0.0
        %2502 = vmatprep.subr.mxu0 0.0
        %2503 = vmatpush1.msra.mxu0 0.0
        %2504 = vmatprep.subr.mxu0 0.0
        %2505 = vmatpush1.msra.mxu0 0.0
        %2506 = vmatprep.subr.mxu0 0.0
        %2507 = vmatpush1.msra.mxu0 0.0
        %2508 = vmatprep.subr.mxu0 0.0
        %2509 = vmatpush1.msra.mxu0 0.0
        %2510 = vmatprep.subr.mxu0 0.0
        %2511 = vmatpush1.msra.mxu0 0.0
        %2512 = vmatprep.subr.mxu0 0.0
        %2513 = vmatpush1.msra.mxu0 0.0
        %2514 = vmatprep.subr.mxu0 0.0
        %2515 = vmatpush1.msra.mxu0 0.0
        %2516 = vmatprep.subr.mxu0 0.0
        %2517 = vmatpush1.msra.mxu0 0.0
        %2518 = vmatprep.subr.mxu0 0.0
        %2519 = vmatpush1.msra.mxu0 0.0
        %2520 = vmatprep.subr.mxu0 0.0
        %2521 = vmatpush1.msra.mxu0 0.0
        %2522 = vmatprep.subr.mxu0 0.0
        %2523 = vmatpush1.msra.mxu0 0.0
        %2524 = vmatprep.mubr.f32.mxu0 0.0
        %2525 = vmatmul.mubr.f32.gmra.mrb[0].mxu0 %v2458
        %v2526 = vpop.f32.mrb[0].mxu0
        %v2527 = vadd.f32 0.0, %v2526
        %v2528 = vpop.f32.mrb[0].mxu0
        %v2529 = vadd.f32 0.0, %v2528
        %2530 = vdwg.mxu0
        %v2531 = vadd.f32 %v2431, %v2527
        %v2532 = vadd.f32 %v2433, %v2529
        %2533 = vrot.lane.b32.xlu0 %v2237, 1
        %v2534 = vpop.permute.xlu0 %2533
        %2535 = vrot.lane.b32.xlu0 %v2240, 1
        %v2536 = vpop.permute.xlu0 %2535
        %v2537 = vsel %vm634, %v2534, %v2536
        %v2538 = vsel %vm634, %v2536, %v2534
        %v2539 = vld [vmem:[%s637] ss:$8 sm:$0x3]
        %v2541 = vlaneseq
        %v2542 = vshrl.u32 %v2541, 7
        %v2543 = vsub.s32 0, %v2542
        %v2544 = vrot.slane %v2539, %v2543
        %v2545 = vlaneseq
        %v2546 = vshrl.u32 %v2545, 7
        %v2547 = vsub.s32 1, %v2546
        %v2548 = vrot.slane %v2539, %v2547
        %v2551 = vmul.f32 %v2538, %v2544
        %v2552 = vmul.f32 %v2537, %v2548
        %s2553 = scalar_lea.vmem %s6, 12
        %v2554 = vld [vmem:[%s2553] sm:$0xf]
        %v2556 = vsel %vm2286, %v2554, 0
        %2558 = vmatprep.subr.mxu0 %v2552
        %2559 = vmatpush1.msra.mxu0 %v2551
        %2560 = vmatprep.subr.mxu0 0.0
        %2561 = vmatpush1.msra.mxu0 0.0
        %2562 = vmatprep.subr.mxu0 0.0
        %2563 = vmatpush1.msra.mxu0 0.0
        %2564 = vmatprep.subr.mxu0 0.0
        %2565 = vmatpush1.msra.mxu0 0.0
        %2566 = vmatprep.subr.mxu0 0.0
        %2567 = vmatpush1.msra.mxu0 0.0
        %2568 = vmatprep.subr.mxu0 0.0
        %2569 = vmatpush1.msra.mxu0 0.0
        %2570 = vmatprep.subr.mxu0 0.0
        %2571 = vmatpush1.msra.mxu0 0.0
        %2572 = vmatprep.subr.mxu0 0.0
        %2573 = vmatpush1.msra.mxu0 0.0
        %2574 = vmatprep.subr.mxu0 0.0
        %2575 = vmatpush1.msra.mxu0 0.0
        %2576 = vmatprep.subr.mxu0 0.0
        %2577 = vmatpush1.msra.mxu0 0.0
        %2578 = vmatprep.subr.mxu0 0.0
        %2579 = vmatpush1.msra.mxu0 0.0
        %2580 = vmatprep.subr.mxu0 0.0
        %2581 = vmatpush1.msra.mxu0 0.0
        %2582 = vmatprep.subr.mxu0 0.0
        %2583 = vmatpush1.msra.mxu0 0.0
        %2584 = vmatprep.subr.mxu0 0.0
        %2585 = vmatpush1.msra.mxu0 0.0
        %2586 = vmatprep.subr.mxu0 0.0
        %2587 = vmatpush1.msra.mxu0 0.0
        %2588 = vmatprep.subr.mxu0 0.0
        %2589 = vmatpush1.msra.mxu0 0.0
        %2590 = vmatprep.subr.mxu0 0.0
        %2591 = vmatpush1.msra.mxu0 0.0
        %2592 = vmatprep.subr.mxu0 0.0
        %2593 = vmatpush1.msra.mxu0 0.0
        %2594 = vmatprep.subr.mxu0 0.0
        %2595 = vmatpush1.msra.mxu0 0.0
        %2596 = vmatprep.subr.mxu0 0.0
        %2597 = vmatpush1.msra.mxu0 0.0
        %2598 = vmatprep.subr.mxu0 0.0
        %2599 = vmatpush1.msra.mxu0 0.0
        %2600 = vmatprep.subr.mxu0 0.0
        %2601 = vmatpush1.msra.mxu0 0.0
        %2602 = vmatprep.subr.mxu0 0.0
        %2603 = vmatpush1.msra.mxu0 0.0
        %2604 = vmatprep.subr.mxu0 0.0
        %2605 = vmatpush1.msra.mxu0 0.0
        %2606 = vmatprep.subr.mxu0 0.0
        %2607 = vmatpush1.msra.mxu0 0.0
        %2608 = vmatprep.subr.mxu0 0.0
        %2609 = vmatpush1.msra.mxu0 0.0
        %2610 = vmatprep.subr.mxu0 0.0
        %2611 = vmatpush1.msra.mxu0 0.0
        %2612 = vmatprep.subr.mxu0 0.0
        %2613 = vmatpush1.msra.mxu0 0.0
        %2614 = vmatprep.subr.mxu0 0.0
        %2615 = vmatpush1.msra.mxu0 0.0
        %2616 = vmatprep.subr.mxu0 0.0
        %2617 = vmatpush1.msra.mxu0 0.0
        %2618 = vmatprep.subr.mxu0 0.0
        %2619 = vmatpush1.msra.mxu0 0.0
        %2620 = vmatprep.subr.mxu0 0.0
        %2621 = vmatpush1.msra.mxu0 0.0
        %2622 = vmatprep.mubr.f32.mxu0 0.0
        %2623 = vmatmul.mubr.f32.gmra.mrb[0].mxu0 %v2556
        %v2624 = vpop.f32.mrb[0].mxu0
        %v2625 = vadd.f32 0.0, %v2624
        %v2626 = vpop.f32.mrb[0].mxu0
        %v2627 = vadd.f32 0.0, %v2626
        %2628 = vdwg.mxu0
        %v2629 = vadd.f32 %v2531, %v2625
        %v2630 = vadd.f32 %v2532, %v2627
        %v2631 = vld [vmem:[%s736] ss:$8 sm:$0x3]
        %v2633 = vlaneseq
        %v2634 = vshrl.u32 %v2633, 7
        %v2635 = vsub.s32 0, %v2634
        %v2636 = vrot.slane %v2631, %v2635
        %v2637 = vlaneseq
        %v2638 = vshrl.u32 %v2637, 7
        %v2639 = vsub.s32 1, %v2638
        %v2640 = vrot.slane %v2631, %v2639
        %v2643 = vmul.f32 %v2227, %v2636
        %v2644 = vmul.f32 %v2228, %v2640
        %v2645 = vmul.f32 %v2229, %v2636
        %v2646 = vmul.f32 %v2230, %v2640
        %s2647 = scalar_lea.vmem %s6, 16
        %v2648 = vld [vmem:[%s2647] sm:$0xf]
        %v2653 = vrot.slane %v2643, 4
        %v2654 = vrot.slane %v2645, 4
        %v2655 = vsel %vm366, %v2653, %v2654
        %v2656 = vrot.slane %v2644, 4
        %v2657 = vrot.slane %v2646, 4
        %v2658 = vsel %vm366, %v2656, %v2657
        %v2662 = vsel %vm2286, %v2648, 0
        %2664 = vmatprep.subr.mxu0 %v2658
        %2665 = vmatpush1.msra.mxu0 %v2655
        %2666 = vmatprep.subr.mxu0 0.0
        %2667 = vmatpush1.msra.mxu0 0.0
        %2668 = vmatprep.subr.mxu0 0.0
        %2669 = vmatpush1.msra.mxu0 0.0
        %2670 = vmatprep.subr.mxu0 0.0
        %2671 = vmatpush1.msra.mxu0 0.0
        %2672 = vmatprep.subr.mxu0 0.0
        %2673 = vmatpush1.msra.mxu0 0.0
        %2674 = vmatprep.subr.mxu0 0.0
        %2675 = vmatpush1.msra.mxu0 0.0
        %2676 = vmatprep.subr.mxu0 0.0
        %2677 = vmatpush1.msra.mxu0 0.0
        %2678 = vmatprep.subr.mxu0 0.0
        %2679 = vmatpush1.msra.mxu0 0.0
        %2680 = vmatprep.subr.mxu0 0.0
        %2681 = vmatpush1.msra.mxu0 0.0
        %2682 = vmatprep.subr.mxu0 0.0
        %2683 = vmatpush1.msra.mxu0 0.0
        %2684 = vmatprep.subr.mxu0 0.0
        %2685 = vmatpush1.msra.mxu0 0.0
        %2686 = vmatprep.subr.mxu0 0.0
        %2687 = vmatpush1.msra.mxu0 0.0
        %2688 = vmatprep.subr.mxu0 0.0
        %2689 = vmatpush1.msra.mxu0 0.0
        %2690 = vmatprep.subr.mxu0 0.0
        %2691 = vmatpush1.msra.mxu0 0.0
        %2692 = vmatprep.subr.mxu0 0.0
        %2693 = vmatpush1.msra.mxu0 0.0
        %2694 = vmatprep.subr.mxu0 0.0
        %2695 = vmatpush1.msra.mxu0 0.0
        %2696 = vmatprep.subr.mxu0 0.0
        %2697 = vmatpush1.msra.mxu0 0.0
        %2698 = vmatprep.subr.mxu0 0.0
        %2699 = vmatpush1.msra.mxu0 0.0
        %2700 = vmatprep.subr.mxu0 0.0
        %2701 = vmatpush1.msra.mxu0 0.0
        %2702 = vmatprep.subr.mxu0 0.0
        %2703 = vmatpush1.msra.mxu0 0.0
        %2704 = vmatprep.subr.mxu0 0.0
        %2705 = vmatpush1.msra.mxu0 0.0
        %2706 = vmatprep.subr.mxu0 0.0
        %2707 = vmatpush1.msra.mxu0 0.0
        %2708 = vmatprep.subr.mxu0 0.0
        %2709 = vmatpush1.msra.mxu0 0.0
        %2710 = vmatprep.subr.mxu0 0.0
        %2711 = vmatpush1.msra.mxu0 0.0
        %2712 = vmatprep.subr.mxu0 0.0
        %2713 = vmatpush1.msra.mxu0 0.0
        %2714 = vmatprep.subr.mxu0 0.0
        %2715 = vmatpush1.msra.mxu0 0.0
        %2716 = vmatprep.subr.mxu0 0.0
        %2717 = vmatpush1.msra.mxu0 0.0
        %2718 = vmatprep.subr.mxu0 0.0
        %2719 = vmatpush1.msra.mxu0 0.0
        %2720 = vmatprep.subr.mxu0 0.0
        %2721 = vmatpush1.msra.mxu0 0.0
        %2722 = vmatprep.subr.mxu0 0.0
        %2723 = vmatpush1.msra.mxu0 0.0
        %2724 = vmatprep.subr.mxu0 0.0
        %2725 = vmatpush1.msra.mxu0 0.0
        %2726 = vmatprep.subr.mxu0 0.0
        %2727 = vmatpush1.msra.mxu0 0.0
        %2728 = vmatprep.mubr.f32.mxu0 0.0
        %2729 = vmatmul.mubr.f32.gmra.mrb[0].mxu0 %v2662
        %v2730 = vpop.f32.mrb[0].mxu0
        %v2731 = vadd.f32 0.0, %v2730
        %v2732 = vpop.f32.mrb[0].mxu0
        %v2733 = vadd.f32 0.0, %v2732
        %2734 = vdwg.mxu0
        %v2735 = vadd.f32 %v2629, %v2731
        %v2736 = vadd.f32 %v2630, %v2733
        %2737 = vrot.lane.b32.xlu0 %v2237, 127
        %v2738 = vpop.permute.xlu0 %2737
        %2739 = vrot.lane.b32.xlu0 %v2240, 127
        %v2740 = vpop.permute.xlu0 %2739
        %v2741 = vsel %vm838, %v2738, %v2740
        %v2742 = vsel %vm838, %v2740, %v2738
        %v2743 = vld [vmem:[%s841] ss:$8 sm:$0x3]
        %v2745 = vlaneseq
        %v2746 = vshrl.u32 %v2745, 7
        %v2747 = vsub.s32 0, %v2746
        %v2748 = vrot.slane %v2743, %v2747
        %v2749 = vlaneseq
        %v2750 = vshrl.u32 %v2749, 7
        %v2751 = vsub.s32 1, %v2750
        %v2752 = vrot.slane %v2743, %v2751
        %v2755 = vmul.f32 %v2741, %v2748
        %v2756 = vmul.f32 %v2742, %v2752
        %s2757 = scalar_lea.vmem %s6, 20
        %v2758 = vld [vmem:[%s2757] sm:$0xf]
        %v2760 = vsel %vm2286, %v2758, 0
        %2762 = vmatprep.subr.mxu0 %v2756
        %2763 = vmatpush1.msra.mxu0 %v2755
        %2764 = vmatprep.subr.mxu0 0.0
        %2765 = vmatpush1.msra.mxu0 0.0
        %2766 = vmatprep.subr.mxu0 0.0
        %2767 = vmatpush1.msra.mxu0 0.0
        %2768 = vmatprep.subr.mxu0 0.0
        %2769 = vmatpush1.msra.mxu0 0.0
        %2770 = vmatprep.subr.mxu0 0.0
        %2771 = vmatpush1.msra.mxu0 0.0
        %2772 = vmatprep.subr.mxu0 0.0
        %2773 = vmatpush1.msra.mxu0 0.0
        %2774 = vmatprep.subr.mxu0 0.0
        %2775 = vmatpush1.msra.mxu0 0.0
        %2776 = vmatprep.subr.mxu0 0.0
        %2777 = vmatpush1.msra.mxu0 0.0
        %2778 = vmatprep.subr.mxu0 0.0
        %2779 = vmatpush1.msra.mxu0 0.0
        %2780 = vmatprep.subr.mxu0 0.0
        %2781 = vmatpush1.msra.mxu0 0.0
        %2782 = vmatprep.subr.mxu0 0.0
        %2783 = vmatpush1.msra.mxu0 0.0
        %2784 = vmatprep.subr.mxu0 0.0
        %2785 = vmatpush1.msra.mxu0 0.0
        %2786 = vmatprep.subr.mxu0 0.0
        %2787 = vmatpush1.msra.mxu0 0.0
        %2788 = vmatprep.subr.mxu0 0.0
        %2789 = vmatpush1.msra.mxu0 0.0
        %2790 = vmatprep.subr.mxu0 0.0
        %2791 = vmatpush1.msra.mxu0 0.0
        %2792 = vmatprep.subr.mxu0 0.0
        %2793 = vmatpush1.msra.mxu0 0.0
        %2794 = vmatprep.subr.mxu0 0.0
        %2795 = vmatpush1.msra.mxu0 0.0
        %2796 = vmatprep.subr.mxu0 0.0
        %2797 = vmatpush1.msra.mxu0 0.0
        %2798 = vmatprep.subr.mxu0 0.0
        %2799 = vmatpush1.msra.mxu0 0.0
        %2800 = vmatprep.subr.mxu0 0.0
        %2801 = vmatpush1.msra.mxu0 0.0
        %2802 = vmatprep.subr.mxu0 0.0
        %2803 = vmatpush1.msra.mxu0 0.0
        %2804 = vmatprep.subr.mxu0 0.0
        %2805 = vmatpush1.msra.mxu0 0.0
        %2806 = vmatprep.subr.mxu0 0.0
        %2807 = vmatpush1.msra.mxu0 0.0
        %2808 = vmatprep.subr.mxu0 0.0
        %2809 = vmatpush1.msra.mxu0 0.0
        %2810 = vmatprep.subr.mxu0 0.0
        %2811 = vmatpush1.msra.mxu0 0.0
        %2812 = vmatprep.subr.mxu0 0.0
        %2813 = vmatpush1.msra.mxu0 0.0
        %2814 = vmatprep.subr.mxu0 0.0
        %2815 = vmatpush1.msra.mxu0 0.0
        %2816 = vmatprep.subr.mxu0 0.0
        %2817 = vmatpush1.msra.mxu0 0.0
        %2818 = vmatprep.subr.mxu0 0.0
        %2819 = vmatpush1.msra.mxu0 0.0
        %2820 = vmatprep.subr.mxu0 0.0
        %2821 = vmatpush1.msra.mxu0 0.0
        %2822 = vmatprep.subr.mxu0 0.0
        %2823 = vmatpush1.msra.mxu0 0.0
        %2824 = vmatprep.subr.mxu0 0.0
        %2825 = vmatpush1.msra.mxu0 0.0
        %2826 = vmatprep.mubr.f32.mxu0 0.0
        %2827 = vmatmul.mubr.f32.gmra.mrb[0].mxu0 %v2760
        %v2828 = vpop.f32.mrb[0].mxu0
        %v2829 = vadd.f32 0.0, %v2828
        %v2830 = vpop.f32.mrb[0].mxu0
        %v2831 = vadd.f32 0.0, %v2830
        %2832 = vdwg.mxu0
        %v2833 = vadd.f32 %v2735, %v2829
        %v2834 = vadd.f32 %v2736, %v2831
        %2835 = vrot.lane.b32.xlu0 %v2237, 113
        %v2836 = vpop.permute.xlu0 %2835
        %2837 = vrot.lane.b32.xlu0 %v2240, 113
        %v2838 = vpop.permute.xlu0 %2837
        %v2839 = vsel %vm944, %v2836, %v2838
        %v2840 = vsel %vm944, %v2838, %v2836
        %v2841 = vld [vmem:[%s947] ss:$8 sm:$0x3]
        %v2843 = vlaneseq
        %v2844 = vshrl.u32 %v2843, 7
        %v2845 = vsub.s32 0, %v2844
        %v2846 = vrot.slane %v2841, %v2845
        %v2847 = vlaneseq
        %v2848 = vshrl.u32 %v2847, 7
        %v2849 = vsub.s32 1, %v2848
        %v2850 = vrot.slane %v2841, %v2849
        %v2853 = vmul.f32 %v2839, %v2846
        %v2854 = vmul.f32 %v2840, %v2850
        %s2855 = scalar_lea.vmem %s6, 24
        %v2856 = vld [vmem:[%s2855] sm:$0xf]
        %v2858 = vsel %vm2286, %v2856, 0
        %2860 = vmatprep.subr.mxu0 %v2854
        %2861 = vmatpush1.msra.mxu0 %v2853
        %2862 = vmatprep.subr.mxu0 0.0
        %2863 = vmatpush1.msra.mxu0 0.0
        %2864 = vmatprep.subr.mxu0 0.0
        %2865 = vmatpush1.msra.mxu0 0.0
        %2866 = vmatprep.subr.mxu0 0.0
        %2867 = vmatpush1.msra.mxu0 0.0
        %2868 = vmatprep.subr.mxu0 0.0
        %2869 = vmatpush1.msra.mxu0 0.0
        %2870 = vmatprep.subr.mxu0 0.0
        %2871 = vmatpush1.msra.mxu0 0.0
        %2872 = vmatprep.subr.mxu0 0.0
        %2873 = vmatpush1.msra.mxu0 0.0
        %2874 = vmatprep.subr.mxu0 0.0
        %2875 = vmatpush1.msra.mxu0 0.0
        %2876 = vmatprep.subr.mxu0 0.0
        %2877 = vmatpush1.msra.mxu0 0.0
        %2878 = vmatprep.subr.mxu0 0.0
        %2879 = vmatpush1.msra.mxu0 0.0
        %2880 = vmatprep.subr.mxu0 0.0
        %2881 = vmatpush1.msra.mxu0 0.0
        %2882 = vmatprep.subr.mxu0 0.0
        %2883 = vmatpush1.msra.mxu0 0.0
        %2884 = vmatprep.subr.mxu0 0.0
        %2885 = vmatpush1.msra.mxu0 0.0
        %2886 = vmatprep.subr.mxu0 0.0
        %2887 = vmatpush1.msra.mxu0 0.0
        %2888 = vmatprep.subr.mxu0 0.0
        %2889 = vmatpush1.msra.mxu0 0.0
        %2890 = vmatprep.subr.mxu0 0.0
        %2891 = vmatpush1.msra.mxu0 0.0
        %2892 = vmatprep.subr.mxu0 0.0
        %2893 = vmatpush1.msra.mxu0 0.0
        %2894 = vmatprep.subr.mxu0 0.0
        %2895 = vmatpush1.msra.mxu0 0.0
        %2896 = vmatprep.subr.mxu0 0.0
        %2897 = vmatpush1.msra.mxu0 0.0
        %2898 = vmatprep.subr.mxu0 0.0
        %2899 = vmatpush1.msra.mxu0 0.0
        %2900 = vmatprep.subr.mxu0 0.0
        %2901 = vmatpush1.msra.mxu0 0.0
        %2902 = vmatprep.subr.mxu0 0.0
        %2903 = vmatpush1.msra.mxu0 0.0
        %2904 = vmatprep.subr.mxu0 0.0
        %2905 = vmatpush1.msra.mxu0 0.0
        %2906 = vmatprep.subr.mxu0 0.0
        %2907 = vmatpush1.msra.mxu0 0.0
        %2908 = vmatprep.subr.mxu0 0.0
        %2909 = vmatpush1.msra.mxu0 0.0
        %2910 = vmatprep.subr.mxu0 0.0
        %2911 = vmatpush1.msra.mxu0 0.0
        %2912 = vmatprep.subr.mxu0 0.0
        %2913 = vmatpush1.msra.mxu0 0.0
        %2914 = vmatprep.subr.mxu0 0.0
        %2915 = vmatpush1.msra.mxu0 0.0
        %2916 = vmatprep.subr.mxu0 0.0
        %2917 = vmatpush1.msra.mxu0 0.0
        %2918 = vmatprep.subr.mxu0 0.0
        %2919 = vmatpush1.msra.mxu0 0.0
        %2920 = vmatprep.subr.mxu0 0.0
        %2921 = vmatpush1.msra.mxu0 0.0
        %2922 = vmatprep.subr.mxu0 0.0
        %2923 = vmatpush1.msra.mxu0 0.0
        %2924 = vmatprep.mubr.f32.mxu0 0.0
        %2925 = vmatmul.mubr.f32.gmra.mrb[0].mxu0 %v2858
        %v2926 = vpop.f32.mrb[0].mxu0
        %v2927 = vadd.f32 0.0, %v2926
        %v2928 = vpop.f32.mrb[0].mxu0
        %v2929 = vadd.f32 0.0, %v2928
        %2930 = vdwg.mxu0
        %v2931 = vadd.f32 %v2833, %v2927
        %v2932 = vadd.f32 %v2834, %v2929
        %2933 = vrot.lane.b32.xlu0 %v2237, 112
        %v2934 = vpop.permute.xlu0 %2933
        %2935 = vrot.lane.b32.xlu0 %v2240, 112
        %v2936 = vpop.permute.xlu0 %2935
        %v2937 = vsel %vm1050, %v2934, %v2936
        %v2938 = vsel %vm1050, %v2936, %v2934
        %v2939 = vld [vmem:[%s1053] ss:$8 sm:$0x3]
        %v2941 = vlaneseq
        %v2942 = vshrl.u32 %v2941, 7
        %v2943 = vsub.s32 0, %v2942
        %v2944 = vrot.slane %v2939, %v2943
        %v2945 = vlaneseq
        %v2946 = vshrl.u32 %v2945, 7
        %v2947 = vsub.s32 1, %v2946
        %v2948 = vrot.slane %v2939, %v2947
        %v2951 = vmul.f32 %v2937, %v2944
        %v2952 = vmul.f32 %v2938, %v2948
        %s2953 = scalar_lea.vmem %s6, 28
        %v2954 = vld [vmem:[%s2953] sm:$0xf]
        %v2956 = vsel %vm2286, %v2954, 0
        %2958 = vmatprep.subr.mxu0 %v2952
        %2959 = vmatpush1.msra.mxu0 %v2951
        %2960 = vmatprep.subr.mxu0 0.0
        %2961 = vmatpush1.msra.mxu0 0.0
        %2962 = vmatprep.subr.mxu0 0.0
        %2963 = vmatpush1.msra.mxu0 0.0
        %2964 = vmatprep.subr.mxu0 0.0
        %2965 = vmatpush1.msra.mxu0 0.0
        %2966 = vmatprep.subr.mxu0 0.0
        %2967 = vmatpush1.msra.mxu0 0.0
        %2968 = vmatprep.subr.mxu0 0.0
        %2969 = vmatpush1.msra.mxu0 0.0
        %2970 = vmatprep.subr.mxu0 0.0
        %2971 = vmatpush1.msra.mxu0 0.0
        %2972 = vmatprep.subr.mxu0 0.0
        %2973 = vmatpush1.msra.mxu0 0.0
        %2974 = vmatprep.subr.mxu0 0.0
        %2975 = vmatpush1.msra.mxu0 0.0
        %2976 = vmatprep.subr.mxu0 0.0
        %2977 = vmatpush1.msra.mxu0 0.0
        %2978 = vmatprep.subr.mxu0 0.0
        %2979 = vmatpush1.msra.mxu0 0.0
        %2980 = vmatprep.subr.mxu0 0.0
        %2981 = vmatpush1.msra.mxu0 0.0
        %2982 = vmatprep.subr.mxu0 0.0
        %2983 = vmatpush1.msra.mxu0 0.0
        %2984 = vmatprep.subr.mxu0 0.0
        %2985 = vmatpush1.msra.mxu0 0.0
        %2986 = vmatprep.subr.mxu0 0.0
        %2987 = vmatpush1.msra.mxu0 0.0
        %2988 = vmatprep.subr.mxu0 0.0
        %2989 = vmatpush1.msra.mxu0 0.0
        %2990 = vmatprep.subr.mxu0 0.0
        %2991 = vmatpush1.msra.mxu0 0.0
        %2992 = vmatprep.subr.mxu0 0.0
        %2993 = vmatpush1.msra.mxu0 0.0
        %2994 = vmatprep.subr.mxu0 0.0
        %2995 = vmatpush1.msra.mxu0 0.0
        %2996 = vmatprep.subr.mxu0 0.0
        %2997 = vmatpush1.msra.mxu0 0.0
        %2998 = vmatprep.subr.mxu0 0.0
        %2999 = vmatpush1.msra.mxu0 0.0
        %3000 = vmatprep.subr.mxu0 0.0
        %3001 = vmatpush1.msra.mxu0 0.0
        %3002 = vmatprep.subr.mxu0 0.0
        %3003 = vmatpush1.msra.mxu0 0.0
        %3004 = vmatprep.subr.mxu0 0.0
        %3005 = vmatpush1.msra.mxu0 0.0
        %3006 = vmatprep.subr.mxu0 0.0
        %3007 = vmatpush1.msra.mxu0 0.0
        %3008 = vmatprep.subr.mxu0 0.0
        %3009 = vmatpush1.msra.mxu0 0.0
        %3010 = vmatprep.subr.mxu0 0.0
        %3011 = vmatpush1.msra.mxu0 0.0
        %3012 = vmatprep.subr.mxu0 0.0
        %3013 = vmatpush1.msra.mxu0 0.0
        %3014 = vmatprep.subr.mxu0 0.0
        %3015 = vmatpush1.msra.mxu0 0.0
        %3016 = vmatprep.subr.mxu0 0.0
        %3017 = vmatpush1.msra.mxu0 0.0
        %3018 = vmatprep.subr.mxu0 0.0
        %3019 = vmatpush1.msra.mxu0 0.0
        %3020 = vmatprep.subr.mxu0 0.0
        %3021 = vmatpush1.msra.mxu0 0.0
        %3022 = vmatprep.mubr.f32.mxu0 0.0
        %3023 = vmatmul.mubr.f32.gmra.mrb[0].mxu0 %v2956
        %v3024 = vpop.f32.mrb[0].mxu0
        %v3025 = vadd.f32 0.0, %v3024
        %v3026 = vpop.f32.mrb[0].mxu0
        %v3027 = vadd.f32 0.0, %v3026
        %3028 = vdwg.mxu0
        %v3029 = vadd.f32 %v2931, %v3025
        %v3030 = vadd.f32 %v2932, %v3027
        %3031 = vrot.lane.b32.xlu0 %v2237, 111
        %v3032 = vpop.permute.xlu0 %3031
        %3033 = vrot.lane.b32.xlu0 %v2240, 111
        %v3034 = vpop.permute.xlu0 %3033
        %v3035 = vsel %vm1156, %v3032, %v3034
        %v3036 = vsel %vm1156, %v3034, %v3032
        %v3037 = vld [vmem:[%s1159] ss:$8 sm:$0x3]
        %v3039 = vlaneseq
        %v3040 = vshrl.u32 %v3039, 7
        %v3041 = vsub.s32 0, %v3040
        %v3042 = vrot.slane %v3037, %v3041
        %v3043 = vlaneseq
        %v3044 = vshrl.u32 %v3043, 7
        %v3045 = vsub.s32 1, %v3044
        %v3046 = vrot.slane %v3037, %v3045
        %v3049 = vmul.f32 %v3035, %v3042
        %v3050 = vmul.f32 %v3036, %v3046
        %s3051 = scalar_lea.vmem %s6, 32
        %v3052 = vld [vmem:[%s3051] sm:$0xf]
        %v3054 = vsel %vm2286, %v3052, 0
        %3056 = vmatprep.subr.mxu0 %v3050
        %3057 = vmatpush1.msra.mxu0 %v3049
        %3058 = vmatprep.subr.mxu0 0.0
        %3059 = vmatpush1.msra.mxu0 0.0
        %3060 = vmatprep.subr.mxu0 0.0
        %3061 = vmatpush1.msra.mxu0 0.0
        %3062 = vmatprep.subr.mxu0 0.0
        %3063 = vmatpush1.msra.mxu0 0.0
        %3064 = vmatprep.subr.mxu0 0.0
        %3065 = vmatpush1.msra.mxu0 0.0
        %3066 = vmatprep.subr.mxu0 0.0
        %3067 = vmatpush1.msra.mxu0 0.0
        %3068 = vmatprep.subr.mxu0 0.0
        %3069 = vmatpush1.msra.mxu0 0.0
        %3070 = vmatprep.subr.mxu0 0.0
        %3071 = vmatpush1.msra.mxu0 0.0
        %3072 = vmatprep.subr.mxu0 0.0
        %3073 = vmatpush1.msra.mxu0 0.0
        %3074 = vmatprep.subr.mxu0 0.0
        %3075 = vmatpush1.msra.mxu0 0.0
        %3076 = vmatprep.subr.mxu0 0.0
        %3077 = vmatpush1.msra.mxu0 0.0
        %3078 = vmatprep.subr.mxu0 0.0
        %3079 = vmatpush1.msra.mxu0 0.0
        %3080 = vmatprep.subr.mxu0 0.0
        %3081 = vmatpush1.msra.mxu0 0.0
        %3082 = vmatprep.subr.mxu0 0.0
        %3083 = vmatpush1.msra.mxu0 0.0
        %3084 = vmatprep.subr.mxu0 0.0
        %3085 = vmatpush1.msra.mxu0 0.0
        %3086 = vmatprep.subr.mxu0 0.0
        %3087 = vmatpush1.msra.mxu0 0.0
        %3088 = vmatprep.subr.mxu0 0.0
        %3089 = vmatpush1.msra.mxu0 0.0
        %3090 = vmatprep.subr.mxu0 0.0
        %3091 = vmatpush1.msra.mxu0 0.0
        %3092 = vmatprep.subr.mxu0 0.0
        %3093 = vmatpush1.msra.mxu0 0.0
        %3094 = vmatprep.subr.mxu0 0.0
        %3095 = vmatpush1.msra.mxu0 0.0
        %3096 = vmatprep.subr.mxu0 0.0
        %3097 = vmatpush1.msra.mxu0 0.0
        %3098 = vmatprep.subr.mxu0 0.0
        %3099 = vmatpush1.msra.mxu0 0.0
        %3100 = vmatprep.subr.mxu0 0.0
        %3101 = vmatpush1.msra.mxu0 0.0
        %3102 = vmatprep.subr.mxu0 0.0
        %3103 = vmatpush1.msra.mxu0 0.0
        %3104 = vmatprep.subr.mxu0 0.0
        %3105 = vmatpush1.msra.mxu0 0.0
        %3106 = vmatprep.subr.mxu0 0.0
        %3107 = vmatpush1.msra.mxu0 0.0
        %3108 = vmatprep.subr.mxu0 0.0
        %3109 = vmatpush1.msra.mxu0 0.0
        %3110 = vmatprep.subr.mxu0 0.0
        %3111 = vmatpush1.msra.mxu0 0.0
        %3112 = vmatprep.subr.mxu0 0.0
        %3113 = vmatpush1.msra.mxu0 0.0
        %3114 = vmatprep.subr.mxu0 0.0
        %3115 = vmatpush1.msra.mxu0 0.0
        %3116 = vmatprep.subr.mxu0 0.0
        %3117 = vmatpush1.msra.mxu0 0.0
        %3118 = vmatprep.subr.mxu0 0.0
        %3119 = vmatpush1.msra.mxu0 0.0
        %3120 = vmatprep.mubr.f32.mxu0 0.0
        %3121 = vmatmul.mubr.f32.gmra.mrb[0].mxu0 %v3054
        %v3122 = vpop.f32.mrb[0].mxu0
        %v3123 = vadd.f32 0.0, %v3122
        %v3124 = vpop.f32.mrb[0].mxu0
        %v3125 = vadd.f32 0.0, %v3124
        %3126 = vdwg.mxu0
        %v3127 = vadd.f32 %v3029, %v3123
        %v3128 = vadd.f32 %v3030, %v3125
        %v3129 = vld [vmem:[%s7] sm:$0xf]
        %3131 = vset.pattern.permute.xlu0 0
        %3132 = vperm.xlu0 %3131, %v3129
        %v3133 = vpop.permute.xlu0 %3132
        %v3135 = vadd.f32 %v3127, %v3133
        %v3136 = vadd.f32 %v3128, %v3133
        %v3137 = vmul.f32 %v3135, 0.2
        %v3138 = vmul.f32 %v3136, 0.2
        %v3139 = vmax.f32 %v3135, %v3137
        %v3140 = vmax.f32 %v3136, %v3138
        %v3143 = vrot.slane %v3139, 4
        %v3144 = vrot.slane %v3140, 4
        %3147 = vst [vmem:[%s298 + $0x10] sm:$0xf0] %v3143
        %3148 = vst [vmem:[%s298 + $0x18] sm:$0xf0] %v3144
        %s3149 = sand.u32 %s203, 1
        %s3150 = scalar_lea.sflag [#allocation3], %s3149
        %s3151 = sand.u32 %s203, 1
        %s3152 = smul.addr %s3151, 32
        %s3153 = scalar_lea.vmem [#allocation2], %s3152
        // Predicated region
        $region53: #{tpu_custom_call.1} parent=51 // pred_check
          %p3154 = pneg %p213
        $region54: #{tpu_custom_call.1} parent=51 // pred_check_branch
          %3156 = sbr.rel (%p3154) target = $region56
        $region55: #{tpu_custom_call.1} parent=51 // pred_region
          %s3158 = ssub.s32 512, 512
          %3159 = vsyncadd %s3150, %s3158
          %s3160 = smul.addr %s22, 4
          %s3161 = smul.addr %s3160, 128
          %s3162 = scalar_lea.hbm %s8, %s3161
          %s3163 = sshll.u32 %s3153, 4
          %s3164 = int_to_ptr.vmem [resolvable:$true] %s3163
          %3169 = dma.vmem_to_hbm [thread:$0]  %s3164, 512, %s3162, %s3150, 256, 256, 16
        $region56: #{tpu_custom_call.1} parent=51 // pred_fallthru
          _
      $region52: #{tpu_custom_call.1} parent=5 // pred_fallthru
        _
      %p3170 = scmp.le.s32.totalorder 2, %s17
      // Predicated region
      $region57: #{tpu_custom_call.1} parent=5 // pred_check
        %p3171 = pneg %p3170
      $region58: #{tpu_custom_call.1} parent=5 // pred_check_branch
        %3173 = sbr.rel (%p3171) target = $region60
      $region59: #{tpu_custom_call.1} parent=5 // pred_region
        %s3174 = ssub.s32 %s17, 2
        // Predicated region
        $region61: #{tpu_custom_call.1} parent=59 // pred_check
          %p3175 = pneg %p219
        $region62: #{tpu_custom_call.1} parent=59 // pred_check_branch
          %3177 = sbr.rel (%p3175) target = $region64
        $region63: #{tpu_custom_call.1} parent=59 // pred_region
          %s3178 = sand.u32 %s204, 1
          %s3179 = scalar_lea.sflag [#allocation3], %s3178
          %s3180 = sand.u32 %s204, 1
          %s3181 = smul.addr %s3180, 32
          %s3182 = scalar_lea.vmem [#allocation2], %s3181
          %3183 = dma.done %s3179, 512
        $region64: #{tpu_custom_call.1} parent=59 // pred_fallthru
          _
      $region60: #{tpu_custom_call.1} parent=5 // pred_fallthru
        _
    $region6: #{tpu_custom_call.1} parent=1 // loop_footer
      %s21 = sadd.s32 1, %s17
    $region7: #{tpu_custom_call.1} parent=1 // loop_footer_branch
      %16 = sbr.rel target = $region3
    $region8: #{tpu_custom_call.1} parent=1 // loop_exit
      _
    %3184 = vsyncpa [#allocation3], 1
    %s3185 = scalar_lea.sflag [#allocation3], 1
    %3186 = vsyncpa %s3185, 1

</llo_original>
